<compile_context>
chip_gen: v7x
topology: tpu7x:2x2x1
jax: 0.10.0
libtpu: 0.0.40
codegen_flags: <defaults>
</compile_context>

<pallas_src>
import functools
import math

import jax
import jax.numpy as jnp
from jax.experimental import pallas as pl
from jax.experimental.pallas import tpu as pltpu


# ---------------------------------------------------------------------------
# Tile selection
# ---------------------------------------------------------------------------
def _pick_tile(n, target, align):
    """Largest divisor of n that is <= target and a multiple of `align`.

    Falls back to n (full extent) only when no such divisor exists.
    # TODO(synk): pad + mask instead of the full-extent fallback for
    # pathological (e.g. prime) sizes so VMEM stays bounded.
    """
    if n <= target:
        return n
    for t in range(target, align - 1, -1):
        if n % t == 0 and t % align == 0:
            return t
    return n


# ---------------------------------------------------------------------------
# Flash-style multi-head attention core
#   Q/K/V are read straight out of the fused QKV-projection output
#   (B, S, 3*d_model); the head is selected by the BlockSpec index_map as a
#   d_k-wide lane slice, so no split_heads/merge transposes are needed.
# ---------------------------------------------------------------------------
def _flash_mha_kernel(q_ref, k_ref, v_ref, o_ref, m_sc, l_sc, acc_sc):
    kv = pl.program_id(3)

    @pl.when(kv == 0)
    def _init():
        m_sc[...] = jnp.full_like(m_sc, -jnp.inf)
        l_sc[...] = jnp.zeros_like(l_sc)
        acc_sc[...] = jnp.zeros_like(acc_sc)

    # 1/sqrt(d_k) is already folded into wq/bq (prepare_params), so q is used
    # as-is. Contraction over the last dims -> no explicit K transpose.
    s = jnp.einsum("qd,kd->qk", q_ref[...], k_ref[...],
                   preferred_element_type=jnp.float32)          # (tq, tk) f32

    m_prev = m_sc[...]
    m_new = jnp.maximum(m_prev, s.max(axis=-1, keepdims=True))
    alpha = jnp.exp(m_prev - m_new)
    p = jnp.exp(s - m_new)                                      # f32 softmax math
    l_sc[...] = alpha * l_sc[...] + p.sum(axis=-1, keepdims=True)
    acc_sc[...] = alpha * acc_sc[...] + jnp.dot(
        p.astype(v_ref.dtype), v_ref[...], preferred_element_type=jnp.float32)
    m_sc[...] = m_new

    # TODO(synk): src_mask (masked_fill(mask == 0, -1e9)) and attention dropout
    # are not implemented (default forward path: mask=None, eval mode).

    @pl.when(kv == pl.num_programs(3) - 1)
    def _finalize():
        inv_l = pl.reciprocal(l_sc[...], approx=True)            # EUP, not VALU
        o_ref[...] = (acc_sc[...] * inv_l).astype(o_ref.dtype)


def flash_mha(qkv, *, n_head, d_model, q_block=256, kv_block=512):
    """qkv: (B, S, 3*d_model) (Q|K|V concatenated along the last dim).

    Returns attention output in (B, S, d_model) layout (heads already merged),
    same dtype as qkv (bf16 on the fast path).
    """
    B, S, three_dm = qkv.shape
    assert three_dm == 3 * d_model
    nh = n_head
    D = d_model // nh
    # TODO(synk): head dims that are not a multiple of 128 need a different
    # (padded) layout for lane-dense blocks.
    assert D % 128 == 0, "d_k must be a multiple of 128"

    out_dtype = qkv.dtype
    tq = _pick_tile(S, q_block, 8)
    tk = _pick_tile(S, kv_block, 8)

    itemsize = qkv.dtype.itemsize
    cost = pl.CostEstimate(
        flops=4 * B * nh * S * S * D,
        transcendentals=B * nh * S * S,
        bytes_accessed=B * S * (3 * d_model + d_model) * itemsize,
    )

    return pl.pallas_call(
        _flash_mha_kernel,
        out_shape=jax.ShapeDtypeStruct((B, S, d_model), out_dtype),
        grid_spec=pltpu.PrefetchScalarGridSpec(
            num_scalar_prefetch=0,
            grid=(B, nh, S // tq, S // tk),
            in_specs=[
                # Same qkv array passed 3x; head h -> lane-block h (q),
                # nh + h (k), 2*nh + h (v).  Leading batch dim squeezed.
                pl.BlockSpec((None, tq, D), lambda b, h, qi, ki: (b, qi, h)),
                pl.BlockSpec((None, tk, D), lambda b, h, qi, ki: (b, ki, nh + h)),
                pl.BlockSpec((None, tk, D), lambda b, h, qi, ki: (b, ki, 2 * nh + h)),
            ],
            out_specs=pl.BlockSpec((None, tq, D), lambda b, h, qi, ki: (b, qi, h)),
            scratch_shapes=[
                pltpu.VMEM((tq, 1), jnp.float32),    # running max m
                pltpu.VMEM((tq, 1), jnp.float32),    # running sum l
                pltpu.VMEM((tq, D), jnp.float32),    # output accumulator
            ],
        ),
        compiler_params=pltpu.CompilerParams(
            dimension_semantics=("parallel", "parallel", "parallel", "arbitrary")),
        cost_estimate=cost,
    )(qkv, qkv, qkv)


# ---------------------------------------------------------------------------
# Fused QKV projection (bf16 MXU, N-tiled weights)
# ---------------------------------------------------------------------------
def _linear_kernel(x_ref, w_ref, b_ref, o_ref):
    o_ref[...] = (jnp.dot(x_ref[...], w_ref[...],
                          preferred_element_type=jnp.float32)
                  + b_ref[...]).astype(o_ref.dtype)


def linear(x, w, b, *, row_block=256, col_block=512):
    rows, d_in = x.shape
    d_out = w.shape[1]
    tr = _pick_tile(rows, row_block, 8)
    tn = _pick_tile(d_out, col_block, 128)
    xc = x.astype(w.dtype)                     # bf16 at the MXU boundary
    return pl.pallas_call(
        _linear_kernel,
        out_shape=jax.ShapeDtypeStruct((rows, d_out), w.dtype),
        grid_spec=pltpu.PrefetchScalarGridSpec(
            num_scalar_prefetch=0,
            grid=(rows // tr, d_out // tn),
            in_specs=[
                pl.BlockSpec((tr, d_in), lambda i, j: (i, 0)),
                pl.BlockSpec((d_in, tn), lambda i, j: (0, j)),
                pl.BlockSpec((1, tn), lambda i, j: (0, j)),
            ],
            out_specs=pl.BlockSpec((tr, tn), lambda i, j: (i, j)),
        ),
        compiler_params=pltpu.CompilerParams(
            dimension_semantics=("parallel", "parallel")),
    )(xc, w, b.reshape(1, d_out))


# ---------------------------------------------------------------------------
# Fused output-projection + residual + LayerNorm1  (K-tiled reduction)
# ---------------------------------------------------------------------------
def _proj_add_ln_kernel(a_ref, w_ref, b_ref, r_ref, g_ref, bt_ref, o_ref,
                        acc_ref, *, eps):
    k = pl.program_id(1)

    @pl.when(k == 0)
    def _init():
        acc_ref[...] = jnp.zeros_like(acc_ref)

    acc_ref[...] += jnp.dot(a_ref[...], w_ref[...],
                            preferred_element_type=jnp.float32)

    @pl.when(k == pl.num_programs(1) - 1)
    def _finalize():
        s = acc_ref[...] + b_ref[...] + r_ref[...].astype(jnp.float32)
        d = s.shape[-1]
        mean = jnp.mean(s, axis=-1, keepdims=True)
        c = s - mean
        # torch.Tensor.std default is unbiased (d-1); eps is added to std.
        std = jnp.sqrt(jnp.sum(c * c, axis=-1, keepdims=True) / (d - 1))
        o_ref[...] = (g_ref[...] * (c / (std + eps)) + bt_ref[...]).astype(o_ref.dtype)
        # TODO(synk): dropout1 (identity in eval mode).


def proj_add_ln(a, w, b, residual, gamma, beta, *, eps,
                row_block=256, k_block=512):
    rows, d_in = a.shape
    d_out = w.shape[1]
    tr = _pick_tile(rows, row_block, 8)
    tk = _pick_tile(d_in, k_block, 128)
    ac = a.astype(w.dtype)
    return pl.pallas_call(
        functools.partial(_proj_add_ln_kernel, eps=eps),
        out_shape=jax.ShapeDtypeStruct((rows, d_out), residual.dtype),
        grid_spec=pltpu.PrefetchScalarGridSpec(
            num_scalar_prefetch=0,
            grid=(rows // tr, d_in // tk),
            in_specs=[
                pl.BlockSpec((tr, tk), lambda i, k: (i, k)),
                pl.BlockSpec((tk, d_out), lambda i, k: (k, 0)),
                pl.BlockSpec((1, d_out), lambda i, k: (0, 0)),
                pl.BlockSpec((tr, d_out), lambda i, k: (i, 0)),   # residual
                pl.BlockSpec((1, d_out), lambda i, k: (0, 0)),    # gamma
                pl.BlockSpec((1, d_out), lambda i, k: (0, 0)),    # beta
            ],
            out_specs=pl.BlockSpec((tr, d_out), lambda i, k: (i, 0)),
            scratch_shapes=[pltpu.VMEM((tr, d_out), jnp.float32)],
        ),
        compiler_params=pltpu.CompilerParams(
            dimension_semantics=("parallel", "arbitrary")),
    )(ac, w, b.reshape(1, d_out), residual,
      gamma.reshape(1, d_out), beta.reshape(1, d_out))


# ---------------------------------------------------------------------------
# Fused FFN (linear1 + ReLU + linear2) + residual + LayerNorm2
#   hidden dim tiled as the reduction axis (ReLU is elementwise, so per-tile
#   relu(x@w1[:,j]+b1[j]) @ w2[j,:] accumulates correctly).
# ---------------------------------------------------------------------------
def _ffn_add_ln_kernel(x_ref, w1_ref, b1_ref, w2_ref, b2_ref, g_ref, bt_ref,
                       o_ref, acc_ref, xc_ref, *, eps):
    j = pl.program_id(1)

    @pl.when(j == 0)
    def _init():
        acc_ref[...] = jnp.zeros_like(acc_ref)
        xc_ref[...] = x_ref[...].astype(xc_ref.dtype)   # one bf16 cast per row tile

    h = jnp.dot(xc_ref[...], w1_ref[...],
                preferred_element_type=jnp.float32) + b1_ref[...]
    h = jnp.maximum(h, 0.0)                             # ReLU
    # TODO(synk): FFN dropout between ReLU and linear2 (identity in eval mode).
    acc_ref[...] += jnp.dot(h.astype(w2_ref.dtype), w2_ref[...],
                            preferred_element_type=jnp.float32)

    @pl.when(j == pl.num_programs(1) - 1)
    def _finalize():
        s = acc_ref[...] + b2_ref[...] + x_ref[...].astype(jnp.float32)
        d = s.shape[-1]
        mean = jnp.mean(s, axis=-1, keepdims=True)
        c = s - mean
        std = jnp.sqrt(jnp.sum(c * c, axis=-1, keepdims=True) / (d - 1))
        o_ref[...] = (g_ref[...] * (c / (std + eps)) + bt_ref[...]).astype(o_ref.dtype)
        # TODO(synk): dropout2 (identity in eval mode).


def ffn_add_ln(x, w1, b1, w2, b2, gamma, beta, *, eps,
               row_block=256, hid_block=512):
    rows, d = x.shape
    hid = w1.shape[1]
    tr = _pick_tile(rows, row_block, 8)
    th = _pick_tile(hid, hid_block, 128)
    return pl.pallas_call(
        functools.partial(_ffn_add_ln_kernel, eps=eps),
        out_shape=jax.ShapeDtypeStruct((rows, d), x.dtype),
        grid_spec=pltpu.PrefetchScalarGridSpec(
            num_scalar_prefetch=0,
            grid=(rows // tr, hid // th),
            in_specs=[
                pl.BlockSpec((tr, d), lambda i, j: (i, 0)),      # x1 (residual too)
                pl.BlockSpec((d, th), lambda i, j: (0, j)),      # w1 tile
                pl.BlockSpec((1, th), lambda i, j: (0, j)),      # b1 tile
                pl.BlockSpec((th, d), lambda i, j: (j, 0)),      # w2 tile
                pl.BlockSpec((1, d), lambda i, j: (0, 0)),       # b2
                pl.BlockSpec((1, d), lambda i, j: (0, 0)),       # gamma2
                pl.BlockSpec((1, d), lambda i, j: (0, 0)),       # beta2
            ],
            out_specs=pl.BlockSpec((tr, d), lambda i, j: (i, 0)),
            scratch_shapes=[pltpu.VMEM((tr, d), jnp.float32),    # f32 accumulator
                            pltpu.VMEM((tr, d), w1.dtype)],      # bf16 copy of x1
        ),
        compiler_params=pltpu.CompilerParams(
            dimension_semantics=("parallel", "arbitrary")),
    )(x, w1, b1.reshape(1, hid), w2, b2.reshape(1, d),
      gamma.reshape(1, d), beta.reshape(1, d))


# ---------------------------------------------------------------------------
# Parameter preparation (done ONCE, outside the per-call path)
# ---------------------------------------------------------------------------
def prepare_params(params, *, n_head, mxu_dtype=jnp.bfloat16):
    """Fold 1/sqrt(d_k) into wq/bq, fuse QKV weights, cast weights for the MXU."""
    d_model = params["wq"].shape[0]
    d_k = d_model // n_head
    scale = 1.0 / math.sqrt(d_k)
    w_qkv = jnp.concatenate(
        [params["wq"] * scale, params["wk"], params["wv"]], axis=1)
    b_qkv = jnp.concatenate(
        [params["bq"] * scale, params["bk"], params["bv"]], axis=0)
    return dict(
        w_qkv=w_qkv.astype(mxu_dtype), b_qkv=b_qkv,
        wo=params["wo"].astype(mxu_dtype), bo=params["bo"],
        w1=params["w1"].astype(mxu_dtype), b1=params["b1"],
        w2=params["w2"].astype(mxu_dtype), b2=params["b2"],
        gamma1=params["gamma1"], beta1=params["beta1"],
        gamma2=params["gamma2"], beta2=params["beta2"],
    )


# ---------------------------------------------------------------------------
# Full TransformerLayer forward (eval mode: dropouts are identity)
# ---------------------------------------------------------------------------
def transformer_layer(x, prep, *, n_head, eps=1e-12, src_mask=None):
    # TODO(synk): src_mask (masked_fill(mask == 0, -1e9)) is not supported;
    # only the default mask=None forward path is implemented.
    assert src_mask is None
    B, S, d_model = x.shape
    assert d_model % n_head == 0
    rows = B * S
    xf = x.reshape(rows, d_model)

    # --- MultiHeadedAttention (fused QKV projection, flash attention) --------
    qkv = linear(xf, prep["w_qkv"], prep["b_qkv"])        # (rows, 3*d_model) bf16
    attn = flash_mha(qkv.reshape(B, S, 3 * d_model),
                     n_head=n_head, d_model=d_model)      # (B, S, d_model) bf16
    # --- output projection + residual + LayerNorm1 (single fused kernel) -----
    x1 = proj_add_ln(attn.reshape(rows, d_model), prep["wo"], prep["bo"], xf,
                     prep["gamma1"], prep["beta1"], eps=eps)        # (rows, d) f32
    # --- FFN + residual + LayerNorm2 (single fused kernel) -------------------
    x2 = ffn_add_ln(x1, prep["w1"], prep["b1"], prep["w2"], prep["b2"],
                    prep["gamma2"], prep["beta2"], eps=eps)
    return x2.reshape(B, S, d_model)


# ---------------------------------------------------------------------------
# Pure-JAX reference (replicates the PyTorch module's eval-mode forward)
# ---------------------------------------------------------------------------
def _reference_transformer_layer(x, params, *, n_head, eps=1e-12):
    B, S, d_model = x.shape
    d_k = d_model // n_head

    def lin(t, w, b):
        return jnp.dot(t, w) + b

    def ln(t, g, b):
        mean = t.mean(-1, keepdims=True)
        c = t - mean
        std = jnp.sqrt((c * c).sum(-1, keepdims=True) / (t.shape[-1] - 1))
        return g * (c / (std + eps)) + b

    def split_heads(t):
        return t.reshape(B, S, n_head, d_k).transpose(0, 2, 1, 3)

    q = split_heads(lin(x, params["wq"], params["bq"]))
    k = split_heads(lin(x, params["wk"], params["bk"]))
    v = split_heads(lin(x, params["wv"], params["bv"]))
    scores = jnp.einsum("bhqd,bhkd->bhqk", q, k) / math.sqrt(d_k)
    p_attn = jax.nn.softmax(scores, axis=-1)
    a = jnp.einsum("bhqk,bhkd->bhqd", p_attn, v)
    a = a.transpose(0, 2, 1, 3).reshape(B, S, d_model)
    a = lin(a, params["wo"], params["bo"])

    x1 = ln(x + a, params["gamma1"], params["beta1"])
    h = jnp.maximum(lin(x1, params["w1"], params["b1"]), 0.0)
    f = lin(h, params["w2"], params["b2"])
    return ln(x1 + f, params["gamma2"], params["beta2"])


if __name__ == "__main__":
    B, S = 2, 16
    d_model, n_head, ffn_hidden = 256, 2, 512      # d_k = 128 -> lane-dense blocks
    eps = 1e-12

    root = jax.random.PRNGKey(0)
    kx, *wkeys = jax.random.split(root, 8)

    def init_linear(key, fan_in, fan_out):
        kw, kb = jax.random.split(key)
        bound = 1.0 / math.sqrt(fan_in)
        w = jax.random.uniform(kw, (fan_in, fan_out), jnp.float32, -bound, bound)
        b = jax.random.uniform(kb, (fan_out,), jnp.float32, -bound, bound)
        return w, b

    wq, bq = init_linear(wkeys[0], d_model, d_model)
    wk, bk = init_linear(wkeys[1], d_model, d_model)
    wv, bv = init_linear(wkeys[2], d_model, d_model)
    wo, bo = init_linear(wkeys[3], d_model, d_model)
    w1, b1 = init_linear(wkeys[4], d_model, ffn_hidden)
    w2, b2 = init_linear(wkeys[5], ffn_hidden, d_model)
    params = dict(
        wq=wq, bq=bq, wk=wk, bk=bk, wv=wv, bv=bv, wo=wo, bo=bo,
        w1=w1, b1=b1, w2=w2, b2=b2,
        gamma1=jnp.ones((d_model,), jnp.float32),
        beta1=jnp.zeros((d_model,), jnp.float32),
        gamma2=jnp.ones((d_model,), jnp.float32),
        beta2=jnp.zeros((d_model,), jnp.float32),
    )

    x = jax.random.normal(kx, (B, S, d_model), dtype=jnp.float32)
    ref = _reference_transformer_layer(x, params, n_head=n_head, eps=eps)

    fwd = jax.jit(functools.partial(transformer_layer, n_head=n_head, eps=eps))

    # f32 MXU path: kernel-logic check (differences vs reference are only
    # approx softmax reciprocal / op ordering).
    prep_f32 = prepare_params(params, n_head=n_head, mxu_dtype=jnp.float32)
    out_f32 = jax.block_until_ready(fwd(x, prep_f32))
    assert out_f32.shape == (B, S, d_model)
    assert jnp.allclose(out_f32, ref, atol=2e-2, rtol=2e-2), "f32 mismatch vs reference"

    # bf16 MXU path (the optimized path): accuracy bounded by bf16 matmul
    # inputs everywhere (accumulation/softmax/LayerNorm stay f32).
    prep_bf16 = prepare_params(params, n_head=n_head, mxu_dtype=jnp.bfloat16)
    out_bf16 = jax.block_until_ready(fwd(x, prep_bf16))
    assert out_bf16.shape == (B, S, d_model)
    assert jnp.allclose(out_bf16, ref, atol=1e-1, rtol=1e-1), "bf16 mismatch vs reference"

    print("KERNEL_OK")
</pallas_src>

<mosaic_0001>
module attributes {stable_mosaic.version = 11 : i64} {
  func.func @_linear_kernel(%arg0: i32, %arg1: i32, %arg2: memref<32x256xf32, #tpu.memory_space<vmem>>, %arg3: memref<256x384xf32, #tpu.memory_space<vmem>>, %arg4: memref<1x384xf32, #tpu.memory_space<vmem>>, %arg5: memref<32x384xf32, #tpu.memory_space<vmem>>) attributes {dimension_semantics = [#tpu.dimension_semantics<parallel>, #tpu.dimension_semantics<parallel>], iteration_bounds = array<i64: 1, 2>, scalar_prefetch = 0 : i64, scratch_operands = 0 : i64, tpu.core_type = #tpu.core_type<tc>, window_params = [{transform_indices = @transform_0, window_bounds = array<i64: 32, 256>}, {transform_indices = @transform_1, window_bounds = array<i64: 256, 384>}, {transform_indices = @transform_2, window_bounds = array<i64: 1, 384>}, {transform_indices = @transform_3, window_bounds = array<i64: 32, 384>}]} {
    %c0 = arith.constant 0 : index
    %c0_0 = arith.constant 0 : index
    %0 = vector.load %arg2[%c0, %c0_0] : memref<32x256xf32, #tpu.memory_space<vmem>>, vector<32x256xf32>
    %c0_1 = arith.constant 0 : index
    %c0_2 = arith.constant 0 : index
    %1 = vector.load %arg3[%c0_1, %c0_2] : memref<256x384xf32, #tpu.memory_space<vmem>>, vector<256x384xf32>
    %cst = arith.constant dense<0.000000e+00> : vector<32x384xf32>
    %2 = tpu.matmul %0, %1, %cst {dimension_numbers = #tpu.dot_dimension_numbers<[1], [0], [0], [1], [0, 0, 1, 1], [], []>} : vector<32x256xf32>, vector<256x384xf32>, vector<32x384xf32> -> vector<32x384xf32>
    %c0_3 = arith.constant 0 : index
    %c0_4 = arith.constant 0 : index
    %3 = vector.load %arg4[%c0_3, %c0_4] : memref<1x384xf32, #tpu.memory_space<vmem>>, vector<1x384xf32>
    %4 = vector.broadcast %3 : vector<1x384xf32> to vector<32x384xf32>
    %5 = arith.addf %2, %4 : vector<32x384xf32>
    %c0_5 = arith.constant 0 : index
    %c0_6 = arith.constant 0 : index
    %6 = vector.load %arg5[%c0_5, %c0_6] : memref<32x384xf32, #tpu.memory_space<vmem>>, vector<32x384xf32>
    tpu.vector_store %arg5[%c0_5, %c0_6], %5 {strides = array<i32>} : memref<32x384xf32, #tpu.memory_space<vmem>>, vector<32x384xf32>,
    return
  }
  func.func @transform_0(%arg0: i32, %arg1: i32) -> (i32, i32) {
    %c0_i32 = arith.constant 0 : i32
    %c0_i32_0 = arith.constant 0 : i32
    return %arg0, %c0_i32 : i32, i32
  }
  func.func @transform_1(%arg0: i32, %arg1: i32) -> (i32, i32) {
    %c0_i32 = arith.constant 0 : i32
    %c0_i32_0 = arith.constant 0 : i32
    return %c0_i32, %arg1 : i32, i32
  }
  func.func @transform_2(%arg0: i32, %arg1: i32) -> (i32, i32) {
    %c0_i32 = arith.constant 0 : i32
    %c0_i32_0 = arith.constant 0 : i32
    return %c0_i32, %arg1 : i32, i32
  }
  func.func @transform_3(%arg0: i32, %arg1: i32) -> (i32, i32) {
    %c0_i32 = arith.constant 0 : i32
    return %arg0, %arg1 : i32, i32
  }
}

module attributes {stable_mosaic.version = 11 : i64} {
  func.func @_flash_mha_kernel(%arg0: i32, %arg1: i32, %arg2: i32, %arg3: i32, %arg4: memref<1x16x128xf32, #tpu.memory_space<vmem>>, %arg5: memref<1x16x128xf32, #tpu.memory_space<vmem>>, %arg6: memref<1x16x128xf32, #tpu.memory_space<vmem>>, %arg7: memref<1x16x128xf32, #tpu.memory_space<vmem>>, %arg8: memref<16x1xf32, #tpu.memory_space<vmem>>, %arg9: memref<16x1xf32, #tpu.memory_space<vmem>>, %arg10: memref<16x128xf32, #tpu.memory_space<vmem>>) attributes {dimension_semantics = [#tpu.dimension_semantics<parallel>, #tpu.dimension_semantics<parallel>, #tpu.dimension_semantics<parallel>, #tpu.dimension_semantics<arbitrary>], iteration_bounds = array<i64: 2, 2, 1, 1>, scalar_prefetch = 0 : i64, scratch_operands = 3 : i64, tpu.core_type = #tpu.core_type<tc>, window_params = [{transform_indices = @transform_0, window_bounds = array<i64: 1, 16, 128>}, {transform_indices = @transform_1, window_bounds = array<i64: 1, 16, 128>}, {transform_indices = @transform_2, window_bounds = array<i64: 1, 16, 128>}, {transform_indices = @transform_3, window_bounds = array<i64: 1, 16, 128>}]} {
    %c0_i32 = arith.constant 0 : i32
    %0 = arith.cmpi eq, %arg3, %c0_i32 : i32
    %1 = arith.extui %0 : i1 to i32
    %c0_i32_0 = arith.constant 0 : i32
    %2 = arith.cmpi ne, %1, %c0_i32_0 : i32
    scf.if %2 {
      %cst_26 = arith.constant 0xFF800000 : f32
      %35 = vector.broadcast %cst_26 : f32 to vector<16x1xf32>
      %c0_27 = arith.constant 0 : index
      %c0_28 = arith.constant 0 : index
      %36 = vector.load %arg8[%c0_27, %c0_28] : memref<16x1xf32, #tpu.memory_space<vmem>>, vector<16x1xf32>
      tpu.vector_store %arg8[%c0_27, %c0_28], %35 {strides = array<i32>} : memref<16x1xf32, #tpu.memory_space<vmem>>, vector<16x1xf32>,
      %cst_29 = arith.constant 0.000000e+00 : f32
      %37 = vector.broadcast %cst_29 : f32 to vector<16x1xf32>
      %c0_30 = arith.constant 0 : index
      %c0_31 = arith.constant 0 : index
      %38 = vector.load %arg9[%c0_30, %c0_31] : memref<16x1xf32, #tpu.memory_space<vmem>>, vector<16x1xf32>
      tpu.vector_store %arg9[%c0_30, %c0_31], %37 {strides = array<i32>} : memref<16x1xf32, #tpu.memory_space<vmem>>, vector<16x1xf32>,
      %cst_32 = arith.constant 0.000000e+00 : f32
      %39 = vector.broadcast %cst_32 : f32 to vector<16x128xf32>
      %c0_33 = arith.constant 0 : index
      %c0_34 = arith.constant 0 : index
      %40 = vector.load %arg10[%c0_33, %c0_34] : memref<16x128xf32, #tpu.memory_space<vmem>>, vector<16x128xf32>
      tpu.vector_store %arg10[%c0_33, %c0_34], %39 {strides = array<i32>} : memref<16x128xf32, #tpu.memory_space<vmem>>, vector<16x128xf32>,
    } else {
    }
    %c0 = arith.constant 0 : index
    %c0_1 = arith.constant 0 : index
    %c0_2 = arith.constant 0 : index
    %3 = vector.load %arg4[%c0, %c0_1, %c0_2] : memref<1x16x128xf32, #tpu.memory_space<vmem>>, vector<1x16x128xf32>
    %4 = vector.shape_cast %3 : vector<1x16x128xf32> to vector<16x128xf32>
    %c0_3 = arith.constant 0 : index
    %c0_4 = arith.constant 0 : index
    %c0_5 = arith.constant 0 : index
    %5 = vector.load %arg5[%c0_3, %c0_4, %c0_5] : memref<1x16x128xf32, #tpu.memory_space<vmem>>, vector<1x16x128xf32>
    %6 = vector.shape_cast %5 : vector<1x16x128xf32> to vector<16x128xf32>
    "tpu.trace_start"() <{level = 10 : i32, message = "qd,kd->qk"}> : () -> ()
    %cst = arith.constant dense<0.000000e+00> : vector<16x16xf32>
    %7 = tpu.matmul %4, %6, %cst {dimension_numbers = #tpu.dot_dimension_numbers<[1], [1], [0], [0], [0, 0, 1, 0], [], []>} : vector<16x128xf32>, vector<16x128xf32>, vector<16x16xf32> -> vector<16x16xf32>
    "tpu.trace_stop"() : () -> ()
    %c0_6 = arith.constant 0 : index
    %c0_7 = arith.constant 0 : index
    %8 = vector.load %arg8[%c0_6, %c0_7] : memref<16x1xf32, #tpu.memory_space<vmem>>, vector<16x1xf32>
    %cst_8 = arith.constant dense<0xFF800000> : vector<16xf32>
    %9 = vector.multi_reduction <maximumf>, %7, %cst_8 [1] : vector<16x16xf32> to vector<16xf32>
    %10 = vector.shape_cast %9 : vector<16xf32> to vector<16x1xf32>
    %11 = arith.maximumf %8, %10 : vector<16x1xf32>
    %12 = arith.subf %8, %11 : vector<16x1xf32>
    %13 = math.exp %12 : vector<16x1xf32>
    %14 = vector.broadcast %11 : vector<16x1xf32> to vector<16x16xf32>
    %15 = arith.subf %7, %14 : vector<16x16xf32>
    %16 = math.exp %15 : vector<16x16xf32>
    %c0_9 = arith.constant 0 : index
    %c0_10 = arith.constant 0 : index
    %17 = vector.load %arg9[%c0_9, %c0_10] : memref<16x1xf32, #tpu.memory_space<vmem>>, vector<16x1xf32>
    %18 = arith.mulf %13, %17 : vector<16x1xf32>
    %cst_11 = arith.constant dense<0.000000e+00> : vector<16xf32>
    %19 = vector.multi_reduction <add>, %16, %cst_11 [1] : vector<16x16xf32> to vector<16xf32>
    %20 = vector.shape_cast %19 : vector<16xf32> to vector<16x1xf32>
    %21 = arith.addf %18, %20 : vector<16x1xf32>
    %c0_12 = arith.constant 0 : index
    %c0_13 = arith.constant 0 : index
    %22 = vector.load %arg9[%c0_12, %c0_13] : memref<16x1xf32, #tpu.memory_space<vmem>>, vector<16x1xf32>
    tpu.vector_store %arg9[%c0_12, %c0_13], %21 {strides = array<i32>} : memref<16x1xf32, #tpu.memory_space<vmem>>, vector<16x1xf32>,
    %c0_14 = arith.constant 0 : index
    %c0_15 = arith.constant 0 : index
    %23 = vector.load %arg10[%c0_14, %c0_15] : memref<16x128xf32, #tpu.memory_space<vmem>>, vector<16x128xf32>
    %24 = vector.broadcast %13 : vector<16x1xf32> to vector<16x128xf32>
    %25 = arith.mulf %24, %23 : vector<16x128xf32>
    %c0_16 = arith.constant 0 : index
    %c0_17 = arith.constant 0 : index
    %c0_18 = arith.constant 0 : index
    %26 = vector.load %arg6[%c0_16, %c0_17, %c0_18] : memref<1x16x128xf32, #tpu.memory_space<vmem>>, vector<1x16x128xf32>
    %27 = vector.shape_cast %26 : vector<1x16x128xf32> to vector<16x128xf32>
    %cst_19 = arith.constant dense<0.000000e+00> : vector<16x128xf32>
    %28 = tpu.matmul %16, %27, %cst_19 {dimension_numbers = #tpu.dot_dimension_numbers<[1], [0], [0], [1], [0, 0, 1, 1], [], []>} : vector<16x16xf32>, vector<16x128xf32>, vector<16x128xf32> -> vector<16x128xf32>
    %29 = arith.addf %25, %28 : vector<16x128xf32>
    %c0_20 = arith.constant 0 : index
    %c0_21 = arith.constant 0 : index
    %30 = vector.load %arg10[%c0_20, %c0_21] : memref<16x128xf32, #tpu.memory_space<vmem>>, vector<16x128xf32>
    tpu.vector_store %arg10[%c0_20, %c0_21], %29 {strides = array<i32>} : memref<16x128xf32, #tpu.memory_space<vmem>>, vector<16x128xf32>,
    %c0_22 = arith.constant 0 : index
    %c0_23 = arith.constant 0 : index
    %31 = vector.load %arg8[%c0_22, %c0_23] : memref<16x1xf32, #tpu.memory_space<vmem>>, vector<16x1xf32>
    tpu.vector_store %arg8[%c0_22, %c0_23], %11 {strides = array<i32>} : memref<16x1xf32, #tpu.memory_space<vmem>>, vector<16x1xf32>,
    %c0_i32_24 = arith.constant 0 : i32
    %32 = arith.cmpi eq, %arg3, %c0_i32_24 : i32
    %33 = arith.extui %32 : i1 to i32
    %c0_i32_25 = arith.constant 0 : i32
    %34 = arith.cmpi ne, %33, %c0_i32_25 : i32
    scf.if %34 {
      %c0_26 = arith.constant 0 : index
      %c0_27 = arith.constant 0 : index
      %35 = vector.load %arg9[%c0_26, %c0_27] : memref<16x1xf32, #tpu.memory_space<vmem>>, vector<16x1xf32>
      %36 = tpu.reciprocal %35 {approx = true} : vector<16x1xf32> -> vector<16x1xf32>
      %c0_28 = arith.constant 0 : index
      %c0_29 = arith.constant 0 : index
      %37 = vector.load %arg10[%c0_28, %c0_29] : memref<16x128xf32, #tpu.memory_space<vmem>>, vector<16x128xf32>
      %38 = vector.broadcast %36 : vector<16x1xf32> to vector<16x128xf32>
      %39 = arith.mulf %37, %38 : vector<16x128xf32>
      %c0_30 = arith.constant 0 : index
      %c0_31 = arith.constant 0 : index
      %c0_32 = arith.constant 0 : index
      %40 = vector.load %arg7[%c0_30, %c0_31, %c0_32] : memref<1x16x128xf32, #tpu.memory_space<vmem>>, vector<1x16x128xf32>
      %41 = vector.shape_cast %40 : vector<1x16x128xf32> to vector<16x128xf32>
      %42 = vector.shape_cast %39 : vector<16x128xf32> to vector<1x16x128xf32>
      tpu.vector_store %arg7[%c0_30, %c0_31, %c0_32], %42 {strides = array<i32>} : memref<1x16x128xf32, #tpu.memory_space<vmem>>, vector<1x16x128xf32>,
    } else {
    }
    return
  }
  func.func @transform_0(%arg0: i32, %arg1: i32, %arg2: i32, %arg3: i32) -> (i32, i32, i32) {
    %c0_i32 = arith.constant 0 : i32
    return %arg0, %arg2, %arg1 : i32, i32, i32
  }
  func.func @transform_1(%arg0: i32, %arg1: i32, %arg2: i32, %arg3: i32) -> (i32, i32, i32) {
    %c2_i32 = arith.constant 2 : i32
    %0 = arith.addi %c2_i32, %arg1 : i32
    %c0_i32 = arith.constant 0 : i32
    return %arg0, %arg3, %0 : i32, i32, i32
  }
  func.func @transform_2(%arg0: i32, %arg1: i32, %arg2: i32, %arg3: i32) -> (i32, i32, i32) {
    %c4_i32 = arith.constant 4 : i32
    %0 = arith.addi %c4_i32, %arg1 : i32
    %c0_i32 = arith.constant 0 : i32
    return %arg0, %arg3, %0 : i32, i32, i32
  }
  func.func @transform_3(%arg0: i32, %arg1: i32, %arg2: i32, %arg3: i32) -> (i32, i32, i32) {
    %c0_i32 = arith.constant 0 : i32
    return %arg0, %arg2, %arg1 : i32, i32, i32
  }
}

module attributes {stable_mosaic.version = 11 : i64} {
  func.func @_proj_add_ln_kernel(%arg0: i32, %arg1: i32, %arg2: memref<32x256xf32, #tpu.memory_space<vmem>>, %arg3: memref<256x256xf32, #tpu.memory_space<vmem>>, %arg4: memref<1x256xf32, #tpu.memory_space<vmem>>, %arg5: memref<32x256xf32, #tpu.memory_space<vmem>>, %arg6: memref<1x256xf32, #tpu.memory_space<vmem>>, %arg7: memref<1x256xf32, #tpu.memory_space<vmem>>, %arg8: memref<32x256xf32, #tpu.memory_space<vmem>>, %arg9: memref<32x256xf32, #tpu.memory_space<vmem>>) attributes {dimension_semantics = [#tpu.dimension_semantics<parallel>, #tpu.dimension_semantics<arbitrary>], iteration_bounds = array<i64: 1, 1>, scalar_prefetch = 0 : i64, scratch_operands = 1 : i64, tpu.core_type = #tpu.core_type<tc>, window_params = [{transform_indices = @transform_0, window_bounds = array<i64: 32, 256>}, {transform_indices = @transform_1, window_bounds = array<i64: 256, 256>}, {pipeline_mode = #tpu.pipeline_mode<synchronous>, transform_indices = @transform_2, window_bounds = array<i64: 1, 256>}, {transform_indices = @transform_3, window_bounds = array<i64: 32, 256>}, {pipeline_mode = #tpu.pipeline_mode<synchronous>, transform_indices = @transform_4, window_bounds = array<i64: 1, 256>}, {pipeline_mode = #tpu.pipeline_mode<synchronous>, transform_indices = @transform_5, window_bounds = array<i64: 1, 256>}, {transform_indices = @transform_6, window_bounds = array<i64: 32, 256>}]} {
    %c0_i32 = arith.constant 0 : i32
    %0 = arith.cmpi eq, %arg1, %c0_i32 : i32
    %1 = arith.extui %0 : i1 to i32
    %c0_i32_0 = arith.constant 0 : i32
    %2 = arith.cmpi ne, %1, %c0_i32_0 : i32
    scf.if %2 {
      %cst_10 = arith.constant 0.000000e+00 : f32
      %12 = vector.broadcast %cst_10 : f32 to vector<32x256xf32>
      %c0_11 = arith.constant 0 : index
      %c0_12 = arith.constant 0 : index
      %13 = vector.load %arg9[%c0_11, %c0_12] : memref<32x256xf32, #tpu.memory_space<vmem>>, vector<32x256xf32>
      tpu.vector_store %arg9[%c0_11, %c0_12], %12 {strides = array<i32>} : memref<32x256xf32, #tpu.memory_space<vmem>>, vector<32x256xf32>,
    } else {
    }
    %c0 = arith.constant 0 : index
    %c0_1 = arith.constant 0 : index
    %3 = vector.load %arg9[%c0, %c0_1] : memref<32x256xf32, #tpu.memory_space<vmem>>, vector<32x256xf32>
    %c0_2 = arith.constant 0 : index
    %c0_3 = arith.constant 0 : index
    %4 = vector.load %arg2[%c0_2, %c0_3] : memref<32x256xf32, #tpu.memory_space<vmem>>, vector<32x256xf32>
    %c0_4 = arith.constant 0 : index
    %c0_5 = arith.constant 0 : index
    %5 = vector.load %arg3[%c0_4, %c0_5] : memref<256x256xf32, #tpu.memory_space<vmem>>, vector<256x256xf32>
    %cst = arith.constant dense<0.000000e+00> : vector<32x256xf32>
    %6 = tpu.matmul %4, %5, %cst {dimension_numbers = #tpu.dot_dimension_numbers<[1], [0], [0], [1], [0, 0, 1, 1], [], []>} : vector<32x256xf32>, vector<256x256xf32>, vector<32x256xf32> -> vector<32x256xf32>
    %7 = arith.addf %3, %6 : vector<32x256xf32>
    %c0_6 = arith.constant 0 : index
    %c0_7 = arith.constant 0 : index
    %8 = vector.load %arg9[%c0_6, %c0_7] : memref<32x256xf32, #tpu.memory_space<vmem>>, vector<32x256xf32>
    tpu.vector_store %arg9[%c0_6, %c0_7], %7 {strides = array<i32>} : memref<32x256xf32, #tpu.memory_space<vmem>>, vector<32x256xf32>,
    %c0_i32_8 = arith.constant 0 : i32
    %9 = arith.cmpi eq, %arg1, %c0_i32_8 : i32
    %10 = arith.extui %9 : i1 to i32
    %c0_i32_9 = arith.constant 0 : i32
    %11 = arith.cmpi ne, %10, %c0_i32_9 : i32
    scf.if %11 {
      %c0_10 = arith.constant 0 : index
      %c0_11 = arith.constant 0 : index
      %12 = vector.load %arg9[%c0_10, %c0_11] : memref<32x256xf32, #tpu.memory_space<vmem>>, vector<32x256xf32>
      %c0_12 = arith.constant 0 : index
      %c0_13 = arith.constant 0 : index
      %13 = vector.load %arg4[%c0_12, %c0_13] : memref<1x256xf32, #tpu.memory_space<vmem>>, vector<1x256xf32>
      %14 = vector.broadcast %13 : vector<1x256xf32> to vector<32x256xf32>
      %15 = arith.addf %12, %14 : vector<32x256xf32>
      %c0_14 = arith.constant 0 : index
      %c0_15 = arith.constant 0 : index
      %16 = vector.load %arg5[%c0_14, %c0_15] : memref<32x256xf32, #tpu.memory_space<vmem>>, vector<32x256xf32>
      %17 = arith.addf %15, %16 : vector<32x256xf32>
      %cst_16 = arith.constant dense<0.000000e+00> : vector<32xf32>
      %18 = vector.multi_reduction <add>, %17, %cst_16 [1] : vector<32x256xf32> to vector<32xf32>
      %19 = vector.shape_cast %18 : vector<32xf32> to vector<32x1xf32>
      %cst_17 = arith.constant 2.560000e+02 : f32
      %20 = vector.broadcast %cst_17 : f32 to vector<32x1xf32>
      %21 = arith.divf %19, %20 : vector<32x1xf32>
      %22 = vector.broadcast %21 : vector<32x1xf32> to vector<32x256xf32>
      %23 = arith.subf %17, %22 : vector<32x256xf32>
      %24 = arith.mulf %23, %23 : vector<32x256xf32>
      %cst_18 = arith.constant dense<0.000000e+00> : vector<32xf32>
      %25 = vector.multi_reduction <add>, %24, %cst_18 [1] : vector<32x256xf32> to vector<32xf32>
      %26 = vector.shape_cast %25 : vector<32xf32> to vector<32x1xf32>
      %cst_19 = arith.constant 2.550000e+02 : f32
      %27 = vector.broadcast %cst_19 : f32 to vector<32x1xf32>
      %28 = arith.divf %26, %27 : vector<32x1xf32>
      %29 = math.sqrt %28 : vector<32x1xf32>
      %c0_20 = arith.constant 0 : index
      %c0_21 = arith.constant 0 : index
      %30 = vector.load %arg6[%c0_20, %c0_21] : memref<1x256xf32, #tpu.memory_space<vmem>>, vector<1x256xf32>
      %cst_22 = arith.constant 9.99999996E-13 : f32
      %31 = vector.broadcast %cst_22 : f32 to vector<32x1xf32>
      %32 = arith.addf %29, %31 : vector<32x1xf32>
      %33 = vector.broadcast %32 : vector<32x1xf32> to vector<32x256xf32>
      %34 = arith.divf %23, %33 : vector<32x256xf32>
      %35 = vector.broadcast %30 : vector<1x256xf32> to vector<32x256xf32>
      %36 = arith.mulf %35, %34 : vector<32x256xf32>
      %c0_23 = arith.constant 0 : index
      %c0_24 = arith.constant 0 : index
      %37 = vector.load %arg7[%c0_23, %c0_24] : memref<1x256xf32, #tpu.memory_space<vmem>>, vector<1x256xf32>
      %38 = vector.broadcast %37 : vector<1x256xf32> to vector<32x256xf32>
      %39 = arith.addf %36, %38 : vector<32x256xf32>
      %c0_25 = arith.constant 0 : index
      %c0_26 = arith.constant 0 : index
      %40 = vector.load %arg8[%c0_25, %c0_26] : memref<32x256xf32, #tpu.memory_space<vmem>>, vector<32x256xf32>
      tpu.vector_store %arg8[%c0_25, %c0_26], %39 {strides = array<i32>} : memref<32x256xf32, #tpu.memory_space<vmem>>, vector<32x256xf32>,
    } else {
    }
    return
  }
  func.func @transform_0(%arg0: i32, %arg1: i32) -> (i32, i32) {
    %c0_i32 = arith.constant 0 : i32
    return %arg0, %arg1 : i32, i32
  }
  func.func @transform_1(%arg0: i32, %arg1: i32) -> (i32, i32) {
    %c0_i32 = arith.constant 0 : i32
    %c0_i32_0 = arith.constant 0 : i32
    return %arg1, %c0_i32 : i32, i32
  }
  func.func @transform_2(%arg0: i32, %arg1: i32) -> (i32, i32) {
    %c0_i32 = arith.constant 0 : i32
    %c0_i32_0 = arith.constant 0 : i32
    %c0_i32_1 = arith.constant 0 : i32
    return %c0_i32, %c0_i32_0 : i32, i32
  }
  func.func @transform_3(%arg0: i32, %arg1: i32) -> (i32, i32) {
    %c0_i32 = arith.constant 0 : i32
    %c0_i32_0 = arith.constant 0 : i32
    return %arg0, %c0_i32 : i32, i32
  }
  func.func @transform_4(%arg0: i32, %arg1: i32) -> (i32, i32) {
    %c0_i32 = arith.constant 0 : i32
    %c0_i32_0 = arith.constant 0 : i32
    %c0_i32_1 = arith.constant 0 : i32
    return %c0_i32, %c0_i32_0 : i32, i32
  }
  func.func @transform_5(%arg0: i32, %arg1: i32) -> (i32, i32) {
    %c0_i32 = arith.constant 0 : i32
    %c0_i32_0 = arith.constant 0 : i32
    %c0_i32_1 = arith.constant 0 : i32
    return %c0_i32, %c0_i32_0 : i32, i32
  }
  func.func @transform_6(%arg0: i32, %arg1: i32) -> (i32, i32) {
    %c0_i32 = arith.constant 0 : i32
    %c0_i32_0 = arith.constant 0 : i32
    return %arg0, %c0_i32 : i32, i32
  }
}

module attributes {stable_mosaic.version = 11 : i64} {
  func.func @_ffn_add_ln_kernel(%arg0: i32, %arg1: i32, %arg2: memref<32x256xf32, #tpu.memory_space<vmem>>, %arg3: memref<256x512xf32, #tpu.memory_space<vmem>>, %arg4: memref<1x512xf32, #tpu.memory_space<vmem>>, %arg5: memref<512x256xf32, #tpu.memory_space<vmem>>, %arg6: memref<1x256xf32, #tpu.memory_space<vmem>>, %arg7: memref<1x256xf32, #tpu.memory_space<vmem>>, %arg8: memref<1x256xf32, #tpu.memory_space<vmem>>, %arg9: memref<32x256xf32, #tpu.memory_space<vmem>>, %arg10: memref<32x256xf32, #tpu.memory_space<vmem>>, %arg11: memref<32x256xf32, #tpu.memory_space<vmem>>) attributes {dimension_semantics = [#tpu.dimension_semantics<parallel>, #tpu.dimension_semantics<arbitrary>], iteration_bounds = array<i64: 1, 1>, scalar_prefetch = 0 : i64, scratch_operands = 2 : i64, tpu.core_type = #tpu.core_type<tc>, window_params = [{transform_indices = @transform_0, window_bounds = array<i64: 32, 256>}, {transform_indices = @transform_1, window_bounds = array<i64: 256, 512>}, {transform_indices = @transform_2, window_bounds = array<i64: 1, 512>}, {transform_indices = @transform_3, window_bounds = array<i64: 512, 256>}, {pipeline_mode = #tpu.pipeline_mode<synchronous>, transform_indices = @transform_4, window_bounds = array<i64: 1, 256>}, {pipeline_mode = #tpu.pipeline_mode<synchronous>, transform_indices = @transform_5, window_bounds = array<i64: 1, 256>}, {pipeline_mode = #tpu.pipeline_mode<synchronous>, transform_indices = @transform_6, window_bounds = array<i64: 1, 256>}, {transform_indices = @transform_7, window_bounds = array<i64: 32, 256>}]} {
    %c0_i32 = arith.constant 0 : i32
    %0 = arith.cmpi eq, %arg1, %c0_i32 : i32
    %1 = arith.extui %0 : i1 to i32
    %c0_i32_0 = arith.constant 0 : i32
    %2 = arith.cmpi ne, %1, %c0_i32_0 : i32
    scf.if %2 {
      %cst_16 = arith.constant 0.000000e+00 : f32
      %19 = vector.broadcast %cst_16 : f32 to vector<32x256xf32>
      %c0_17 = arith.constant 0 : index
      %c0_18 = arith.constant 0 : index
      %20 = vector.load %arg10[%c0_17, %c0_18] : memref<32x256xf32, #tpu.memory_space<vmem>>, vector<32x256xf32>
      tpu.vector_store %arg10[%c0_17, %c0_18], %19 {strides = array<i32>} : memref<32x256xf32, #tpu.memory_space<vmem>>, vector<32x256xf32>,
      %c0_19 = arith.constant 0 : index
      %c0_20 = arith.constant 0 : index
      %21 = vector.load %arg2[%c0_19, %c0_20] : memref<32x256xf32, #tpu.memory_space<vmem>>, vector<32x256xf32>
      %c0_21 = arith.constant 0 : index
      %c0_22 = arith.constant 0 : index
      %22 = vector.load %arg11[%c0_21, %c0_22] : memref<32x256xf32, #tpu.memory_space<vmem>>, vector<32x256xf32>
      tpu.vector_store %arg11[%c0_21, %c0_22], %21 {strides = array<i32>} : memref<32x256xf32, #tpu.memory_space<vmem>>, vector<32x256xf32>,
    } else {
    }
    %c0 = arith.constant 0 : index
    %c0_1 = arith.constant 0 : index
    %3 = vector.load %arg11[%c0, %c0_1] : memref<32x256xf32, #tpu.memory_space<vmem>>, vector<32x256xf32>
    %c0_2 = arith.constant 0 : index
    %c0_3 = arith.constant 0 : index
    %4 = vector.load %arg3[%c0_2, %c0_3] : memref<256x512xf32, #tpu.memory_space<vmem>>, vector<256x512xf32>
    %cst = arith.constant dense<0.000000e+00> : vector<32x512xf32>
    %5 = tpu.matmul %3, %4, %cst {dimension_numbers = #tpu.dot_dimension_numbers<[1], [0], [0], [1], [0, 0, 1, 1], [], []>} : vector<32x256xf32>, vector<256x512xf32>, vector<32x512xf32> -> vector<32x512xf32>
    %c0_4 = arith.constant 0 : index
    %c0_5 = arith.constant 0 : index
    %6 = vector.load %arg4[%c0_4, %c0_5] : memref<1x512xf32, #tpu.memory_space<vmem>>, vector<1x512xf32>
    %7 = vector.broadcast %6 : vector<1x512xf32> to vector<32x512xf32>
    %8 = arith.addf %5, %7 : vector<32x512xf32>
    %cst_6 = arith.constant 0.000000e+00 : f32
    %9 = vector.broadcast %cst_6 : f32 to vector<32x512xf32>
    %10 = arith.maximumf %8, %9 : vector<32x512xf32>
    %c0_7 = arith.constant 0 : index
    %c0_8 = arith.constant 0 : index
    %11 = vector.load %arg10[%c0_7, %c0_8] : memref<32x256xf32, #tpu.memory_space<vmem>>, vector<32x256xf32>
    %c0_9 = arith.constant 0 : index
    %c0_10 = arith.constant 0 : index
    %12 = vector.load %arg5[%c0_9, %c0_10] : memref<512x256xf32, #tpu.memory_space<vmem>>, vector<512x256xf32>
    %cst_11 = arith.constant dense<0.000000e+00> : vector<32x256xf32>
    %13 = tpu.matmul %10, %12, %cst_11 {dimension_numbers = #tpu.dot_dimension_numbers<[1], [0], [0], [1], [0, 0, 1, 1], [], []>} : vector<32x512xf32>, vector<512x256xf32>, vector<32x256xf32> -> vector<32x256xf32>
    %14 = arith.addf %11, %13 : vector<32x256xf32>
    %c0_12 = arith.constant 0 : index
    %c0_13 = arith.constant 0 : index
    %15 = vector.load %arg10[%c0_12, %c0_13] : memref<32x256xf32, #tpu.memory_space<vmem>>, vector<32x256xf32>
    tpu.vector_store %arg10[%c0_12, %c0_13], %14 {strides = array<i32>} : memref<32x256xf32, #tpu.memory_space<vmem>>, vector<32x256xf32>,
    %c0_i32_14 = arith.constant 0 : i32
    %16 = arith.cmpi eq, %arg1, %c0_i32_14 : i32
    %17 = arith.extui %16 : i1 to i32
    %c0_i32_15 = arith.constant 0 : i32
    %18 = arith.cmpi ne, %17, %c0_i32_15 : i32
    scf.if %18 {
      %c0_16 = arith.constant 0 : index
      %c0_17 = arith.constant 0 : index
      %19 = vector.load %arg10[%c0_16, %c0_17] : memref<32x256xf32, #tpu.memory_space<vmem>>, vector<32x256xf32>
      %c0_18 = arith.constant 0 : index
      %c0_19 = arith.constant 0 : index
      %20 = vector.load %arg6[%c0_18, %c0_19] : memref<1x256xf32, #tpu.memory_space<vmem>>, vector<1x256xf32>
      %21 = vector.broadcast %20 : vector<1x256xf32> to vector<32x256xf32>
      %22 = arith.addf %19, %21 : vector<32x256xf32>
      %c0_20 = arith.constant 0 : index
      %c0_21 = arith.constant 0 : index
      %23 = vector.load %arg2[%c0_20, %c0_21] : memref<32x256xf32, #tpu.memory_space<vmem>>, vector<32x256xf32>
      %24 = arith.addf %22, %23 : vector<32x256xf32>
      %cst_22 = arith.constant dense<0.000000e+00> : vector<32xf32>
      %25 = vector.multi_reduction <add>, %24, %cst_22 [1] : vector<32x256xf32> to vector<32xf32>
      %26 = vector.shape_cast %25 : vector<32xf32> to vector<32x1xf32>
      %cst_23 = arith.constant 2.560000e+02 : f32
      %27 = vector.broadcast %cst_23 : f32 to vector<32x1xf32>
      %28 = arith.divf %26, %27 : vector<32x1xf32>
      %29 = vector.broadcast %28 : vector<32x1xf32> to vector<32x256xf32>
      %30 = arith.subf %24, %29 : vector<32x256xf32>
      %31 = arith.mulf %30, %30 : vector<32x256xf32>
      %cst_24 = arith.constant dense<0.000000e+00> : vector<32xf32>
      %32 = vector.multi_reduction <add>, %31, %cst_24 [1] : vector<32x256xf32> to vector<32xf32>
      %33 = vector.shape_cast %32 : vector<32xf32> to vector<32x1xf32>
      %cst_25 = arith.constant 2.550000e+02 : f32
      %34 = vector.broadcast %cst_25 : f32 to vector<32x1xf32>
      %35 = arith.divf %33, %34 : vector<32x1xf32>
      %36 = math.sqrt %35 : vector<32x1xf32>
      %c0_26 = arith.constant 0 : index
      %c0_27 = arith.constant 0 : index
      %37 = vector.load %arg7[%c0_26, %c0_27] : memref<1x256xf32, #tpu.memory_space<vmem>>, vector<1x256xf32>
      %cst_28 = arith.constant 9.99999996E-13 : f32
      %38 = vector.broadcast %cst_28 : f32 to vector<32x1xf32>
      %39 = arith.addf %36, %38 : vector<32x1xf32>
      %40 = vector.broadcast %39 : vector<32x1xf32> to vector<32x256xf32>
      %41 = arith.divf %30, %40 : vector<32x256xf32>
      %42 = vector.broadcast %37 : vector<1x256xf32> to vector<32x256xf32>
      %43 = arith.mulf %42, %41 : vector<32x256xf32>
      %c0_29 = arith.constant 0 : index
      %c0_30 = arith.constant 0 : index
      %44 = vector.load %arg8[%c0_29, %c0_30] : memref<1x256xf32, #tpu.memory_space<vmem>>, vector<1x256xf32>
      %45 = vector.broadcast %44 : vector<1x256xf32> to vector<32x256xf32>
      %46 = arith.addf %43, %45 : vector<32x256xf32>
      %c0_31 = arith.constant 0 : index
      %c0_32 = arith.constant 0 : index
      %47 = vector.load %arg9[%c0_31, %c0_32] : memref<32x256xf32, #tpu.memory_space<vmem>>, vector<32x256xf32>
      tpu.vector_store %arg9[%c0_31, %c0_32], %46 {strides = array<i32>} : memref<32x256xf32, #tpu.memory_space<vmem>>, vector<32x256xf32>,
    } else {
    }
    return
  }
  func.func @transform_0(%arg0: i32, %arg1: i32) -> (i32, i32) {
    %c0_i32 = arith.constant 0 : i32
    %c0_i32_0 = arith.constant 0 : i32
    return %arg0, %c0_i32 : i32, i32
  }
  func.func @transform_1(%arg0: i32, %arg1: i32) -> (i32, i32) {
    %c0_i32 = arith.constant 0 : i32
    %c0_i32_0 = arith.constant 0 : i32
    return %c0_i32, %arg1 : i32, i32
  }
  func.func @transform_2(%arg0: i32, %arg1: i32) -> (i32, i32) {
    %c0_i32 = arith.constant 0 : i32
    %c0_i32_0 = arith.constant 0 : i32
    return %c0_i32, %arg1 : i32, i32
  }
  func.func @transform_3(%arg0: i32, %arg1: i32) -> (i32, i32) {
    %c0_i32 = arith.constant 0 : i32
    %c0_i32_0 = arith.constant 0 : i32
    return %arg1, %c0_i32 : i32, i32
  }
  func.func @transform_4(%arg0: i32, %arg1: i32) -> (i32, i32) {
    %c0_i32 = arith.constant 0 : i32
    %c0_i32_0 = arith.constant 0 : i32
    %c0_i32_1 = arith.constant 0 : i32
    return %c0_i32, %c0_i32_0 : i32, i32
  }
  func.func @transform_5(%arg0: i32, %arg1: i32) -> (i32, i32) {
    %c0_i32 = arith.constant 0 : i32
    %c0_i32_0 = arith.constant 0 : i32
    %c0_i32_1 = arith.constant 0 : i32
    return %c0_i32, %c0_i32_0 : i32, i32
  }
  func.func @transform_6(%arg0: i32, %arg1: i32) -> (i32, i32) {
    %c0_i32 = arith.constant 0 : i32
    %c0_i32_0 = arith.constant 0 : i32
    %c0_i32_1 = arith.constant 0 : i32
    return %c0_i32, %c0_i32_0 : i32, i32
  }
  func.func @transform_7(%arg0: i32, %arg1: i32) -> (i32, i32) {
    %c0_i32 = arith.constant 0 : i32
    %c0_i32_0 = arith.constant 0 : i32
    return %arg0, %c0_i32 : i32, i32
  }
}

</mosaic_0001>

<llo_original>
// kernel: transformer_layer.5
$region0: #{transformer_layer.5}
  #allocation0 [shape = 'u32[]', space=smem, size = 0x4, offset = 0x4, fixed_abs, tag = 'smem constant byte address 0x4 - core index']
  #allocation1 [shape = 'u32[144,128]{1,0:T(1,128)}', space=vmem, size = 0x12000, scoped, tag = 'internal scratch']
  #allocation2 [shape = 'f32[16,1]{1,0:T(8,128)}', space=vmem, size = 0x2000, scoped, tag = 'scratch operand']
  #allocation3 [shape = 'f32[16,1]{1,0:T(8,128)}', space=vmem, size = 0x2000, scoped, tag = 'scratch operand']
  #allocation4 [shape = 'f32[16,128]{1,0:T(8,128)}', space=vmem, size = 0x2000, scoped, tag = 'scratch operand']
  %s0 = inlined_call_operand.vmem [shape: f32[2,16,768], index: 0, kind: input, shape index: {}, may-alias: {0,1,2}]
  %s1 = inlined_call_operand.vmem [shape: f32[2,16,768], index: 1, kind: input, shape index: {}, may-alias: {0,1,2}]
  %s2 = inlined_call_operand.vmem [shape: f32[2,16,768], index: 2, kind: input, shape index: {}, may-alias: {0,1,2}]
  %s3 = inlined_call_operand.vmem [shape: f32[2,16,256], index: 3, kind: output, shape index: {}]
  %s4 = sld [smem:[#allocation0]]
  $region201: #{transformer_layer.5} parent=0
    _
  %s6 = ssub.s32 1, %s4
  %s7 = scalar_select 0, %s6, %s4
  $region1: #{transformer_layer.5} parent=0
    #allocation5 [shape = 'u8[16384]{0}', space=vmem, size = 0x4000, scoped, tag = 'input window, operand 0']
    #allocation6 [shape = 'u8[16384]{0}', space=vmem, size = 0x4000, scoped, tag = 'input window, operand 1']
    #allocation7 [shape = 'u8[16384]{0}', space=vmem, size = 0x4000, scoped, tag = 'input window, operand 2']
    #allocation8 [shape = 'u8[16384]{0}', space=vmem, size = 0x4000, scoped, tag = 'output window, operand 0']
    loop: start=0, step=1, limit=6
    $region2: #{transformer_layer.5} parent=1 // loop_pre_header
      _
    $region3: #{transformer_layer.5} parent=1 // loop_header
      %s9 = sphi 0, %s13
      %p10 = scmp.ge.s32.totalorder %s9, 6
      %s16 = sphi 0, %s42
      %s17 = sphi 0, %s38
      %s18 = sphi 0, %s34
      %s19 = sphi 0, %s30
      %s20 = sphi 0, %s16
      %s21 = sphi 0, %s17
      %s22 = sphi 0, %s18
      %s23 = sphi 0, %s19
      %s24 = sphi 0, %s20
      %s25 = sphi 0, %s21
      %s26 = sphi 0, %s22
      %s27 = sphi 0, %s23
      %s49 = sphi 0, %s51
      %s52 = sphi 0, %s49
      %s53 = sphi 0, %s52
      %s69 = sphi 0, %s53
      %s81 = sphi 0, %s83
      %s84 = sphi 0, %s81
      %s85 = sphi 0, %s84
      %s101 = sphi 0, %s85
      %s113 = sphi 0, %s115
      %s116 = sphi 0, %s113
      %s117 = sphi 0, %s116
      %s133 = sphi 0, %s117
      %s143 = sphi 0, %s145
      %s146 = sphi 0, %s143
      %s147 = sphi 0, %s146
      %s163 = sphi 0, %s147
    $region4: #{transformer_layer.5} parent=1 // loop_header_branch
      %12 = sbr.rel (%p10) target = $region8
    $region5: #{transformer_layer.5} parent=1 // loop_body
      %s14 = ssub.s32 %s9, 1
      %s15 = ssub.s32 %s9, 2
      %s28 = sadd.s32 1, %s19
      %p29 = scmp.ge.s32.totalorder %s28, 1
      %s30 = scalar_select %p29, 0, %s28
      %s31 = sadd.s32 1, %s18
      %s32 = scalar_select %p29, %s31, %s18
      %p33 = scmp.ge.s32.totalorder %s32, 1
      %s34 = scalar_select %p33, 0, %s32
      %s35 = sadd.s32 1, %s17
      %s36 = scalar_select %p33, %s35, %s17
      %p37 = scmp.ge.s32.totalorder %s36, 2
      %s38 = scalar_select %p37, 0, %s36
      %s39 = sadd.s32 1, %s16
      %s40 = scalar_select %p37, %s39, %s16
      %p41 = scmp.ge.s32.totalorder %s40, 2
      %s42 = scalar_select %p41, 0, %s40
      %s43 = ssub.s32 %s16, %s42
      %s44 = ssub.s32 %s18, %s34
      %s45 = sor.u32 %s43, %s44
      %s46 = ssub.s32 %s17, %s38
      %s47 = sor.u32 %s45, %s46
      %p48 = scmp.eq.s32.totalorder %s47, 0
      %s50 = sadd.s32 %s49, 1
      %s51 = scalar_select %p48, %s49, %s50
      %p54 = pneg %p48
      %p55 = scmp.eq.s32.totalorder %s9, 3
      %p56 = por %p54, %p55
      %p57 = scmp.ne.s32.totalorder %s49, %s52
      %p58 = scmp.eq.s32.totalorder %s9, 0
      %p59 = por %p57, %p58
      %p60 = scmp.ne.s32.totalorder %s49, %s52
      %p61 = scmp.eq.s32.totalorder %s14, 3
      %p62 = por %p60, %p61
      %p63 = scmp.ne.s32.totalorder %s52, %s53
      %p64 = scmp.eq.s32.totalorder %s14, 0
      %p65 = por %p63, %p64
      %p66 = scmp.ne.s32.totalorder %s52, %s53
      %p67 = scmp.eq.s32.totalorder %s15, 3
      %p68 = por %p66, %p67
      %p70 = scmp.ne.s32.totalorder %s53, %s69
      %p71 = scmp.eq.s32.totalorder %s15, 0
      %p72 = por %p70, %p71
      %s73 = sadd.s32 %s17, 2
      %s74 = sadd.s32 %s38, 2
      %s75 = ssub.s32 %s16, %s42
      %s76 = ssub.s32 %s19, %s30
      %s77 = sor.u32 %s75, %s76
      %s78 = ssub.s32 %s73, %s74
      %s79 = sor.u32 %s77, %s78
      %p80 = scmp.eq.s32.totalorder %s79, 0
      %s82 = sadd.s32 %s81, 1
      %s83 = scalar_select %p80, %s81, %s82
      %p86 = pneg %p80
      %p87 = scmp.eq.s32.totalorder %s9, 3
      %p88 = por %p86, %p87
      %p89 = scmp.ne.s32.totalorder %s81, %s84
      %p90 = scmp.eq.s32.totalorder %s9, 0
      %p91 = por %p89, %p90
      %p92 = scmp.ne.s32.totalorder %s81, %s84
      %p93 = scmp.eq.s32.totalorder %s14, 3
      %p94 = por %p92, %p93
      %p95 = scmp.ne.s32.totalorder %s84, %s85
      %p96 = scmp.eq.s32.totalorder %s14, 0
      %p97 = por %p95, %p96
      %p98 = scmp.ne.s32.totalorder %s84, %s85
      %p99 = scmp.eq.s32.totalorder %s15, 3
      %p100 = por %p98, %p99
      %p102 = scmp.ne.s32.totalorder %s85, %s101
      %p103 = scmp.eq.s32.totalorder %s15, 0
      %p104 = por %p102, %p103
      %s105 = sadd.s32 %s17, 4
      %s106 = sadd.s32 %s38, 4
      %s107 = ssub.s32 %s16, %s42
      %s108 = ssub.s32 %s19, %s30
      %s109 = sor.u32 %s107, %s108
      %s110 = ssub.s32 %s105, %s106
      %s111 = sor.u32 %s109, %s110
      %p112 = scmp.eq.s32.totalorder %s111, 0
      %s114 = sadd.s32 %s113, 1
      %s115 = scalar_select %p112, %s113, %s114
      %p118 = pneg %p112
      %p119 = scmp.eq.s32.totalorder %s9, 3
      %p120 = por %p118, %p119
      %p121 = scmp.ne.s32.totalorder %s113, %s116
      %p122 = scmp.eq.s32.totalorder %s9, 0
      %p123 = por %p121, %p122
      %p124 = scmp.ne.s32.totalorder %s113, %s116
      %p125 = scmp.eq.s32.totalorder %s14, 3
      %p126 = por %p124, %p125
      %p127 = scmp.ne.s32.totalorder %s116, %s117
      %p128 = scmp.eq.s32.totalorder %s14, 0
      %p129 = por %p127, %p128
      %p130 = scmp.ne.s32.totalorder %s116, %s117
      %p131 = scmp.eq.s32.totalorder %s15, 3
      %p132 = por %p130, %p131
      %p134 = scmp.ne.s32.totalorder %s117, %s133
      %p135 = scmp.eq.s32.totalorder %s15, 0
      %p136 = por %p134, %p135
      %s137 = ssub.s32 %s16, %s42
      %s138 = ssub.s32 %s18, %s34
      %s139 = sor.u32 %s137, %s138
      %s140 = ssub.s32 %s17, %s38
      %s141 = sor.u32 %s139, %s140
      %p142 = scmp.eq.s32.totalorder %s141, 0
      %s144 = sadd.s32 %s143, 1
      %s145 = scalar_select %p142, %s143, %s144
      %p148 = pneg %p142
      %p149 = scmp.eq.s32.totalorder %s9, 3
      %p150 = por %p148, %p149
      %p151 = scmp.ne.s32.totalorder %s143, %s146
      %p152 = scmp.eq.s32.totalorder %s9, 0
      %p153 = por %p151, %p152
      %p154 = scmp.ne.s32.totalorder %s143, %s146
      %p155 = scmp.eq.s32.totalorder %s14, 3
      %p156 = por %p154, %p155
      %p157 = scmp.ne.s32.totalorder %s146, %s147
      %p158 = scmp.eq.s32.totalorder %s14, 0
      %p159 = por %p157, %p158
      %p160 = scmp.ne.s32.totalorder %s146, %s147
      %p161 = scmp.eq.s32.totalorder %s15, 3
      %p162 = por %p160, %p161
      %p164 = scmp.ne.s32.totalorder %s147, %s163
      %p165 = scmp.eq.s32.totalorder %s15, 0
      %p166 = por %p164, %p165
      %p167 = scmp.le.s32.totalorder 1, %s9
      %p168 = scmp.lt.s32.totalorder %s9, 5
      %p169 = pnand %p167, %p168
      %p170 = pneg %p169
      // Predicated region
      $region9: #{transformer_layer.5} parent=5 // pred_check
        _
      $region10: #{transformer_layer.5} parent=5 // pred_check_branch
        %172 = sbr.rel (%p169) target = $region12
      $region11: #{transformer_layer.5} parent=5 // pred_region
        %s173 = ssub.s32 %s9, 1
      $region12: #{transformer_layer.5} parent=5 // pred_fallthru
        _
      %p174 = scmp.lt.s32.totalorder %s9, 4
      // Predicated region
      $region13: #{transformer_layer.5} parent=5 // pred_check
        %p175 = pneg %p174
      $region14: #{transformer_layer.5} parent=5 // pred_check_branch
        %177 = sbr.rel (%p175) target = $region16
      $region15: #{transformer_layer.5} parent=5 // pred_region
        // Predicated region
        $region17: #{transformer_layer.5} parent=15 // pred_check
          %p178 = pneg %p59
        $region18: #{transformer_layer.5} parent=15 // pred_check_branch
          %180 = sbr.rel (%p178) target = $region20
        $region19: #{transformer_layer.5} parent=15 // pred_region
          %s181 = sand.u32 %s49, 1
          %s182 = sand.u32 %s49, 1
          %s183 = smul.addr %s182, 16
          %s184 = scalar_lea.vmem [#allocation5], %s183
          %s185 = smul.u32 2, %s18
          %s186 = smul.addr %s185, 6
          %s187 = sadd.s32 %s17, %s186
          %s188 = smul.addr %s16, 12
          %s189 = sadd.s32 %s187, %s188
          %s190 = smul.addr %s189, 8
          %s191 = scalar_lea.vmem %s0, %s190
          // Predicated region
          $region21: #{transformer_layer.5} parent=19 // pred_check
            _
          $region22: #{transformer_layer.5} parent=19 // pred_check_branch
            %193 = sbr.rel (0) target = $region24
          $region23: #{transformer_layer.5} parent=19 // pred_region
            // Predicated region
            $region25: #{transformer_layer.5} parent=23 // pred_check
              _
            $region26: #{transformer_layer.5} parent=23 // pred_check_branch
              %195 = sbr.rel (0) target = $region28
            $region27: #{transformer_layer.5} parent=23 // pred_region
              // Predicated region
              $region40: #{transformer_layer.5} parent=27 // pred_check
                _
              $region41: #{transformer_layer.5} parent=27 // pred_check_branch
                %212 = sbr.rel (0) target = $region43
              $region42: #{transformer_layer.5} parent=27 // pred_region
                loop: start=0, step=1, limit=1
                $region44: #{transformer_layer.5} parent=42 // loop_pre_header
                  _
                $region45: #{transformer_layer.5} parent=42 // loop_header
                  %s214 = sphi 0, %s218
                  %p215 = scmp.ge.s32.totalorder %s214, 1
                  %s219 = sphi %s191, %s191
                  %s220 = sphi %s184, %s184
                $region46: #{transformer_layer.5} parent=42 // loop_header_branch
                  %217 = sbr.rel (%p215) target = $region50
                $region47: #{transformer_layer.5} parent=42 // loop_body
                  %v221 = vld [vmem:[%s219] sm:$0xff]
                  %222 = vst [vmem:[%s220] sm:$0xff] %v221
                  %v223 = vld [vmem:[%s219 + $0x30] sm:$0xff]
                  %224 = vst [vmem:[%s220 + $0x8] sm:$0xff] %v223
                $region48: #{transformer_layer.5} parent=42 // loop_footer
                  %s218 = sadd.s32 1, %s214
                $region49: #{transformer_layer.5} parent=42 // loop_footer_branch
                  %213 = sbr.rel target = $region45
                $region50: #{transformer_layer.5} parent=42 // loop_exit
                  _
              $region43: #{transformer_layer.5} parent=27 // pred_fallthru
                _
              // Predicated region
              $region51: #{transformer_layer.5} parent=27 // pred_check
                _
              $region52: #{transformer_layer.5} parent=27 // pred_check_branch
                %226 = sbr.rel target = $region54
              $region53: #{transformer_layer.5} parent=27 // pred_region
                _
              $region54: #{transformer_layer.5} parent=27 // pred_fallthru
                _
            $region28: #{transformer_layer.5} parent=23 // pred_fallthru
              _
            // Predicated region
            $region29: #{transformer_layer.5} parent=23 // pred_check
              _
            $region30: #{transformer_layer.5} parent=23 // pred_check_branch
              %197 = sbr.rel target = $region32
            $region31: #{transformer_layer.5} parent=23 // pred_region
              loop: start=0, step=1, limit=1
              $region33: #{transformer_layer.5} parent=31 // loop_pre_header
                _
              $region34: #{transformer_layer.5} parent=31 // loop_header
                %s200 = sphi 0, %s204
                %p201 = scmp.ge.s32.totalorder %s200, 1
                %s205 = sphi %s191, %s191
                %s206 = sphi %s184, %s184
              $region35: #{transformer_layer.5} parent=31 // loop_header_branch
                %203 = sbr.rel (%p201) target = $region39
              $region36: #{transformer_layer.5} parent=31 // loop_body
                %v207 = vld [vmem:[%s205] sm:$0xff]
                %208 = vst [vmem:[%s206] sm:$0xff] %v207
                %v209 = vld [vmem:[%s205 + $0x30] sm:$0xff]
                %210 = vst [vmem:[%s206 + $0x8] sm:$0xff] %v209
              $region37: #{transformer_layer.5} parent=31 // loop_footer
                %s204 = sadd.s32 1, %s200
              $region38: #{transformer_layer.5} parent=31 // loop_footer_branch
                %199 = sbr.rel target = $region34
              $region39: #{transformer_layer.5} parent=31 // loop_exit
                _
            $region32: #{transformer_layer.5} parent=23 // pred_fallthru
              _
          $region24: #{transformer_layer.5} parent=19 // pred_fallthru
            _
          %227 = vnop
        $region20: #{transformer_layer.5} parent=15 // pred_fallthru
          _
        // Predicated region
        $region55: #{transformer_layer.5} parent=15 // pred_check
          %p228 = pneg %p91
        $region56: #{transformer_layer.5} parent=15 // pred_check_branch
          %230 = sbr.rel (%p228) target = $region58
        $region57: #{transformer_layer.5} parent=15 // pred_region
          %s231 = sand.u32 %s81, 1
          %s232 = sand.u32 %s81, 1
          %s233 = smul.addr %s232, 16
          %s234 = scalar_lea.vmem [#allocation6], %s233
          %s235 = sadd.s32 %s17, 2
          %s236 = smul.u32 2, %s19
          %s237 = smul.addr %s236, 6
          %s238 = sadd.s32 %s235, %s237
          %s239 = smul.addr %s16, 12
          %s240 = sadd.s32 %s238, %s239
          %s241 = smul.addr %s240, 8
          %s242 = scalar_lea.vmem %s1, %s241
          // Predicated region
          $region59: #{transformer_layer.5} parent=57 // pred_check
            _
          $region60: #{transformer_layer.5} parent=57 // pred_check_branch
            %244 = sbr.rel (0) target = $region62
          $region61: #{transformer_layer.5} parent=57 // pred_region
            // Predicated region
            $region63: #{transformer_layer.5} parent=61 // pred_check
              _
            $region64: #{transformer_layer.5} parent=61 // pred_check_branch
              %246 = sbr.rel (0) target = $region66
            $region65: #{transformer_layer.5} parent=61 // pred_region
              // Predicated region
              $region78: #{transformer_layer.5} parent=65 // pred_check
                _
              $region79: #{transformer_layer.5} parent=65 // pred_check_branch
                %263 = sbr.rel (0) target = $region81
              $region80: #{transformer_layer.5} parent=65 // pred_region
                loop: start=0, step=1, limit=1
                $region82: #{transformer_layer.5} parent=80 // loop_pre_header
                  _
                $region83: #{transformer_layer.5} parent=80 // loop_header
                  %s265 = sphi 0, %s269
                  %p266 = scmp.ge.s32.totalorder %s265, 1
                  %s270 = sphi %s242, %s242
                  %s271 = sphi %s234, %s234
                $region84: #{transformer_layer.5} parent=80 // loop_header_branch
                  %268 = sbr.rel (%p266) target = $region88
                $region85: #{transformer_layer.5} parent=80 // loop_body
                  %v272 = vld [vmem:[%s270] sm:$0xff]
                  %273 = vst [vmem:[%s271] sm:$0xff] %v272
                  %v274 = vld [vmem:[%s270 + $0x30] sm:$0xff]
                  %275 = vst [vmem:[%s271 + $0x8] sm:$0xff] %v274
                $region86: #{transformer_layer.5} parent=80 // loop_footer
                  %s269 = sadd.s32 1, %s265
                $region87: #{transformer_layer.5} parent=80 // loop_footer_branch
                  %264 = sbr.rel target = $region83
                $region88: #{transformer_layer.5} parent=80 // loop_exit
                  _
              $region81: #{transformer_layer.5} parent=65 // pred_fallthru
                _
              // Predicated region
              $region89: #{transformer_layer.5} parent=65 // pred_check
                _
              $region90: #{transformer_layer.5} parent=65 // pred_check_branch
                %277 = sbr.rel target = $region92
              $region91: #{transformer_layer.5} parent=65 // pred_region
                _
              $region92: #{transformer_layer.5} parent=65 // pred_fallthru
                _
            $region66: #{transformer_layer.5} parent=61 // pred_fallthru
              _
            // Predicated region
            $region67: #{transformer_layer.5} parent=61 // pred_check
              _
            $region68: #{transformer_layer.5} parent=61 // pred_check_branch
              %248 = sbr.rel target = $region70
            $region69: #{transformer_layer.5} parent=61 // pred_region
              loop: start=0, step=1, limit=1
              $region71: #{transformer_layer.5} parent=69 // loop_pre_header
                _
              $region72: #{transformer_layer.5} parent=69 // loop_header
                %s251 = sphi 0, %s255
                %p252 = scmp.ge.s32.totalorder %s251, 1
                %s256 = sphi %s242, %s242
                %s257 = sphi %s234, %s234
              $region73: #{transformer_layer.5} parent=69 // loop_header_branch
                %254 = sbr.rel (%p252) target = $region77
              $region74: #{transformer_layer.5} parent=69 // loop_body
                %v258 = vld [vmem:[%s256] sm:$0xff]
                %259 = vst [vmem:[%s257] sm:$0xff] %v258
                %v260 = vld [vmem:[%s256 + $0x30] sm:$0xff]
                %261 = vst [vmem:[%s257 + $0x8] sm:$0xff] %v260
              $region75: #{transformer_layer.5} parent=69 // loop_footer
                %s255 = sadd.s32 1, %s251
              $region76: #{transformer_layer.5} parent=69 // loop_footer_branch
                %250 = sbr.rel target = $region72
              $region77: #{transformer_layer.5} parent=69 // loop_exit
                _
            $region70: #{transformer_layer.5} parent=61 // pred_fallthru
              _
          $region62: #{transformer_layer.5} parent=57 // pred_fallthru
            _
          %278 = vnop
        $region58: #{transformer_layer.5} parent=15 // pred_fallthru
          _
        // Predicated region
        $region93: #{transformer_layer.5} parent=15 // pred_check
          %p279 = pneg %p123
        $region94: #{transformer_layer.5} parent=15 // pred_check_branch
          %281 = sbr.rel (%p279) target = $region96
        $region95: #{transformer_layer.5} parent=15 // pred_region
          %s282 = sand.u32 %s113, 1
          %s283 = sand.u32 %s113, 1
          %s284 = smul.addr %s283, 16
          %s285 = scalar_lea.vmem [#allocation7], %s284
          %s286 = sadd.s32 %s17, 4
          %s287 = smul.u32 2, %s19
          %s288 = smul.addr %s287, 6
          %s289 = sadd.s32 %s286, %s288
          %s290 = smul.addr %s16, 12
          %s291 = sadd.s32 %s289, %s290
          %s292 = smul.addr %s291, 8
          %s293 = scalar_lea.vmem %s2, %s292
          // Predicated region
          $region97: #{transformer_layer.5} parent=95 // pred_check
            _
          $region98: #{transformer_layer.5} parent=95 // pred_check_branch
            %295 = sbr.rel (0) target = $region100
          $region99: #{transformer_layer.5} parent=95 // pred_region
            // Predicated region
            $region101: #{transformer_layer.5} parent=99 // pred_check
              _
            $region102: #{transformer_layer.5} parent=99 // pred_check_branch
              %297 = sbr.rel (0) target = $region104
            $region103: #{transformer_layer.5} parent=99 // pred_region
              // Predicated region
              $region116: #{transformer_layer.5} parent=103 // pred_check
                _
              $region117: #{transformer_layer.5} parent=103 // pred_check_branch
                %314 = sbr.rel (0) target = $region119
              $region118: #{transformer_layer.5} parent=103 // pred_region
                loop: start=0, step=1, limit=1
                $region120: #{transformer_layer.5} parent=118 // loop_pre_header
                  _
                $region121: #{transformer_layer.5} parent=118 // loop_header
                  %s316 = sphi 0, %s320
                  %p317 = scmp.ge.s32.totalorder %s316, 1
                  %s321 = sphi %s293, %s293
                  %s322 = sphi %s285, %s285
                $region122: #{transformer_layer.5} parent=118 // loop_header_branch
                  %319 = sbr.rel (%p317) target = $region126
                $region123: #{transformer_layer.5} parent=118 // loop_body
                  %v323 = vld [vmem:[%s321] sm:$0xff]
                  %324 = vst [vmem:[%s322] sm:$0xff] %v323
                  %v325 = vld [vmem:[%s321 + $0x30] sm:$0xff]
                  %326 = vst [vmem:[%s322 + $0x8] sm:$0xff] %v325
                $region124: #{transformer_layer.5} parent=118 // loop_footer
                  %s320 = sadd.s32 1, %s316
                $region125: #{transformer_layer.5} parent=118 // loop_footer_branch
                  %315 = sbr.rel target = $region121
                $region126: #{transformer_layer.5} parent=118 // loop_exit
                  _
              $region119: #{transformer_layer.5} parent=103 // pred_fallthru
                _
              // Predicated region
              $region127: #{transformer_layer.5} parent=103 // pred_check
                _
              $region128: #{transformer_layer.5} parent=103 // pred_check_branch
                %328 = sbr.rel target = $region130
              $region129: #{transformer_layer.5} parent=103 // pred_region
                _
              $region130: #{transformer_layer.5} parent=103 // pred_fallthru
                _
            $region104: #{transformer_layer.5} parent=99 // pred_fallthru
              _
            // Predicated region
            $region105: #{transformer_layer.5} parent=99 // pred_check
              _
            $region106: #{transformer_layer.5} parent=99 // pred_check_branch
              %299 = sbr.rel target = $region108
            $region107: #{transformer_layer.5} parent=99 // pred_region
              loop: start=0, step=1, limit=1
              $region109: #{transformer_layer.5} parent=107 // loop_pre_header
                _
              $region110: #{transformer_layer.5} parent=107 // loop_header
                %s302 = sphi 0, %s306
                %p303 = scmp.ge.s32.totalorder %s302, 1
                %s307 = sphi %s293, %s293
                %s308 = sphi %s285, %s285
              $region111: #{transformer_layer.5} parent=107 // loop_header_branch
                %305 = sbr.rel (%p303) target = $region115
              $region112: #{transformer_layer.5} parent=107 // loop_body
                %v309 = vld [vmem:[%s307] sm:$0xff]
                %310 = vst [vmem:[%s308] sm:$0xff] %v309
                %v311 = vld [vmem:[%s307 + $0x30] sm:$0xff]
                %312 = vst [vmem:[%s308 + $0x8] sm:$0xff] %v311
              $region113: #{transformer_layer.5} parent=107 // loop_footer
                %s306 = sadd.s32 1, %s302
              $region114: #{transformer_layer.5} parent=107 // loop_footer_branch
                %301 = sbr.rel target = $region110
              $region115: #{transformer_layer.5} parent=107 // loop_exit
                _
            $region108: #{transformer_layer.5} parent=99 // pred_fallthru
              _
          $region100: #{transformer_layer.5} parent=95 // pred_fallthru
            _
          %329 = vnop
        $region96: #{transformer_layer.5} parent=15 // pred_fallthru
          _
      $region16: #{transformer_layer.5} parent=5 // pred_fallthru
        _
      %p330 = scmp.le.s32.totalorder 1, %s9
      %p331 = scmp.lt.s32.totalorder %s9, 5
      %p332 = pnand %p330, %p331
      %p333 = pneg %p332
      // Predicated region
      $region131: #{transformer_layer.5} parent=5 // pred_check
        _
      $region132: #{transformer_layer.5} parent=5 // pred_check_branch
        %335 = sbr.rel (%p332) target = $region134
      $region133: #{transformer_layer.5} parent=5 // pred_region
        %s336 = ssub.s32 %s9, 1
        %s337 = sand.u32 %s52, 1
        %s338 = sand.u32 %s52, 1
        %s339 = smul.addr %s338, 16
        %s340 = scalar_lea.vmem [#allocation5], %s339
        // Predicated region
        $region135: #{transformer_layer.5} parent=133 // pred_check
          %p341 = pneg %p65
        $region136: #{transformer_layer.5} parent=133 // pred_check_branch
          %343 = sbr.rel (%p341) target = $region138
        $region137: #{transformer_layer.5} parent=133 // pred_region
          _
        $region138: #{transformer_layer.5} parent=133 // pred_fallthru
          _
        %s344 = sand.u32 %s84, 1
        %s345 = sand.u32 %s84, 1
        %s346 = smul.addr %s345, 16
        %s347 = scalar_lea.vmem [#allocation6], %s346
        // Predicated region
        $region139: #{transformer_layer.5} parent=133 // pred_check
          %p348 = pneg %p97
        $region140: #{transformer_layer.5} parent=133 // pred_check_branch
          %350 = sbr.rel (%p348) target = $region142
        $region141: #{transformer_layer.5} parent=133 // pred_region
          _
        $region142: #{transformer_layer.5} parent=133 // pred_fallthru
          _
        %s351 = sand.u32 %s116, 1
        %s352 = sand.u32 %s116, 1
        %s353 = smul.addr %s352, 16
        %s354 = scalar_lea.vmem [#allocation7], %s353
        // Predicated region
        $region143: #{transformer_layer.5} parent=133 // pred_check
          %p355 = pneg %p129
        $region144: #{transformer_layer.5} parent=133 // pred_check_branch
          %357 = sbr.rel (%p355) target = $region146
        $region145: #{transformer_layer.5} parent=133 // pred_region
          _
        $region146: #{transformer_layer.5} parent=133 // pred_fallthru
          _
        %s358 = sand.u32 %s52, 1
        %s359 = sand.u32 %s52, 1
        %s360 = smul.addr %s359, 16
        %s361 = scalar_lea.vmem [#allocation5], %s360
        %p362 = pneg %p65
        %p363 = pneg %p62
        %s364 = sand.u32 %s84, 1
        %s365 = sand.u32 %s84, 1
        %s366 = smul.addr %s365, 16
        %s367 = scalar_lea.vmem [#allocation6], %s366
        %p368 = pneg %p97
        %p369 = pneg %p94
        %s370 = sand.u32 %s116, 1
        %s371 = sand.u32 %s116, 1
        %s372 = smul.addr %s371, 16
        %s373 = scalar_lea.vmem [#allocation7], %s372
        %p374 = pneg %p129
        %p375 = pneg %p126
        %p376 = pneg %p159
        %p377 = pneg %p156
        %s378 = sand.u32 %s146, 1
        %s379 = sand.u32 %s146, 1
        %s380 = smul.addr %s379, 16
        %s381 = scalar_lea.vmem [#allocation8], %s380
        %s382 = smul.u32 2, %s22
        %s383 = sadd.s32 %s21, 2
        %s384 = smul.u32 2, %s23
        %s385 = sadd.s32 %s21, 4
        %s386 = smul.u32 2, %s23
        %s387 = smul.u32 2, %s22
        %p388 = scmp.eq.s32.totalorder %s23, 0
        // Predicated region
        $region147: #{transformer_layer.5} parent=133 // pred_check
          %p389 = pneg %p388
        $region148: #{transformer_layer.5} parent=133 // pred_check_branch
          %391 = sbr.rel (%p389) target = $region150
        $region149: #{transformer_layer.5} parent=133 // pred_region
          %vm392 = vcmask 7168
          %393 = vst.msk [vmem:[#allocation2] sm:$0xff] %vm392, -inf
          %394 = vst.msk [vmem:[#allocation2 + $0x8] sm:$0xff] %vm392, -inf
          %395 = vst.msk [vmem:[#allocation3] sm:$0xff] %vm392, 0.0
          %396 = vst.msk [vmem:[#allocation3 + $0x8] sm:$0xff] %vm392, 0.0
          %397 = vst [vmem:[#allocation4] sm:$0xff] 0.0
          %398 = vst [vmem:[#allocation4 + $0x8] sm:$0xff] 0.0
        $region150: #{transformer_layer.5} parent=133 // pred_fallthru
          _
        %v399 = vld [vmem:[%s340] sm:$0xff]
        %v400 = vld [vmem:[%s340 + $0x8] sm:$0xff]
        %v401 = vld [vmem:[%s347] sm:$0xff]
        %v402 = vld [vmem:[%s347 + $0x8] sm:$0xff]
        %403 = vmatprep.subr.mxu0 0.0
        %404 = vmatpush1.xpose.msra.mxu0 %v401
        %405 = vmatprep.subr.mxu0 0.0
        %406 = vmatpush1.xpose.msra.mxu0 %v402
        %407 = vmatprep.subr.mxu0 0.0
        %408 = vmatpush1.xpose.msra.mxu0 0.0
        %409 = vmatprep.subr.mxu0 0.0
        %410 = vmatpush1.xpose.msra.mxu0 0.0
        %411 = vmatprep.subr.mxu0 0.0
        %412 = vmatpush1.xpose.msra.mxu0 0.0
        %413 = vmatprep.subr.mxu0 0.0
        %414 = vmatpush1.xpose.msra.mxu0 0.0
        %415 = vmatprep.subr.mxu0 0.0
        %416 = vmatpush1.xpose.msra.mxu0 0.0
        %417 = vmatprep.subr.mxu0 0.0
        %418 = vmatpush1.xpose.msra.mxu0 0.0
        %419 = vmatprep.subr.mxu0 0.0
        %420 = vmatpush1.xpose.msra.mxu0 0.0
        %421 = vmatprep.subr.mxu0 0.0
        %422 = vmatpush1.xpose.msra.mxu0 0.0
        %423 = vmatprep.subr.mxu0 0.0
        %424 = vmatpush1.xpose.msra.mxu0 0.0
        %425 = vmatprep.subr.mxu0 0.0
        %426 = vmatpush1.xpose.msra.mxu0 0.0
        %427 = vmatprep.subr.mxu0 0.0
        %428 = vmatpush1.xpose.msra.mxu0 0.0
        %429 = vmatprep.subr.mxu0 0.0
        %430 = vmatpush1.xpose.msra.mxu0 0.0
        %431 = vmatprep.subr.mxu0 0.0
        %432 = vmatpush1.xpose.msra.mxu0 0.0
        %433 = vmatprep.subr.mxu0 0.0
        %434 = vmatpush1.xpose.msra.mxu0 0.0
        %435 = vmatprep.subr.mxu0 0.0
        %436 = vmatpush1.xpose.msra.mxu0 0.0
        %437 = vmatprep.subr.mxu0 0.0
        %438 = vmatpush1.xpose.msra.mxu0 0.0
        %439 = vmatprep.subr.mxu0 0.0
        %440 = vmatpush1.xpose.msra.mxu0 0.0
        %441 = vmatprep.subr.mxu0 0.0
        %442 = vmatpush1.xpose.msra.mxu0 0.0
        %443 = vmatprep.subr.mxu0 0.0
        %444 = vmatpush1.xpose.msra.mxu0 0.0
        %445 = vmatprep.subr.mxu0 0.0
        %446 = vmatpush1.xpose.msra.mxu0 0.0
        %447 = vmatprep.subr.mxu0 0.0
        %448 = vmatpush1.xpose.msra.mxu0 0.0
        %449 = vmatprep.subr.mxu0 0.0
        %450 = vmatpush1.xpose.msra.mxu0 0.0
        %451 = vmatprep.subr.mxu0 0.0
        %452 = vmatpush1.xpose.msra.mxu0 0.0
        %453 = vmatprep.subr.mxu0 0.0
        %454 = vmatpush1.xpose.msra.mxu0 0.0
        %455 = vmatprep.subr.mxu0 0.0
        %456 = vmatpush1.xpose.msra.mxu0 0.0
        %457 = vmatprep.subr.mxu0 0.0
        %458 = vmatpush1.xpose.msra.mxu0 0.0
        %459 = vmatprep.subr.mxu0 0.0
        %460 = vmatpush1.xpose.msra.mxu0 0.0
        %461 = vmatprep.subr.mxu0 0.0
        %462 = vmatpush1.xpose.msra.mxu0 0.0
        %463 = vmatprep.subr.mxu0 0.0
        %464 = vmatpush1.xpose.msra.mxu0 0.0
        %465 = vmatprep.subr.mxu0 0.0
        %466 = vmatpush1.xpose.msra.mxu0 0.0
        %467 = vmatprep.mubr.f32.mxu0 0.0
        %468 = vmatmul.mubr.f32.gmra.mrb[0].mxu0 %v399
        %v469 = vpop.f32.mrb[0].mxu0
        %v470 = vadd.f32 0.0, %v469
        %v471 = vpop.f32.mrb[0].mxu0
        %472 = vmatprep.mubr.f32.mxu0 0.0
        %473 = vmatmul.mubr.f32.gmra.mrb[0].mxu0 %v400
        %v474 = vpop.f32.mrb[0].mxu0
        %v475 = vadd.f32 0.0, %v474
        %v476 = vpop.f32.mrb[0].mxu0
        %477 = vdwg.mxu0
        %v478 = vld [vmem:[#allocation2] sm:$0xff]
        %v479 = vld [vmem:[#allocation2 + $0x8] sm:$0xff]
        %vm480 = vcmask 130048
        %v481 = vsel %vm480, %v470, -inf
        %482 = vmax.xlane.f32.xlu0 %v481
        %v483 = vpop.xlane.xlu0 %482
        %v484 = vsel %vm480, %v475, -inf
        %485 = vmax.xlane.f32.xlu0 %v484
        %v486 = vpop.xlane.xlu0 %485
        %v487 = vmax.f32 %v478, %v483
        %v488 = vmax.f32 %v479, %v486
        %v489 = vsub.f32 %v478, %v487
        %v490 = vsub.f32 %v479, %v488
        %v491 = vmul.f32 %v489, 1.442695
        %v492 = vpow.pop %v491
        %v493 = vmul.f32 %v490, 1.442695
        %v494 = vpow.pop %v493
        %496 = vset.pattern.permute.xlu0 0
        %497 = vperm.xlu0 %496, %v487
        %v498 = vpop.permute.xlu0 %497
        %501 = vset.pattern.permute.xlu0 0
        %502 = vperm.xlu0 %501, %v488
        %v503 = vpop.permute.xlu0 %502
        %v505 = vsub.f32 %v470, %v498
        %v506 = vsub.f32 %v475, %v503
        %v507 = vmul.f32 %v505, 1.442695
        %v508 = vpow.pop %v507
        %v509 = vmul.f32 %v506, 1.442695
        %v510 = vpow.pop %v509
        %v511 = vld [vmem:[#allocation3] sm:$0xff]
        %v512 = vld [vmem:[#allocation3 + $0x8] sm:$0xff]
        %v513 = vmul.f32 %v492, %v511
        %v514 = vmul.f32 %v494, %v512
        %v515 = vsel %vm480, %v508, 0.0
        %516 = vadd.xlane.f32.xlu0 %v515
        %v517 = vpop.xlane.xlu0 %516
        %v518 = vsel %vm480, %v510, 0.0
        %519 = vadd.xlane.f32.xlu0 %v518
        %v520 = vpop.xlane.xlu0 %519
        %v521 = vadd.f32 %v513, %v517
        %v522 = vadd.f32 %v514, %v520
        %vm523 = vcmask 7168
        %524 = vst.msk [vmem:[#allocation3] sm:$0xff] %vm523, %v521
        %525 = vst.msk [vmem:[#allocation3 + $0x8] sm:$0xff] %vm523, %v522
        %v526 = vld [vmem:[#allocation4] sm:$0xff]
        %v527 = vld [vmem:[#allocation4 + $0x8] sm:$0xff]
        %529 = vset.pattern.permute.xlu0 0
        %530 = vperm.xlu0 %529, %v492
        %v531 = vpop.permute.xlu0 %530
        %534 = vset.pattern.permute.xlu0 0
        %535 = vperm.xlu0 %534, %v494
        %v536 = vpop.permute.xlu0 %535
        %v538 = vmul.f32 %v531, %v526
        %v539 = vmul.f32 %v536, %v527
        %v540 = vld [vmem:[%s354] sm:$0xff]
        %v541 = vld [vmem:[%s354 + $0x8] sm:$0xff]
        %v543 = vsel %vm480, %v508, 0
        %v546 = vsel %vm480, %v510, 0
        %548 = vmatprep.subr.mxu0 0.0
        %549 = vmatpush1.msra.mxu0 %v540
        %550 = vmatprep.subr.mxu0 0.0
        %551 = vmatpush1.msra.mxu0 %v541
        %552 = vmatprep.subr.mxu0 0.0
        %553 = vmatpush1.msra.mxu0 0.0
        %554 = vmatprep.subr.mxu0 0.0
        %555 = vmatpush1.msra.mxu0 0.0
        %556 = vmatprep.subr.mxu0 0.0
        %557 = vmatpush1.msra.mxu0 0.0
        %558 = vmatprep.subr.mxu0 0.0
        %559 = vmatpush1.msra.mxu0 0.0
        %560 = vmatprep.subr.mxu0 0.0
        %561 = vmatpush1.msra.mxu0 0.0
        %562 = vmatprep.subr.mxu0 0.0
        %563 = vmatpush1.msra.mxu0 0.0
        %564 = vmatprep.subr.mxu0 0.0
        %565 = vmatpush1.msra.mxu0 0.0
        %566 = vmatprep.subr.mxu0 0.0
        %567 = vmatpush1.msra.mxu0 0.0
        %568 = vmatprep.subr.mxu0 0.0
        %569 = vmatpush1.msra.mxu0 0.0
        %570 = vmatprep.subr.mxu0 0.0
        %571 = vmatpush1.msra.mxu0 0.0
        %572 = vmatprep.subr.mxu0 0.0
        %573 = vmatpush1.msra.mxu0 0.0
        %574 = vmatprep.subr.mxu0 0.0
        %575 = vmatpush1.msra.mxu0 0.0
        %576 = vmatprep.subr.mxu0 0.0
        %577 = vmatpush1.msra.mxu0 0.0
        %578 = vmatprep.subr.mxu0 0.0
        %579 = vmatpush1.msra.mxu0 0.0
        %580 = vmatprep.subr.mxu0 0.0
        %581 = vmatpush1.msra.mxu0 0.0
        %582 = vmatprep.subr.mxu0 0.0
        %583 = vmatpush1.msra.mxu0 0.0
        %584 = vmatprep.subr.mxu0 0.0
        %585 = vmatpush1.msra.mxu0 0.0
        %586 = vmatprep.subr.mxu0 0.0
        %587 = vmatpush1.msra.mxu0 0.0
        %588 = vmatprep.subr.mxu0 0.0
        %589 = vmatpush1.msra.mxu0 0.0
        %590 = vmatprep.subr.mxu0 0.0
        %591 = vmatpush1.msra.mxu0 0.0
        %592 = vmatprep.subr.mxu0 0.0
        %593 = vmatpush1.msra.mxu0 0.0
        %594 = vmatprep.subr.mxu0 0.0
        %595 = vmatpush1.msra.mxu0 0.0
        %596 = vmatprep.subr.mxu0 0.0
        %597 = vmatpush1.msra.mxu0 0.0
        %598 = vmatprep.subr.mxu0 0.0
        %599 = vmatpush1.msra.mxu0 0.0
        %600 = vmatprep.subr.mxu0 0.0
        %601 = vmatpush1.msra.mxu0 0.0
        %602 = vmatprep.subr.mxu0 0.0
        %603 = vmatpush1.msra.mxu0 0.0
        %604 = vmatprep.subr.mxu0 0.0
        %605 = vmatpush1.msra.mxu0 0.0
        %606 = vmatprep.subr.mxu0 0.0
        %607 = vmatpush1.msra.mxu0 0.0
        %608 = vmatprep.subr.mxu0 0.0
        %609 = vmatpush1.msra.mxu0 0.0
        %610 = vmatprep.subr.mxu0 0.0
        %611 = vmatpush1.msra.mxu0 0.0
        %612 = vmatprep.mubr.f32.mxu0 0.0
        %613 = vmatmul.mubr.f32.gmra.mrb[0].mxu0 %v543
        %v614 = vpop.f32.mrb[0].mxu0
        %v615 = vadd.f32 0.0, %v614
        %v616 = vpop.f32.mrb[0].mxu0
        %617 = vmatprep.mubr.f32.mxu0 0.0
        %618 = vmatmul.mubr.f32.gmra.mrb[0].mxu0 %v546
        %v619 = vpop.f32.mrb[0].mxu0
        %v620 = vadd.f32 0.0, %v619
        %v621 = vpop.f32.mrb[0].mxu0
        %622 = vdwg.mxu0
        %v623 = vadd.f32 %v538, %v615
        %v624 = vadd.f32 %v539, %v620
        %625 = vst [vmem:[#allocation4] sm:$0xff] %v623
        %626 = vst [vmem:[#allocation4 + $0x8] sm:$0xff] %v624
        %627 = vst.msk [vmem:[#allocation2] sm:$0xff] %vm523, %v487
        %628 = vst.msk [vmem:[#allocation2 + $0x8] sm:$0xff] %vm523, %v488
        // Predicated region
        $region151: #{transformer_layer.5} parent=133 // pred_check
          %p629 = pneg %p388
        $region152: #{transformer_layer.5} parent=133 // pred_check_branch
          %631 = sbr.rel (%p629) target = $region154
        $region153: #{transformer_layer.5} parent=133 // pred_region
          %v632 = vld [vmem:[#allocation3] sm:$0xff]
          %v633 = vld [vmem:[#allocation3 + $0x8] sm:$0xff]
          %v634 = vrcp.pop %v632
          %v635 = vrcp.pop %v633
          %v636 = vld [vmem:[#allocation4] sm:$0xff]
          %v637 = vld [vmem:[#allocation4 + $0x8] sm:$0xff]
          %639 = vset.pattern.permute.xlu0 0
          %640 = vperm.xlu0 %639, %v634
          %v641 = vpop.permute.xlu0 %640
          %644 = vset.pattern.permute.xlu0 0
          %645 = vperm.xlu0 %644, %v635
          %v646 = vpop.permute.xlu0 %645
          %v648 = vmul.f32 %v636, %v641
          %v649 = vmul.f32 %v637, %v646
          %650 = vst [vmem:[%s381] sm:$0xff] %v648
          %651 = vst [vmem:[%s381 + $0x8] sm:$0xff] %v649
        $region154: #{transformer_layer.5} parent=133 // pred_fallthru
          _
        %s652 = sand.u32 %s146, 1
        %s653 = sand.u32 %s146, 1
        %s654 = smul.addr %s653, 16
        %s655 = scalar_lea.vmem [#allocation8], %s654
        // Predicated region
        $region155: #{transformer_layer.5} parent=133 // pred_check
          %p656 = pneg %p156
        $region156: #{transformer_layer.5} parent=133 // pred_check_branch
          %658 = sbr.rel (%p656) target = $region158
        $region157: #{transformer_layer.5} parent=133 // pred_region
          %s659 = smul.u32 2, %s22
          %s660 = smul.addr %s659, 2
          %s661 = sadd.s32 %s21, %s660
          %s662 = smul.addr %s20, 4
          %s663 = sadd.s32 %s661, %s662
          %s664 = smul.addr %s663, 8
          %s665 = scalar_lea.vmem %s3, %s664
          // Predicated region
          $region159: #{transformer_layer.5} parent=157 // pred_check
            _
          $region160: #{transformer_layer.5} parent=157 // pred_check_branch
            %667 = sbr.rel (0) target = $region162
          $region161: #{transformer_layer.5} parent=157 // pred_region
            // Predicated region
            $region163: #{transformer_layer.5} parent=161 // pred_check
              _
            $region164: #{transformer_layer.5} parent=161 // pred_check_branch
              %669 = sbr.rel (0) target = $region166
            $region165: #{transformer_layer.5} parent=161 // pred_region
              // Predicated region
              $region178: #{transformer_layer.5} parent=165 // pred_check
                _
              $region179: #{transformer_layer.5} parent=165 // pred_check_branch
                %686 = sbr.rel (0) target = $region181
              $region180: #{transformer_layer.5} parent=165 // pred_region
                loop: start=0, step=1, limit=1
                $region182: #{transformer_layer.5} parent=180 // loop_pre_header
                  _
                $region183: #{transformer_layer.5} parent=180 // loop_header
                  %s688 = sphi 0, %s692
                  %p689 = scmp.ge.s32.totalorder %s688, 1
                  %s693 = sphi %s655, %s655
                  %s694 = sphi %s665, %s665
                $region184: #{transformer_layer.5} parent=180 // loop_header_branch
                  %691 = sbr.rel (%p689) target = $region188
                $region185: #{transformer_layer.5} parent=180 // loop_body
                  %v695 = vld [vmem:[%s693] sm:$0xff]
                  %696 = vst [vmem:[%s694] sm:$0xff] %v695
                  %v697 = vld [vmem:[%s693 + $0x8] sm:$0xff]
                  %698 = vst [vmem:[%s694 + $0x10] sm:$0xff] %v697
                $region186: #{transformer_layer.5} parent=180 // loop_footer
                  %s692 = sadd.s32 1, %s688
                $region187: #{transformer_layer.5} parent=180 // loop_footer_branch
                  %687 = sbr.rel target = $region183
                $region188: #{transformer_layer.5} parent=180 // loop_exit
                  _
              $region181: #{transformer_layer.5} parent=165 // pred_fallthru
                _
              // Predicated region
              $region189: #{transformer_layer.5} parent=165 // pred_check
                _
              $region190: #{transformer_layer.5} parent=165 // pred_check_branch
                %700 = sbr.rel target = $region192
              $region191: #{transformer_layer.5} parent=165 // pred_region
                _
              $region192: #{transformer_layer.5} parent=165 // pred_fallthru
                _
            $region166: #{transformer_layer.5} parent=161 // pred_fallthru
              _
            // Predicated region
            $region167: #{transformer_layer.5} parent=161 // pred_check
              _
            $region168: #{transformer_layer.5} parent=161 // pred_check_branch
              %671 = sbr.rel target = $region170
            $region169: #{transformer_layer.5} parent=161 // pred_region
              loop: start=0, step=1, limit=1
              $region171: #{transformer_layer.5} parent=169 // loop_pre_header
                _
              $region172: #{transformer_layer.5} parent=169 // loop_header
                %s674 = sphi 0, %s678
                %p675 = scmp.ge.s32.totalorder %s674, 1
                %s679 = sphi %s655, %s655
                %s680 = sphi %s665, %s665
              $region173: #{transformer_layer.5} parent=169 // loop_header_branch
                %677 = sbr.rel (%p675) target = $region177
              $region174: #{transformer_layer.5} parent=169 // loop_body
                %v681 = vld [vmem:[%s679] sm:$0xff]
                %682 = vst [vmem:[%s680] sm:$0xff] %v681
                %v683 = vld [vmem:[%s679 + $0x8] sm:$0xff]
                %684 = vst [vmem:[%s680 + $0x10] sm:$0xff] %v683
              $region175: #{transformer_layer.5} parent=169 // loop_footer
                %s678 = sadd.s32 1, %s674
              $region176: #{transformer_layer.5} parent=169 // loop_footer_branch
                %673 = sbr.rel target = $region172
              $region177: #{transformer_layer.5} parent=169 // loop_exit
                _
            $region170: #{transformer_layer.5} parent=161 // pred_fallthru
              _
          $region162: #{transformer_layer.5} parent=157 // pred_fallthru
            _
          %701 = vnop
        $region158: #{transformer_layer.5} parent=133 // pred_fallthru
          _
      $region134: #{transformer_layer.5} parent=5 // pred_fallthru
        _
      %p702 = scmp.le.s32.totalorder 2, %s9
      // Predicated region
      $region193: #{transformer_layer.5} parent=5 // pred_check
        %p703 = pneg %p702
      $region194: #{transformer_layer.5} parent=5 // pred_check_branch
        %705 = sbr.rel (%p703) target = $region196
      $region195: #{transformer_layer.5} parent=5 // pred_region
        %s706 = ssub.s32 %s9, 2
        // Predicated region
        $region197: #{transformer_layer.5} parent=195 // pred_check
          %p707 = pneg %p162
        $region198: #{transformer_layer.5} parent=195 // pred_check_branch
          %709 = sbr.rel (%p707) target = $region200
        $region199: #{transformer_layer.5} parent=195 // pred_region
          %s710 = sand.u32 %s147, 1
          %s711 = sand.u32 %s147, 1
          %s712 = smul.addr %s711, 16
          %s713 = scalar_lea.vmem [#allocation8], %s712
        $region200: #{transformer_layer.5} parent=195 // pred_fallthru
          _
      $region196: #{transformer_layer.5} parent=5 // pred_fallthru
        _
    $region6: #{transformer_layer.5} parent=1 // loop_footer
      %s13 = sadd.s32 1, %s9
    $region7: #{transformer_layer.5} parent=1 // loop_footer_branch
      %8 = sbr.rel target = $region3
    $region8: #{transformer_layer.5} parent=1 // loop_exit
      _

// kernel: transformer_layer.6
$region0: #{transformer_layer.6}
  #allocation0 [shape = 'u32[]', space=smem, size = 0x4, offset = 0x4, fixed_abs, tag = 'smem constant byte address 0x4 - core index']
  #allocation1 [shape = 'u32[144,128]{1,0:T(1,128)}', space=vmem, size = 0x12000, scoped, tag = 'internal scratch']
  #allocation2 [shape = 'f32[32,256]{1,0:T(8,128)}', space=vmem, size = 0x8000, scoped, tag = 'scratch operand']
  %s0 = inlined_call_operand.vmem [shape: f32[32,256], index: 0, kind: input, shape index: {}]
  %s1 = inlined_call_operand.vmem [shape: f32[256,256], index: 1, kind: input, shape index: {}]
  %s2 = inlined_call_operand.vmem [shape: f32[1,256], index: 2, kind: input, shape index: {}]
  %s3 = inlined_call_operand.vmem [shape: f32[32,256], index: 3, kind: input, shape index: {}]
  %s4 = inlined_call_operand.vmem [shape: f32[1,256], index: 4, kind: input, shape index: {}]
  %s5 = inlined_call_operand.vmem [shape: f32[1,256], index: 5, kind: input, shape index: {}]
  %s6 = inlined_call_operand.vmem [shape: f32[32,256], index: 6, kind: output, shape index: {}]
  %s7 = sld [smem:[#allocation0]]
  $region42: #{transformer_layer.6} parent=0
    _
  %s9 = ssub.s32 1, %s7
  %s10 = scalar_select 0, %s9, %s7
  // Predicated region
  $region2: #{transformer_layer.6} parent=0 // pred_check
    _
  $region3: #{transformer_layer.6} parent=0 // pred_check_branch
    %12 = sbr.rel (0) target = $region5
  $region4: #{transformer_layer.6} parent=0 // pred_region
    _
  $region5: #{transformer_layer.6} parent=0 // pred_fallthru
    _
  // Predicated region
  $region6: #{transformer_layer.6} parent=0 // pred_check
    _
  $region7: #{transformer_layer.6} parent=0 // pred_check_branch
    %14 = sbr.rel (0) target = $region9
  $region8: #{transformer_layer.6} parent=0 // pred_region
    _
  $region9: #{transformer_layer.6} parent=0 // pred_fallthru
    _
  // Predicated region
  $region10: #{transformer_layer.6} parent=0 // pred_check
    _
  $region11: #{transformer_layer.6} parent=0 // pred_check_branch
    %16 = sbr.rel (0) target = $region13
  $region12: #{transformer_layer.6} parent=0 // pred_region
    _
  $region13: #{transformer_layer.6} parent=0 // pred_fallthru
    _
  // Predicated region
  $region14: #{transformer_layer.6} parent=0 // pred_check
    _
  $region15: #{transformer_layer.6} parent=0 // pred_check_branch
    %18 = sbr.rel (0) target = $region17
  $region16: #{transformer_layer.6} parent=0 // pred_region
    _
  $region17: #{transformer_layer.6} parent=0 // pred_fallthru
    _
  // Predicated region
  $region18: #{transformer_layer.6} parent=0 // pred_check
    _
  $region19: #{transformer_layer.6} parent=0 // pred_check_branch
    %20 = sbr.rel (0) target = $region21
  $region20: #{transformer_layer.6} parent=0 // pred_region
    _
  $region21: #{transformer_layer.6} parent=0 // pred_fallthru
    _
  // Predicated region
  $region22: #{transformer_layer.6} parent=0 // pred_check
    _
  $region23: #{transformer_layer.6} parent=0 // pred_check_branch
    %22 = sbr.rel (0) target = $region25
  $region24: #{transformer_layer.6} parent=0 // pred_region
    _
  $region25: #{transformer_layer.6} parent=0 // pred_fallthru
    _
  %p23 = scmp.eq.s32.totalorder 0, 0
  // Predicated region
  $region26: #{transformer_layer.6} parent=0 // pred_check
    %p24 = pneg %p23
  $region27: #{transformer_layer.6} parent=0 // pred_check_branch
    %26 = sbr.rel (%p24) target = $region29
  $region28: #{transformer_layer.6} parent=0 // pred_region
    %27 = vst [vmem:[#allocation2] sm:$0xff] 0.0
    %28 = vst [vmem:[#allocation2 + $0x8] sm:$0xff] 0.0
    %29 = vst [vmem:[#allocation2 + $0x10] sm:$0xff] 0.0
    %30 = vst [vmem:[#allocation2 + $0x18] sm:$0xff] 0.0
    %31 = vst [vmem:[#allocation2 + $0x20] sm:$0xff] 0.0
    %32 = vst [vmem:[#allocation2 + $0x28] sm:$0xff] 0.0
    %33 = vst [vmem:[#allocation2 + $0x30] sm:$0xff] 0.0
    %34 = vst [vmem:[#allocation2 + $0x38] sm:$0xff] 0.0
  $region29: #{transformer_layer.6} parent=0 // pred_fallthru
    _
  %v35 = vld [vmem:[#allocation2] sm:$0xff]
  %v36 = vld [vmem:[#allocation2 + $0x8] sm:$0xff]
  %v37 = vld [vmem:[#allocation2 + $0x10] sm:$0xff]
  %v38 = vld [vmem:[#allocation2 + $0x18] sm:$0xff]
  %v39 = vld [vmem:[#allocation2 + $0x20] sm:$0xff]
  %v40 = vld [vmem:[#allocation2 + $0x28] sm:$0xff]
  %v41 = vld [vmem:[#allocation2 + $0x30] sm:$0xff]
  %v42 = vld [vmem:[#allocation2 + $0x38] sm:$0xff]
  %v43 = vld [vmem:[%s0] sm:$0xff]
  %v44 = vld [vmem:[%s0 + $0x8] sm:$0xff]
  %v45 = vld [vmem:[%s0 + $0x10] sm:$0xff]
  %v46 = vld [vmem:[%s0 + $0x18] sm:$0xff]
  %v47 = vld [vmem:[%s0 + $0x20] sm:$0xff]
  %v48 = vld [vmem:[%s0 + $0x28] sm:$0xff]
  %v49 = vld [vmem:[%s0 + $0x30] sm:$0xff]
  %v50 = vld [vmem:[%s0 + $0x38] sm:$0xff]
  %v51 = vld [vmem:[%s1] sm:$0xff]
  %v52 = vld [vmem:[%s1 + $0x8] sm:$0xff]
  %v53 = vld [vmem:[%s1 + $0x10] sm:$0xff]
  %v54 = vld [vmem:[%s1 + $0x18] sm:$0xff]
  %v55 = vld [vmem:[%s1 + $0x20] sm:$0xff]
  %v56 = vld [vmem:[%s1 + $0x28] sm:$0xff]
  %v57 = vld [vmem:[%s1 + $0x30] sm:$0xff]
  %v58 = vld [vmem:[%s1 + $0x38] sm:$0xff]
  %v59 = vld [vmem:[%s1 + $0x40] sm:$0xff]
  %v60 = vld [vmem:[%s1 + $0x48] sm:$0xff]
  %v61 = vld [vmem:[%s1 + $0x50] sm:$0xff]
  %v62 = vld [vmem:[%s1 + $0x58] sm:$0xff]
  %v63 = vld [vmem:[%s1 + $0x60] sm:$0xff]
  %v64 = vld [vmem:[%s1 + $0x68] sm:$0xff]
  %v65 = vld [vmem:[%s1 + $0x70] sm:$0xff]
  %v66 = vld [vmem:[%s1 + $0x78] sm:$0xff]
  %v67 = vld [vmem:[%s1 + $0x80] sm:$0xff]
  %v68 = vld [vmem:[%s1 + $0x88] sm:$0xff]
  %v69 = vld [vmem:[%s1 + $0x90] sm:$0xff]
  %v70 = vld [vmem:[%s1 + $0x98] sm:$0xff]
  %v71 = vld [vmem:[%s1 + $0xa0] sm:$0xff]
  %v72 = vld [vmem:[%s1 + $0xa8] sm:$0xff]
  %v73 = vld [vmem:[%s1 + $0xb0] sm:$0xff]
  %v74 = vld [vmem:[%s1 + $0xb8] sm:$0xff]
  %v75 = vld [vmem:[%s1 + $0xc0] sm:$0xff]
  %v76 = vld [vmem:[%s1 + $0xc8] sm:$0xff]
  %v77 = vld [vmem:[%s1 + $0xd0] sm:$0xff]
  %v78 = vld [vmem:[%s1 + $0xd8] sm:$0xff]
  %v79 = vld [vmem:[%s1 + $0xe0] sm:$0xff]
  %v80 = vld [vmem:[%s1 + $0xe8] sm:$0xff]
  %v81 = vld [vmem:[%s1 + $0xf0] sm:$0xff]
  %v82 = vld [vmem:[%s1 + $0xf8] sm:$0xff]
  %v83 = vld [vmem:[%s1 + $0x100] sm:$0xff]
  %v84 = vld [vmem:[%s1 + $0x108] sm:$0xff]
  %v85 = vld [vmem:[%s1 + $0x110] sm:$0xff]
  %v86 = vld [vmem:[%s1 + $0x118] sm:$0xff]
  %v87 = vld [vmem:[%s1 + $0x120] sm:$0xff]
  %v88 = vld [vmem:[%s1 + $0x128] sm:$0xff]
  %v89 = vld [vmem:[%s1 + $0x130] sm:$0xff]
  %v90 = vld [vmem:[%s1 + $0x138] sm:$0xff]
  %v91 = vld [vmem:[%s1 + $0x140] sm:$0xff]
  %v92 = vld [vmem:[%s1 + $0x148] sm:$0xff]
  %v93 = vld [vmem:[%s1 + $0x150] sm:$0xff]
  %v94 = vld [vmem:[%s1 + $0x158] sm:$0xff]
  %v95 = vld [vmem:[%s1 + $0x160] sm:$0xff]
  %v96 = vld [vmem:[%s1 + $0x168] sm:$0xff]
  %v97 = vld [vmem:[%s1 + $0x170] sm:$0xff]
  %v98 = vld [vmem:[%s1 + $0x178] sm:$0xff]
  %v99 = vld [vmem:[%s1 + $0x180] sm:$0xff]
  %v100 = vld [vmem:[%s1 + $0x188] sm:$0xff]
  %v101 = vld [vmem:[%s1 + $0x190] sm:$0xff]
  %v102 = vld [vmem:[%s1 + $0x198] sm:$0xff]
  %v103 = vld [vmem:[%s1 + $0x1a0] sm:$0xff]
  %v104 = vld [vmem:[%s1 + $0x1a8] sm:$0xff]
  %v105 = vld [vmem:[%s1 + $0x1b0] sm:$0xff]
  %v106 = vld [vmem:[%s1 + $0x1b8] sm:$0xff]
  %v107 = vld [vmem:[%s1 + $0x1c0] sm:$0xff]
  %v108 = vld [vmem:[%s1 + $0x1c8] sm:$0xff]
  %v109 = vld [vmem:[%s1 + $0x1d0] sm:$0xff]
  %v110 = vld [vmem:[%s1 + $0x1d8] sm:$0xff]
  %v111 = vld [vmem:[%s1 + $0x1e0] sm:$0xff]
  %v112 = vld [vmem:[%s1 + $0x1e8] sm:$0xff]
  %v113 = vld [vmem:[%s1 + $0x1f0] sm:$0xff]
  %v114 = vld [vmem:[%s1 + $0x1f8] sm:$0xff]
  %115 = vmatprep.subr.mxu0 %v52
  %116 = vmatpush1.msra.mxu0 %v51
  %117 = vmatprep.subr.mxu0 %v54
  %118 = vmatpush1.msra.mxu0 %v53
  %119 = vmatprep.subr.mxu0 %v56
  %120 = vmatpush1.msra.mxu0 %v55
  %121 = vmatprep.subr.mxu0 %v58
  %122 = vmatpush1.msra.mxu0 %v57
  %123 = vmatprep.subr.mxu0 %v60
  %124 = vmatpush1.msra.mxu0 %v59
  %125 = vmatprep.subr.mxu0 %v62
  %126 = vmatpush1.msra.mxu0 %v61
  %127 = vmatprep.subr.mxu0 %v64
  %128 = vmatpush1.msra.mxu0 %v63
  %129 = vmatprep.subr.mxu0 %v66
  %130 = vmatpush1.msra.mxu0 %v65
  %131 = vmatprep.subr.mxu0 %v68
  %132 = vmatpush1.msra.mxu0 %v67
  %133 = vmatprep.subr.mxu0 %v70
  %134 = vmatpush1.msra.mxu0 %v69
  %135 = vmatprep.subr.mxu0 %v72
  %136 = vmatpush1.msra.mxu0 %v71
  %137 = vmatprep.subr.mxu0 %v74
  %138 = vmatpush1.msra.mxu0 %v73
  %139 = vmatprep.subr.mxu0 %v76
  %140 = vmatpush1.msra.mxu0 %v75
  %141 = vmatprep.subr.mxu0 %v78
  %142 = vmatpush1.msra.mxu0 %v77
  %143 = vmatprep.subr.mxu0 %v80
  %144 = vmatpush1.msra.mxu0 %v79
  %145 = vmatprep.subr.mxu0 %v82
  %146 = vmatpush1.msra.mxu0 %v81
  %147 = vmatprep.subr.mxu0 %v84
  %148 = vmatpush1.msra.mxu0 %v83
  %149 = vmatprep.subr.mxu0 %v86
  %150 = vmatpush1.msra.mxu0 %v85
  %151 = vmatprep.subr.mxu0 %v88
  %152 = vmatpush1.msra.mxu0 %v87
  %153 = vmatprep.subr.mxu0 %v90
  %154 = vmatpush1.msra.mxu0 %v89
  %155 = vmatprep.subr.mxu0 %v92
  %156 = vmatpush1.msra.mxu0 %v91
  %157 = vmatprep.subr.mxu0 %v94
  %158 = vmatpush1.msra.mxu0 %v93
  %159 = vmatprep.subr.mxu0 %v96
  %160 = vmatpush1.msra.mxu0 %v95
  %161 = vmatprep.subr.mxu0 %v98
  %162 = vmatpush1.msra.mxu0 %v97
  %163 = vmatprep.subr.mxu0 %v100
  %164 = vmatpush1.msra.mxu0 %v99
  %165 = vmatprep.subr.mxu0 %v102
  %166 = vmatpush1.msra.mxu0 %v101
  %167 = vmatprep.subr.mxu0 %v104
  %168 = vmatpush1.msra.mxu0 %v103
  %169 = vmatprep.subr.mxu0 %v106
  %170 = vmatpush1.msra.mxu0 %v105
  %171 = vmatprep.subr.mxu0 %v108
  %172 = vmatpush1.msra.mxu0 %v107
  %173 = vmatprep.subr.mxu0 %v110
  %174 = vmatpush1.msra.mxu0 %v109
  %175 = vmatprep.subr.mxu0 %v112
  %176 = vmatpush1.msra.mxu0 %v111
  %177 = vmatprep.subr.mxu0 %v114
  %178 = vmatpush1.msra.mxu0 %v113
  %179 = vmatprep.mubr.f32.mxu0 %v44
  %180 = vmatmul.mubr.f32.gmra.mrb[0].mxu0 %v43
  %v181 = vpop.f32.mrb[0].mxu0
  %v182 = vadd.f32 0.0, %v181
  %v183 = vpop.f32.mrb[0].mxu0
  %v184 = vadd.f32 0.0, %v183
  %185 = vmatprep.mubr.f32.mxu0 %v46
  %186 = vmatmul.mubr.f32.gmra.mrb[0].mxu0 %v45
  %v187 = vpop.f32.mrb[0].mxu0
  %v188 = vadd.f32 0.0, %v187
  %v189 = vpop.f32.mrb[0].mxu0
  %v190 = vadd.f32 0.0, %v189
  %191 = vmatprep.mubr.f32.mxu0 %v48
  %192 = vmatmul.mubr.f32.gmra.mrb[0].mxu0 %v47
  %v193 = vpop.f32.mrb[0].mxu0
  %v194 = vadd.f32 0.0, %v193
  %v195 = vpop.f32.mrb[0].mxu0
  %v196 = vadd.f32 0.0, %v195
  %197 = vmatprep.mubr.f32.mxu0 %v50
  %198 = vmatmul.mubr.f32.gmra.mrb[0].mxu0 %v49
  %v199 = vpop.f32.mrb[0].mxu0
  %v200 = vadd.f32 0.0, %v199
  %v201 = vpop.f32.mrb[0].mxu0
  %v202 = vadd.f32 0.0, %v201
  %203 = vdwg.mxu0
  %v204 = vadd.f32 %v35, %v182
  %v205 = vadd.f32 %v36, %v184
  %v206 = vadd.f32 %v37, %v188
  %v207 = vadd.f32 %v38, %v190
  %v208 = vadd.f32 %v39, %v194
  %v209 = vadd.f32 %v40, %v196
  %v210 = vadd.f32 %v41, %v200
  %v211 = vadd.f32 %v42, %v202
  %212 = vst [vmem:[#allocation2] sm:$0xff] %v204
  %213 = vst [vmem:[#allocation2 + $0x8] sm:$0xff] %v205
  %214 = vst [vmem:[#allocation2 + $0x10] sm:$0xff] %v206
  %215 = vst [vmem:[#allocation2 + $0x18] sm:$0xff] %v207
  %216 = vst [vmem:[#allocation2 + $0x20] sm:$0xff] %v208
  %217 = vst [vmem:[#allocation2 + $0x28] sm:$0xff] %v209
  %218 = vst [vmem:[#allocation2 + $0x30] sm:$0xff] %v210
  %219 = vst [vmem:[#allocation2 + $0x38] sm:$0xff] %v211
  // Predicated region
  $region30: #{transformer_layer.6} parent=0 // pred_check
    %p220 = pneg %p23
  $region31: #{transformer_layer.6} parent=0 // pred_check_branch
    %222 = sbr.rel (%p220) target = $region33
  $region32: #{transformer_layer.6} parent=0 // pred_region
    %v223 = vld [vmem:[#allocation2] sm:$0xff]
    %v224 = vld [vmem:[#allocation2 + $0x8] sm:$0xff]
    %v225 = vld [vmem:[#allocation2 + $0x10] sm:$0xff]
    %v226 = vld [vmem:[#allocation2 + $0x18] sm:$0xff]
    %v227 = vld [vmem:[#allocation2 + $0x20] sm:$0xff]
    %v228 = vld [vmem:[#allocation2 + $0x28] sm:$0xff]
    %v229 = vld [vmem:[#allocation2 + $0x30] sm:$0xff]
    %v230 = vld [vmem:[#allocation2 + $0x38] sm:$0xff]
    %v231 = vld [vmem:[%s2] sm:$0x3]
    %v233 = vlaneseq
    %v234 = vshrl.u32 %v233, 7
    %v235 = vsub.s32 0, %v234
    %v236 = vrot.slane %v231, %v235
    %v237 = vlaneseq
    %v238 = vshrl.u32 %v237, 7
    %v239 = vsub.s32 1, %v238
    %v240 = vrot.slane %v231, %v239
    %v243 = vadd.f32 %v223, %v236
    %v244 = vadd.f32 %v224, %v240
    %v245 = vadd.f32 %v225, %v236
    %v246 = vadd.f32 %v226, %v240
    %v247 = vadd.f32 %v227, %v236
    %v248 = vadd.f32 %v228, %v240
    %v249 = vadd.f32 %v229, %v236
    %v250 = vadd.f32 %v230, %v240
    %v251 = vld [vmem:[%s3] sm:$0xff]
    %v252 = vld [vmem:[%s3 + $0x8] sm:$0xff]
    %v253 = vld [vmem:[%s3 + $0x10] sm:$0xff]
    %v254 = vld [vmem:[%s3 + $0x18] sm:$0xff]
    %v255 = vld [vmem:[%s3 + $0x20] sm:$0xff]
    %v256 = vld [vmem:[%s3 + $0x28] sm:$0xff]
    %v257 = vld [vmem:[%s3 + $0x30] sm:$0xff]
    %v258 = vld [vmem:[%s3 + $0x38] sm:$0xff]
    %v259 = vadd.f32 %v243, %v251
    %v260 = vadd.f32 %v244, %v252
    %v261 = vadd.f32 %v245, %v253
    %v262 = vadd.f32 %v246, %v254
    %v263 = vadd.f32 %v247, %v255
    %v264 = vadd.f32 %v248, %v256
    %v265 = vadd.f32 %v249, %v257
    %v266 = vadd.f32 %v250, %v258
    %v267 = vadd.f32 %v259, %v260
    %268 = vadd.xlane.f32.xlu0 %v267
    %v269 = vpop.xlane.xlu0 %268
    %v270 = vadd.f32 %v261, %v262
    %271 = vadd.xlane.f32.xlu0 %v270
    %v272 = vpop.xlane.xlu0 %271
    %v273 = vadd.f32 %v263, %v264
    %274 = vadd.xlane.f32.xlu0 %v273
    %v275 = vpop.xlane.xlu0 %274
    %v276 = vadd.f32 %v265, %v266
    %277 = vadd.xlane.f32.xlu0 %v276
    %v278 = vpop.xlane.xlu0 %277
    %v279 = vrcp.pop 256.0
    %v280 = vmul.f32 %v269, %v279
    %v281 = vmul.f32 %v272, %v279
    %v282 = vmul.f32 %v275, %v279
    %v283 = vmul.f32 %v278, %v279
    %v284 = vsub.f32 %v259, %v280
    %v285 = vsub.f32 %v260, %v280
    %v286 = vsub.f32 %v261, %v281
    %v287 = vsub.f32 %v262, %v281
    %v288 = vsub.f32 %v263, %v282
    %v289 = vsub.f32 %v264, %v282
    %v290 = vsub.f32 %v265, %v283
    %v291 = vsub.f32 %v266, %v283
    %v292 = vmul.f32 %v284, %v284
    %v293 = vmul.f32 %v285, %v285
    %v294 = vmul.f32 %v286, %v286
    %v295 = vmul.f32 %v287, %v287
    %v296 = vmul.f32 %v288, %v288
    %v297 = vmul.f32 %v289, %v289
    %v298 = vmul.f32 %v290, %v290
    %v299 = vmul.f32 %v291, %v291
    %v300 = vadd.f32 %v292, %v293
    %301 = vadd.xlane.f32.xlu0 %v300
    %v302 = vpop.xlane.xlu0 %301
    %v303 = vadd.f32 %v294, %v295
    %304 = vadd.xlane.f32.xlu0 %v303
    %v305 = vpop.xlane.xlu0 %304
    %v306 = vadd.f32 %v296, %v297
    %307 = vadd.xlane.f32.xlu0 %v306
    %v308 = vpop.xlane.xlu0 %307
    %v309 = vadd.f32 %v298, %v299
    %310 = vadd.xlane.f32.xlu0 %v309
    %v311 = vpop.xlane.xlu0 %310
    %v312 = vrcp.pop 255.0
    %v313 = vmul.f32 %v302, %v312
    %v314 = vmul.f32 %v305, %v312
    %v315 = vmul.f32 %v308, %v312
    %v316 = vmul.f32 %v311, %v312
    %v317 = vrsqrt.pop %v313
    %v318 = vmul.f32 %v313, %v317
    %vm319 = vcmp.eq.f32.partialorder %v313, inf
    %v320 = vsel %vm319, %v313, %v318
    %vm321 = vcmp.eq.f32.partialorder %v313, 0.0
    %v322 = vand.u32 %v313, 2147483648
    %v323 = vsel %vm321, %v322, %v320
    %v324 = vrsqrt.pop %v314
    %v325 = vmul.f32 %v314, %v324
    %vm326 = vcmp.eq.f32.partialorder %v314, inf
    %v327 = vsel %vm326, %v314, %v325
    %vm328 = vcmp.eq.f32.partialorder %v314, 0.0
    %v329 = vand.u32 %v314, 2147483648
    %v330 = vsel %vm328, %v329, %v327
    %v331 = vrsqrt.pop %v315
    %v332 = vmul.f32 %v315, %v331
    %vm333 = vcmp.eq.f32.partialorder %v315, inf
    %v334 = vsel %vm333, %v315, %v332
    %vm335 = vcmp.eq.f32.partialorder %v315, 0.0
    %v336 = vand.u32 %v315, 2147483648
    %v337 = vsel %vm335, %v336, %v334
    %v338 = vrsqrt.pop %v316
    %v339 = vmul.f32 %v316, %v338
    %vm340 = vcmp.eq.f32.partialorder %v316, inf
    %v341 = vsel %vm340, %v316, %v339
    %vm342 = vcmp.eq.f32.partialorder %v316, 0.0
    %v343 = vand.u32 %v316, 2147483648
    %v344 = vsel %vm342, %v343, %v341
    %v345 = vld [vmem:[%s4] sm:$0x3]
    %v346 = vadd.f32 %v323, 1e-12
    %v347 = vadd.f32 %v330, 1e-12
    %v348 = vadd.f32 %v337, 1e-12
    %v349 = vadd.f32 %v344, 1e-12
    %v350 = vrcp.pop %v346
    %v351 = vmul.f32 %v284, %v350
    %v352 = vmul.f32 %v285, %v350
    %v353 = vrcp.pop %v347
    %v354 = vmul.f32 %v286, %v353
    %v355 = vmul.f32 %v287, %v353
    %v356 = vrcp.pop %v348
    %v357 = vmul.f32 %v288, %v356
    %v358 = vmul.f32 %v289, %v356
    %v359 = vrcp.pop %v349
    %v360 = vmul.f32 %v290, %v359
    %v361 = vmul.f32 %v291, %v359
    %v363 = vlaneseq
    %v364 = vshrl.u32 %v363, 7
    %v365 = vsub.s32 0, %v364
    %v366 = vrot.slane %v345, %v365
    %v367 = vlaneseq
    %v368 = vshrl.u32 %v367, 7
    %v369 = vsub.s32 1, %v368
    %v370 = vrot.slane %v345, %v369
    %v373 = vmul.f32 %v366, %v351
    %v374 = vmul.f32 %v370, %v352
    %v375 = vmul.f32 %v366, %v354
    %v376 = vmul.f32 %v370, %v355
    %v377 = vmul.f32 %v366, %v357
    %v378 = vmul.f32 %v370, %v358
    %v379 = vmul.f32 %v366, %v360
    %v380 = vmul.f32 %v370, %v361
    %v381 = vld [vmem:[%s5] sm:$0x3]
    %v383 = vlaneseq
    %v384 = vshrl.u32 %v383, 7
    %v385 = vsub.s32 0, %v384
    %v386 = vrot.slane %v381, %v385
    %v387 = vlaneseq
    %v388 = vshrl.u32 %v387, 7
    %v389 = vsub.s32 1, %v388
    %v390 = vrot.slane %v381, %v389
    %v393 = vadd.f32 %v373, %v386
    %v394 = vadd.f32 %v374, %v390
    %v395 = vadd.f32 %v375, %v386
    %v396 = vadd.f32 %v376, %v390
    %v397 = vadd.f32 %v377, %v386
    %v398 = vadd.f32 %v378, %v390
    %v399 = vadd.f32 %v379, %v386
    %v400 = vadd.f32 %v380, %v390
    %401 = vst [vmem:[%s6] sm:$0xff] %v393
    %402 = vst [vmem:[%s6 + $0x8] sm:$0xff] %v394
    %403 = vst [vmem:[%s6 + $0x10] sm:$0xff] %v395
    %404 = vst [vmem:[%s6 + $0x18] sm:$0xff] %v396
    %405 = vst [vmem:[%s6 + $0x20] sm:$0xff] %v397
    %406 = vst [vmem:[%s6 + $0x28] sm:$0xff] %v398
    %407 = vst [vmem:[%s6 + $0x30] sm:$0xff] %v399
    %408 = vst [vmem:[%s6 + $0x38] sm:$0xff] %v400
  $region33: #{transformer_layer.6} parent=0 // pred_fallthru
    _
  // Predicated region
  $region34: #{transformer_layer.6} parent=0 // pred_check
    _
  $region35: #{transformer_layer.6} parent=0 // pred_check_branch
    %410 = sbr.rel (0) target = $region37
  $region36: #{transformer_layer.6} parent=0 // pred_region
    _
  $region37: #{transformer_layer.6} parent=0 // pred_fallthru
    _
  // Predicated region
  $region38: #{transformer_layer.6} parent=0 // pred_check
    _
  $region39: #{transformer_layer.6} parent=0 // pred_check_branch
    %412 = sbr.rel (0) target = $region41
  $region40: #{transformer_layer.6} parent=0 // pred_region
    _
  $region41: #{transformer_layer.6} parent=0 // pred_fallthru
    _

// kernel: transformer_layer.4
$region0: #{transformer_layer.4}
  #allocation0 [shape = 'u32[]', space=smem, size = 0x4, offset = 0x4, fixed_abs, tag = 'smem constant byte address 0x4 - core index']
  #allocation1 [shape = 'u32[144,128]{1,0:T(1,128)}', space=vmem, size = 0x12000, scoped, tag = 'internal scratch']
  %s0 = inlined_call_operand.hbm [shape: f32[32,256], index: 0, kind: input, shape index: {}]
  %s1 = inlined_call_operand.hbm [shape: f32[256,768], index: 1, kind: input, shape index: {}]
  %s2 = inlined_call_operand.vmem [shape: f32[1,768], index: 2, kind: input, shape index: {}]
  %s3 = inlined_call_operand.vmem [shape: f32[32,768], index: 3, kind: output, shape index: {}]
  %s4 = sld [smem:[#allocation0]]
  $region72: #{transformer_layer.4} parent=0
    _
  %s6 = ssub.s32 1, %s4
  %s7 = scalar_select 0, %s6, %s4
  $region1: #{transformer_layer.4} parent=0
    #allocation2 [shape = 'u8[32768]{0}', space=vmem, size = 0x8000, scoped, tag = 'input window, operand 0, single buffered']
    #allocation3 [shape = 's32[2]{0}', space=sflag, size = 0x8, scoped, tag = 'scoped memory for transformer_layer.4']
    #allocation4 [shape = 'u8[786432]{0}', space=vmem, size = 0xc0000, scoped, tag = 'input window, operand 1']
    #allocation5 [shape = 's32[2]{0}', space=sflag, size = 0x8, scoped, tag = 'scoped memory for transformer_layer.4']
    #allocation6 [shape = 'u8[98304]{0}', space=vmem, size = 0x18000, scoped, tag = 'output window, operand 0']
    %8 = vsyncpa [#allocation3], 0
    %9 = vsyncpa [#allocation5], 0
    %s10 = scalar_lea.sflag [#allocation5], 1
    %11 = vsyncpa %s10, 0
    loop: start=0, step=1, limit=4
    $region2: #{transformer_layer.4} parent=1 // loop_pre_header
      _
    $region3: #{transformer_layer.4} parent=1 // loop_header
      %s13 = sphi 0, %s17
      %p14 = scmp.ge.s32.totalorder %s13, 4
      %s20 = sphi 0, %s32
      %s21 = sphi 0, %s28
      %s22 = sphi 0, %s20
      %s23 = sphi 0, %s21
      %s24 = sphi 0, %s22
      %s25 = sphi 0, %s23
      %s35 = sphi 0, %s37
      %s38 = sphi 0, %s35
      %s39 = sphi 0, %s38
      %s55 = sphi 0, %s39
      %s61 = sphi 0, %s63
      %s64 = sphi 0, %s61
      %s65 = sphi 0, %s64
      %s81 = sphi 0, %s65
      %s87 = sphi 0, %s89
      %s90 = sphi 0, %s87
      %s91 = sphi 0, %s90
      %s107 = sphi 0, %s91
      %s115 = sphi 0, %s117
      %s118 = sphi 0, %s115
      %s119 = sphi 0, %s118
      %s135 = sphi 0, %s119
    $region4: #{transformer_layer.4} parent=1 // loop_header_branch
      %16 = sbr.rel (%p14) target = $region8
    $region5: #{transformer_layer.4} parent=1 // loop_body
      %s18 = ssub.s32 %s13, 1
      %s19 = ssub.s32 %s13, 2
      %s26 = sadd.s32 1, %s21
      %p27 = scmp.ge.s32.totalorder %s26, 2
      %s28 = scalar_select %p27, 0, %s26
      %s29 = sadd.s32 1, %s20
      %s30 = scalar_select %p27, %s29, %s20
      %p31 = scmp.ge.s32.totalorder %s30, 1
      %s32 = scalar_select %p31, 0, %s30
      %s33 = ssub.s32 %s20, %s32
      %p34 = scmp.eq.s32.totalorder %s33, 0
      %s36 = sadd.s32 %s35, 1
      %s37 = scalar_select %p34, %s35, %s36
      %p40 = pneg %p34
      %p41 = scmp.eq.s32.totalorder %s13, 1
      %p42 = por %p40, %p41
      %p43 = scmp.ne.s32.totalorder %s35, %s38
      %p44 = scmp.eq.s32.totalorder %s13, 0
      %p45 = por %p43, %p44
      %p46 = scmp.ne.s32.totalorder %s35, %s38
      %p47 = scmp.eq.s32.totalorder %s18, 1
      %p48 = por %p46, %p47
      %p49 = scmp.ne.s32.totalorder %s38, %s39
      %p50 = scmp.eq.s32.totalorder %s18, 0
      %p51 = por %p49, %p50
      %p52 = scmp.ne.s32.totalorder %s38, %s39
      %p53 = scmp.eq.s32.totalorder %s19, 1
      %p54 = por %p52, %p53
      %p56 = scmp.ne.s32.totalorder %s39, %s55
      %p57 = scmp.eq.s32.totalorder %s19, 0
      %p58 = por %p56, %p57
      %s59 = ssub.s32 %s21, %s28
      %p60 = scmp.eq.s32.totalorder %s59, 0
      %s62 = sadd.s32 %s61, 1
      %s63 = scalar_select %p60, %s61, %s62
      %p66 = pneg %p60
      %p67 = scmp.eq.s32.totalorder %s13, 1
      %p68 = por %p66, %p67
      %p69 = scmp.ne.s32.totalorder %s61, %s64
      %p70 = scmp.eq.s32.totalorder %s13, 0
      %p71 = por %p69, %p70
      %p72 = scmp.ne.s32.totalorder %s61, %s64
      %p73 = scmp.eq.s32.totalorder %s18, 1
      %p74 = por %p72, %p73
      %p75 = scmp.ne.s32.totalorder %s64, %s65
      %p76 = scmp.eq.s32.totalorder %s18, 0
      %p77 = por %p75, %p76
      %p78 = scmp.ne.s32.totalorder %s64, %s65
      %p79 = scmp.eq.s32.totalorder %s19, 1
      %p80 = por %p78, %p79
      %p82 = scmp.ne.s32.totalorder %s65, %s81
      %p83 = scmp.eq.s32.totalorder %s19, 0
      %p84 = por %p82, %p83
      %s85 = ssub.s32 %s21, %s28
      %p86 = scmp.eq.s32.totalorder %s85, 0
      %s88 = sadd.s32 %s87, 1
      %s89 = scalar_select %p86, %s87, %s88
      %p92 = pneg %p86
      %p93 = scmp.eq.s32.totalorder %s13, 1
      %p94 = por %p92, %p93
      %p95 = scmp.ne.s32.totalorder %s87, %s90
      %p96 = scmp.eq.s32.totalorder %s13, 0
      %p97 = por %p95, %p96
      %p98 = scmp.ne.s32.totalorder %s87, %s90
      %p99 = scmp.eq.s32.totalorder %s18, 1
      %p100 = por %p98, %p99
      %p101 = scmp.ne.s32.totalorder %s90, %s91
      %p102 = scmp.eq.s32.totalorder %s18, 0
      %p103 = por %p101, %p102
      %p104 = scmp.ne.s32.totalorder %s90, %s91
      %p105 = scmp.eq.s32.totalorder %s19, 1
      %p106 = por %p104, %p105
      %p108 = scmp.ne.s32.totalorder %s91, %s107
      %p109 = scmp.eq.s32.totalorder %s19, 0
      %p110 = por %p108, %p109
      %s111 = ssub.s32 %s20, %s32
      %s112 = ssub.s32 %s21, %s28
      %s113 = sor.u32 %s111, %s112
      %p114 = scmp.eq.s32.totalorder %s113, 0
      %s116 = sadd.s32 %s115, 1
      %s117 = scalar_select %p114, %s115, %s116
      %p120 = pneg %p114
      %p121 = scmp.eq.s32.totalorder %s13, 1
      %p122 = por %p120, %p121
      %p123 = scmp.ne.s32.totalorder %s115, %s118
      %p124 = scmp.eq.s32.totalorder %s13, 0
      %p125 = por %p123, %p124
      %p126 = scmp.ne.s32.totalorder %s115, %s118
      %p127 = scmp.eq.s32.totalorder %s18, 1
      %p128 = por %p126, %p127
      %p129 = scmp.ne.s32.totalorder %s118, %s119
      %p130 = scmp.eq.s32.totalorder %s18, 0
      %p131 = por %p129, %p130
      %p132 = scmp.ne.s32.totalorder %s118, %s119
      %p133 = scmp.eq.s32.totalorder %s19, 1
      %p134 = por %p132, %p133
      %p136 = scmp.ne.s32.totalorder %s119, %s135
      %p137 = scmp.eq.s32.totalorder %s19, 0
      %p138 = por %p136, %p137
      %p139 = scmp.le.s32.totalorder 1, %s13
      %p140 = scmp.lt.s32.totalorder %s13, 3
      %p141 = pnand %p139, %p140
      %p142 = pneg %p141
      // Predicated region
      $region9: #{transformer_layer.4} parent=5 // pred_check
        _
      $region10: #{transformer_layer.4} parent=5 // pred_check_branch
        %144 = sbr.rel (%p141) target = $region12
      $region11: #{transformer_layer.4} parent=5 // pred_region
        %s145 = ssub.s32 %s13, 1
        // Predicated region
        $region13: #{transformer_layer.4} parent=11 // pred_check
          %p146 = pneg %p51
        $region14: #{transformer_layer.4} parent=11 // pred_check_branch
          %148 = sbr.rel (%p146) target = $region16
        $region15: #{transformer_layer.4} parent=11 // pred_region
          %s149 = smul.u32 4, %s22
          %s151 = ssub.s32 1024, 1024
          %152 = vsyncadd [#allocation3], %s151
          %s153 = smul.addr %s149, 2
          %s154 = smul.addr %s153, 128
          %s155 = scalar_lea.hbm %s0, %s154
          %s156 = sshll.u32 [#allocation2], 4
          %s157 = int_to_ptr.vmem [resolvable:$true] %s156
          %162 = dma.hbm_to_vmem [thread:$0]  %s155, 1024, %s157, [#allocation3], 256, 256, 16
        $region16: #{transformer_layer.4} parent=11 // pred_fallthru
          _
      $region12: #{transformer_layer.4} parent=5 // pred_fallthru
        _
      %p163 = scmp.lt.s32.totalorder %s13, 2
      // Predicated region
      $region17: #{transformer_layer.4} parent=5 // pred_check
        %p164 = pneg %p163
      $region18: #{transformer_layer.4} parent=5 // pred_check_branch
        %166 = sbr.rel (%p164) target = $region20
      $region19: #{transformer_layer.4} parent=5 // pred_region
        // Predicated region
        $region21: #{transformer_layer.4} parent=19 // pred_check
          %p167 = pneg %p71
        $region22: #{transformer_layer.4} parent=19 // pred_check_branch
          %169 = sbr.rel (%p167) target = $region24
        $region23: #{transformer_layer.4} parent=19 // pred_region
          %s170 = sand.u32 %s61, 1
          %s171 = scalar_lea.sflag [#allocation5], %s170
          %s172 = sand.u32 %s61, 1
          %s173 = smul.addr %s172, 768
          %s174 = scalar_lea.vmem [#allocation4], %s173
          %s175 = smul.u32 3, %s21
          %s177 = ssub.s32 12288, 12288
          %178 = vsyncadd %s171, %s177
          %s179 = smul.addr %s175, 128
          %s180 = scalar_lea.hbm %s1, %s179
          %s181 = sshll.u32 %s174, 4
          %s182 = int_to_ptr.vmem [resolvable:$true] %s181
          %187 = dma.hbm_to_vmem [thread:$0]  %s180, 12288, %s182, %s171, 768, 384, 24
        $region24: #{transformer_layer.4} parent=19 // pred_fallthru
          _
        // Predicated region
        $region25: #{transformer_layer.4} parent=19 // pred_check
          %p188 = pneg %p97
        $region26: #{transformer_layer.4} parent=19 // pred_check_branch
          %190 = sbr.rel (%p188) target = $region28
        $region27: #{transformer_layer.4} parent=19 // pred_region
          %s191 = smul.u32 3, %s21
          %p192 = scmp.lt.s32.totalorder %s191, 5
          %s193 = scalar_select %p192, %s191, 5
          %s194 = scalar_lea.vmem %s2, %s193
          %s195 = smul.u32 3, %s21
        $region28: #{transformer_layer.4} parent=19 // pred_fallthru
          _
      $region20: #{transformer_layer.4} parent=5 // pred_fallthru
        _
      %p196 = scmp.le.s32.totalorder 1, %s13
      %p197 = scmp.lt.s32.totalorder %s13, 3
      %p198 = pnand %p196, %p197
      %p199 = pneg %p198
      // Predicated region
      $region29: #{transformer_layer.4} parent=5 // pred_check
        _
      $region30: #{transformer_layer.4} parent=5 // pred_check_branch
        %201 = sbr.rel (%p198) target = $region32
      $region31: #{transformer_layer.4} parent=5 // pred_region
        %s202 = ssub.s32 %s13, 1
        // Predicated region
        $region33: #{transformer_layer.4} parent=31 // pred_check
          %p203 = pneg %p51
        $region34: #{transformer_layer.4} parent=31 // pred_check_branch
          %205 = sbr.rel (%p203) target = $region36
        $region35: #{transformer_layer.4} parent=31 // pred_region
          %206 = dma.done [#allocation3], 1024
        $region36: #{transformer_layer.4} parent=31 // pred_fallthru
          _
        %s207 = sand.u32 %s64, 1
        %s208 = scalar_lea.sflag [#allocation5], %s207
        %s209 = sand.u32 %s64, 1
        %s210 = smul.addr %s209, 768
        %s211 = scalar_lea.vmem [#allocation4], %s210
        // Predicated region
        $region37: #{transformer_layer.4} parent=31 // pred_check
          %p212 = pneg %p77
        $region38: #{transformer_layer.4} parent=31 // pred_check_branch
          %214 = sbr.rel (%p212) target = $region40
        $region39: #{transformer_layer.4} parent=31 // pred_region
          %215 = dma.done %s208, 12288
        $region40: #{transformer_layer.4} parent=31 // pred_fallthru
          _
        %p216 = pneg %p51
        %p217 = pneg %p48
        %s218 = sand.u32 %s64, 1
        %s219 = scalar_lea.sflag [#allocation5], %s218
        %s220 = sand.u32 %s64, 1
        %s221 = smul.addr %s220, 768
        %s222 = scalar_lea.vmem [#allocation4], %s221
        %p223 = pneg %p77
        %p224 = pneg %p74
        %s225 = smul.u32 3, %s23
        %p226 = scmp.lt.s32.totalorder %s225, 5
        %s227 = scalar_select %p226, %s225, 5
        %s228 = scalar_lea.vmem %s2, %s227
        %p229 = pneg %p103
        %p230 = pneg %p100
        %p231 = pneg %p131
        %p232 = pneg %p128
        %s233 = sand.u32 %s118, 1
        %s234 = sand.u32 %s118, 1
        %s235 = smul.addr %s234, 96
        %s236 = scalar_lea.vmem [#allocation6], %s235
        %s237 = smul.u32 4, %s22
        %s238 = smul.u32 3, %s23
        %s239 = smul.u32 3, %s23
        %p240 = scmp.lt.s32.totalorder %s239, 5
        %s241 = scalar_select %p240, %s239, 5
        %s242 = scalar_lea.vmem %s2, %s241
        %s243 = smul.u32 3, %s23
        %s244 = smul.u32 4, %s22
        %s245 = smul.u32 3, %s23
        %v246 = vld [vmem:[#allocation2] sm:$0xff]
        %v247 = vld [vmem:[#allocation2 + $0x8] sm:$0xff]
        %v248 = vld [vmem:[#allocation2 + $0x10] sm:$0xff]
        %v249 = vld [vmem:[#allocation2 + $0x18] sm:$0xff]
        %v250 = vld [vmem:[#allocation2 + $0x20] sm:$0xff]
        %v251 = vld [vmem:[#allocation2 + $0x28] sm:$0xff]
        %v252 = vld [vmem:[#allocation2 + $0x30] sm:$0xff]
        %v253 = vld [vmem:[#allocation2 + $0x38] sm:$0xff]
        %v254 = vld [vmem:[%s211] sm:$0xff]
        %v255 = vld [vmem:[%s211 + $0x8] sm:$0xff]
        %v256 = vld [vmem:[%s211 + $0x10] sm:$0xff]
        %v257 = vld [vmem:[%s211 + $0x18] sm:$0xff]
        %v258 = vld [vmem:[%s211 + $0x20] sm:$0xff]
        %v259 = vld [vmem:[%s211 + $0x28] sm:$0xff]
        %v260 = vld [vmem:[%s211 + $0x30] sm:$0xff]
        %v261 = vld [vmem:[%s211 + $0x38] sm:$0xff]
        %v262 = vld [vmem:[%s211 + $0x40] sm:$0xff]
        %v263 = vld [vmem:[%s211 + $0x48] sm:$0xff]
        %v264 = vld [vmem:[%s211 + $0x50] sm:$0xff]
        %v265 = vld [vmem:[%s211 + $0x58] sm:$0xff]
        %v266 = vld [vmem:[%s211 + $0x60] sm:$0xff]
        %v267 = vld [vmem:[%s211 + $0x68] sm:$0xff]
        %v268 = vld [vmem:[%s211 + $0x70] sm:$0xff]
        %v269 = vld [vmem:[%s211 + $0x78] sm:$0xff]
        %v270 = vld [vmem:[%s211 + $0x80] sm:$0xff]
        %v271 = vld [vmem:[%s211 + $0x88] sm:$0xff]
        %v272 = vld [vmem:[%s211 + $0x90] sm:$0xff]
        %v273 = vld [vmem:[%s211 + $0x98] sm:$0xff]
        %v274 = vld [vmem:[%s211 + $0xa0] sm:$0xff]
        %v275 = vld [vmem:[%s211 + $0xa8] sm:$0xff]
        %v276 = vld [vmem:[%s211 + $0xb0] sm:$0xff]
        %v277 = vld [vmem:[%s211 + $0xb8] sm:$0xff]
        %v278 = vld [vmem:[%s211 + $0xc0] sm:$0xff]
        %v279 = vld [vmem:[%s211 + $0xc8] sm:$0xff]
        %v280 = vld [vmem:[%s211 + $0xd0] sm:$0xff]
        %v281 = vld [vmem:[%s211 + $0xd8] sm:$0xff]
        %v282 = vld [vmem:[%s211 + $0xe0] sm:$0xff]
        %v283 = vld [vmem:[%s211 + $0xe8] sm:$0xff]
        %v284 = vld [vmem:[%s211 + $0xf0] sm:$0xff]
        %v285 = vld [vmem:[%s211 + $0xf8] sm:$0xff]
        %v286 = vld [vmem:[%s211 + $0x100] sm:$0xff]
        %v287 = vld [vmem:[%s211 + $0x108] sm:$0xff]
        %v288 = vld [vmem:[%s211 + $0x110] sm:$0xff]
        %v289 = vld [vmem:[%s211 + $0x118] sm:$0xff]
        %v290 = vld [vmem:[%s211 + $0x120] sm:$0xff]
        %v291 = vld [vmem:[%s211 + $0x128] sm:$0xff]
        %v292 = vld [vmem:[%s211 + $0x130] sm:$0xff]
        %v293 = vld [vmem:[%s211 + $0x138] sm:$0xff]
        %v294 = vld [vmem:[%s211 + $0x140] sm:$0xff]
        %v295 = vld [vmem:[%s211 + $0x148] sm:$0xff]
        %v296 = vld [vmem:[%s211 + $0x150] sm:$0xff]
        %v297 = vld [vmem:[%s211 + $0x158] sm:$0xff]
        %v298 = vld [vmem:[%s211 + $0x160] sm:$0xff]
        %v299 = vld [vmem:[%s211 + $0x168] sm:$0xff]
        %v300 = vld [vmem:[%s211 + $0x170] sm:$0xff]
        %v301 = vld [vmem:[%s211 + $0x178] sm:$0xff]
        %v302 = vld [vmem:[%s211 + $0x180] sm:$0xff]
        %v303 = vld [vmem:[%s211 + $0x188] sm:$0xff]
        %v304 = vld [vmem:[%s211 + $0x190] sm:$0xff]
        %v305 = vld [vmem:[%s211 + $0x198] sm:$0xff]
        %v306 = vld [vmem:[%s211 + $0x1a0] sm:$0xff]
        %v307 = vld [vmem:[%s211 + $0x1a8] sm:$0xff]
        %v308 = vld [vmem:[%s211 + $0x1b0] sm:$0xff]
        %v309 = vld [vmem:[%s211 + $0x1b8] sm:$0xff]
        %v310 = vld [vmem:[%s211 + $0x1c0] sm:$0xff]
        %v311 = vld [vmem:[%s211 + $0x1c8] sm:$0xff]
        %v312 = vld [vmem:[%s211 + $0x1d0] sm:$0xff]
        %v313 = vld [vmem:[%s211 + $0x1d8] sm:$0xff]
        %v314 = vld [vmem:[%s211 + $0x1e0] sm:$0xff]
        %v315 = vld [vmem:[%s211 + $0x1e8] sm:$0xff]
        %v316 = vld [vmem:[%s211 + $0x1f0] sm:$0xff]
        %v317 = vld [vmem:[%s211 + $0x1f8] sm:$0xff]
        %v318 = vld [vmem:[%s211 + $0x200] sm:$0xff]
        %v319 = vld [vmem:[%s211 + $0x208] sm:$0xff]
        %v320 = vld [vmem:[%s211 + $0x210] sm:$0xff]
        %v321 = vld [vmem:[%s211 + $0x218] sm:$0xff]
        %v322 = vld [vmem:[%s211 + $0x220] sm:$0xff]
        %v323 = vld [vmem:[%s211 + $0x228] sm:$0xff]
        %v324 = vld [vmem:[%s211 + $0x230] sm:$0xff]
        %v325 = vld [vmem:[%s211 + $0x238] sm:$0xff]
        %v326 = vld [vmem:[%s211 + $0x240] sm:$0xff]
        %v327 = vld [vmem:[%s211 + $0x248] sm:$0xff]
        %v328 = vld [vmem:[%s211 + $0x250] sm:$0xff]
        %v329 = vld [vmem:[%s211 + $0x258] sm:$0xff]
        %v330 = vld [vmem:[%s211 + $0x260] sm:$0xff]
        %v331 = vld [vmem:[%s211 + $0x268] sm:$0xff]
        %v332 = vld [vmem:[%s211 + $0x270] sm:$0xff]
        %v333 = vld [vmem:[%s211 + $0x278] sm:$0xff]
        %v334 = vld [vmem:[%s211 + $0x280] sm:$0xff]
        %v335 = vld [vmem:[%s211 + $0x288] sm:$0xff]
        %v336 = vld [vmem:[%s211 + $0x290] sm:$0xff]
        %v337 = vld [vmem:[%s211 + $0x298] sm:$0xff]
        %v338 = vld [vmem:[%s211 + $0x2a0] sm:$0xff]
        %v339 = vld [vmem:[%s211 + $0x2a8] sm:$0xff]
        %v340 = vld [vmem:[%s211 + $0x2b0] sm:$0xff]
        %v341 = vld [vmem:[%s211 + $0x2b8] sm:$0xff]
        %v342 = vld [vmem:[%s211 + $0x2c0] sm:$0xff]
        %v343 = vld [vmem:[%s211 + $0x2c8] sm:$0xff]
        %v344 = vld [vmem:[%s211 + $0x2d0] sm:$0xff]
        %v345 = vld [vmem:[%s211 + $0x2d8] sm:$0xff]
        %v346 = vld [vmem:[%s211 + $0x2e0] sm:$0xff]
        %v347 = vld [vmem:[%s211 + $0x2e8] sm:$0xff]
        %v348 = vld [vmem:[%s211 + $0x2f0] sm:$0xff]
        %v349 = vld [vmem:[%s211 + $0x2f8] sm:$0xff]
        %v350 = vld [vmem:[%s242] sm:$0x7]
        %v352 = vlaneseq
        %v353 = vshrl.u32 %v352, 7
        %v354 = vsub.s32 0, %v353
        %v355 = vrot.slane %v350, %v354
        %v356 = vlaneseq
        %v357 = vshrl.u32 %v356, 7
        %v358 = vsub.s32 1, %v357
        %v359 = vrot.slane %v350, %v358
        %v360 = vlaneseq
        %v361 = vshrl.u32 %v360, 7
        %v362 = vsub.s32 2, %v361
        %v363 = vrot.slane %v350, %v362
        %367 = vmatprep.subr.mxu0 %v255
        %368 = vmatpush1.msra.mxu0 %v254
        %369 = vmatprep.subr.mxu0 %v258
        %370 = vmatpush1.msra.mxu0 %v257
        %371 = vmatprep.subr.mxu0 %v261
        %372 = vmatpush1.msra.mxu0 %v260
        %373 = vmatprep.subr.mxu0 %v264
        %374 = vmatpush1.msra.mxu0 %v263
        %375 = vmatprep.subr.mxu0 %v267
        %376 = vmatpush1.msra.mxu0 %v266
        %377 = vmatprep.subr.mxu0 %v270
        %378 = vmatpush1.msra.mxu0 %v269
        %379 = vmatprep.subr.mxu0 %v273
        %380 = vmatpush1.msra.mxu0 %v272
        %381 = vmatprep.subr.mxu0 %v276
        %382 = vmatpush1.msra.mxu0 %v275
        %383 = vmatprep.subr.mxu0 %v279
        %384 = vmatpush1.msra.mxu0 %v278
        %385 = vmatprep.subr.mxu0 %v282
        %386 = vmatpush1.msra.mxu0 %v281
        %387 = vmatprep.subr.mxu0 %v285
        %388 = vmatpush1.msra.mxu0 %v284
        %389 = vmatprep.subr.mxu0 %v288
        %390 = vmatpush1.msra.mxu0 %v287
        %391 = vmatprep.subr.mxu0 %v291
        %392 = vmatpush1.msra.mxu0 %v290
        %393 = vmatprep.subr.mxu0 %v294
        %394 = vmatpush1.msra.mxu0 %v293
        %395 = vmatprep.subr.mxu0 %v297
        %396 = vmatpush1.msra.mxu0 %v296
        %397 = vmatprep.subr.mxu0 %v300
        %398 = vmatpush1.msra.mxu0 %v299
        %399 = vmatprep.subr.mxu0 %v303
        %400 = vmatpush1.msra.mxu0 %v302
        %401 = vmatprep.subr.mxu0 %v306
        %402 = vmatpush1.msra.mxu0 %v305
        %403 = vmatprep.subr.mxu0 %v309
        %404 = vmatpush1.msra.mxu0 %v308
        %405 = vmatprep.subr.mxu0 %v312
        %406 = vmatpush1.msra.mxu0 %v311
        %407 = vmatprep.subr.mxu0 %v315
        %408 = vmatpush1.msra.mxu0 %v314
        %409 = vmatprep.subr.mxu0 %v318
        %410 = vmatpush1.msra.mxu0 %v317
        %411 = vmatprep.subr.mxu0 %v321
        %412 = vmatpush1.msra.mxu0 %v320
        %413 = vmatprep.subr.mxu0 %v324
        %414 = vmatpush1.msra.mxu0 %v323
        %415 = vmatprep.subr.mxu0 %v327
        %416 = vmatpush1.msra.mxu0 %v326
        %417 = vmatprep.subr.mxu0 %v330
        %418 = vmatpush1.msra.mxu0 %v329
        %419 = vmatprep.subr.mxu0 %v333
        %420 = vmatpush1.msra.mxu0 %v332
        %421 = vmatprep.subr.mxu0 %v336
        %422 = vmatpush1.msra.mxu0 %v335
        %423 = vmatprep.subr.mxu0 %v339
        %424 = vmatpush1.msra.mxu0 %v338
        %425 = vmatprep.subr.mxu0 %v342
        %426 = vmatpush1.msra.mxu0 %v341
        %427 = vmatprep.subr.mxu0 %v345
        %428 = vmatpush1.msra.mxu0 %v344
        %429 = vmatprep.subr.mxu0 %v348
        %430 = vmatpush1.msra.mxu0 %v347
        %431 = vmatprep.mubr.f32.mxu0 %v247
        %432 = vmatmul.mubr.f32.gmra.mrb[0].mxu0 %v246
        %v433 = vpop.f32.mrb[0].mxu0
        %v434 = vadd.f32 %v355, %v433
        %v435 = vpop.f32.mrb[0].mxu0
        %v436 = vadd.f32 %v359, %v435
        %437 = vmatprep.mubr.f32.mxu0 %v249
        %438 = vmatmul.mubr.f32.gmra.mrb[0].mxu0 %v248
        %v439 = vpop.f32.mrb[0].mxu0
        %v440 = vadd.f32 %v355, %v439
        %v441 = vpop.f32.mrb[0].mxu0
        %v442 = vadd.f32 %v359, %v441
        %443 = vmatprep.mubr.f32.mxu0 %v251
        %444 = vmatmul.mubr.f32.gmra.mrb[0].mxu0 %v250
        %v445 = vpop.f32.mrb[0].mxu0
        %v446 = vadd.f32 %v355, %v445
        %v447 = vpop.f32.mrb[0].mxu0
        %v448 = vadd.f32 %v359, %v447
        %449 = vmatprep.mubr.f32.mxu0 %v253
        %450 = vmatmul.mubr.f32.gmra.mrb[0].mxu0 %v252
        %v451 = vpop.f32.mrb[0].mxu0
        %v452 = vadd.f32 %v355, %v451
        %v453 = vpop.f32.mrb[0].mxu0
        %v454 = vadd.f32 %v359, %v453
        %455 = vdwg.mxu0
        %456 = vmatprep.subr.mxu0 0.0
        %457 = vmatpush1.msra.mxu0 %v256
        %458 = vmatprep.subr.mxu0 0.0
        %459 = vmatpush1.msra.mxu0 %v259
        %460 = vmatprep.subr.mxu0 0.0
        %461 = vmatpush1.msra.mxu0 %v262
        %462 = vmatprep.subr.mxu0 0.0
        %463 = vmatpush1.msra.mxu0 %v265
        %464 = vmatprep.subr.mxu0 0.0
        %465 = vmatpush1.msra.mxu0 %v268
        %466 = vmatprep.subr.mxu0 0.0
        %467 = vmatpush1.msra.mxu0 %v271
        %468 = vmatprep.subr.mxu0 0.0
        %469 = vmatpush1.msra.mxu0 %v274
        %470 = vmatprep.subr.mxu0 0.0
        %471 = vmatpush1.msra.mxu0 %v277
        %472 = vmatprep.subr.mxu0 0.0
        %473 = vmatpush1.msra.mxu0 %v280
        %474 = vmatprep.subr.mxu0 0.0
        %475 = vmatpush1.msra.mxu0 %v283
        %476 = vmatprep.subr.mxu0 0.0
        %477 = vmatpush1.msra.mxu0 %v286
        %478 = vmatprep.subr.mxu0 0.0
        %479 = vmatpush1.msra.mxu0 %v289
        %480 = vmatprep.subr.mxu0 0.0
        %481 = vmatpush1.msra.mxu0 %v292
        %482 = vmatprep.subr.mxu0 0.0
        %483 = vmatpush1.msra.mxu0 %v295
        %484 = vmatprep.subr.mxu0 0.0
        %485 = vmatpush1.msra.mxu0 %v298
        %486 = vmatprep.subr.mxu0 0.0
        %487 = vmatpush1.msra.mxu0 %v301
        %488 = vmatprep.subr.mxu0 0.0
        %489 = vmatpush1.msra.mxu0 %v304
        %490 = vmatprep.subr.mxu0 0.0
        %491 = vmatpush1.msra.mxu0 %v307
        %492 = vmatprep.subr.mxu0 0.0
        %493 = vmatpush1.msra.mxu0 %v310
        %494 = vmatprep.subr.mxu0 0.0
        %495 = vmatpush1.msra.mxu0 %v313
        %496 = vmatprep.subr.mxu0 0.0
        %497 = vmatpush1.msra.mxu0 %v316
        %498 = vmatprep.subr.mxu0 0.0
        %499 = vmatpush1.msra.mxu0 %v319
        %500 = vmatprep.subr.mxu0 0.0
        %501 = vmatpush1.msra.mxu0 %v322
        %502 = vmatprep.subr.mxu0 0.0
        %503 = vmatpush1.msra.mxu0 %v325
        %504 = vmatprep.subr.mxu0 0.0
        %505 = vmatpush1.msra.mxu0 %v328
        %506 = vmatprep.subr.mxu0 0.0
        %507 = vmatpush1.msra.mxu0 %v331
        %508 = vmatprep.subr.mxu0 0.0
        %509 = vmatpush1.msra.mxu0 %v334
        %510 = vmatprep.subr.mxu0 0.0
        %511 = vmatpush1.msra.mxu0 %v337
        %512 = vmatprep.subr.mxu0 0.0
        %513 = vmatpush1.msra.mxu0 %v340
        %514 = vmatprep.subr.mxu0 0.0
        %515 = vmatpush1.msra.mxu0 %v343
        %516 = vmatprep.subr.mxu0 0.0
        %517 = vmatpush1.msra.mxu0 %v346
        %518 = vmatprep.subr.mxu0 0.0
        %519 = vmatpush1.msra.mxu0 %v349
        %520 = vmatprep.mubr.f32.mxu0 %v247
        %521 = vmatmul.mubr.f32.gmra.mrb[0].mxu0 %v246
        %v522 = vpop.f32.mrb[0].mxu0
        %v523 = vadd.f32 %v363, %v522
        %v524 = vpop.f32.mrb[0].mxu0
        %525 = vmatprep.mubr.f32.mxu0 %v249
        %526 = vmatmul.mubr.f32.gmra.mrb[0].mxu0 %v248
        %v527 = vpop.f32.mrb[0].mxu0
        %v528 = vadd.f32 %v363, %v527
        %v529 = vpop.f32.mrb[0].mxu0
        %530 = vmatprep.mubr.f32.mxu0 %v251
        %531 = vmatmul.mubr.f32.gmra.mrb[0].mxu0 %v250
        %v532 = vpop.f32.mrb[0].mxu0
        %v533 = vadd.f32 %v363, %v532
        %v534 = vpop.f32.mrb[0].mxu0
        %535 = vmatprep.mubr.f32.mxu0 %v253
        %536 = vmatmul.mubr.f32.gmra.mrb[0].mxu0 %v252
        %v537 = vpop.f32.mrb[0].mxu0
        %v538 = vadd.f32 %v363, %v537
        %v539 = vpop.f32.mrb[0].mxu0
        %540 = vdwg.mxu0
        %541 = vst [vmem:[%s236] sm:$0xff] %v434
        %542 = vst [vmem:[%s236 + $0x8] sm:$0xff] %v436
        %543 = vst [vmem:[%s236 + $0x10] sm:$0xff] %v523
        %544 = vst [vmem:[%s236 + $0x18] sm:$0xff] %v440
        %545 = vst [vmem:[%s236 + $0x20] sm:$0xff] %v442
        %546 = vst [vmem:[%s236 + $0x28] sm:$0xff] %v528
        %547 = vst [vmem:[%s236 + $0x30] sm:$0xff] %v446
        %548 = vst [vmem:[%s236 + $0x38] sm:$0xff] %v448
        %549 = vst [vmem:[%s236 + $0x40] sm:$0xff] %v533
        %550 = vst [vmem:[%s236 + $0x48] sm:$0xff] %v452
        %551 = vst [vmem:[%s236 + $0x50] sm:$0xff] %v454
        %552 = vst [vmem:[%s236 + $0x58] sm:$0xff] %v538
        %s553 = sand.u32 %s118, 1
        %s554 = sand.u32 %s118, 1
        %s555 = smul.addr %s554, 96
        %s556 = scalar_lea.vmem [#allocation6], %s555
        // Predicated region
        $region41: #{transformer_layer.4} parent=31 // pred_check
          %p557 = pneg %p128
        $region42: #{transformer_layer.4} parent=31 // pred_check_branch
          %559 = sbr.rel (%p557) target = $region44
        $region43: #{transformer_layer.4} parent=31 // pred_region
          %s560 = smul.u32 4, %s22
          %s561 = smul.u32 3, %s23
          %s562 = smul.addr %s560, 6
          %s563 = sadd.s32 %s561, %s562
          %s564 = smul.addr %s563, 8
          %s565 = scalar_lea.vmem %s3, %s564
          // Predicated region
          $region45: #{transformer_layer.4} parent=43 // pred_check
            _
          $region46: #{transformer_layer.4} parent=43 // pred_check_branch
            %567 = sbr.rel (0) target = $region48
          $region47: #{transformer_layer.4} parent=43 // pred_region
            // Predicated region
            $region49: #{transformer_layer.4} parent=47 // pred_check
              _
            $region50: #{transformer_layer.4} parent=47 // pred_check_branch
              %569 = sbr.rel (0) target = $region52
            $region51: #{transformer_layer.4} parent=47 // pred_region
              loop: start=0, step=1, limit=1
              $region53: #{transformer_layer.4} parent=51 // loop_pre_header
                _
              $region54: #{transformer_layer.4} parent=51 // loop_header
                %s571 = sphi 0, %s575
                %p572 = scmp.ge.s32.totalorder %s571, 1
                %s576 = sphi %s556, %s556
                %s577 = sphi %s565, %s565
              $region55: #{transformer_layer.4} parent=51 // loop_header_branch
                %574 = sbr.rel (%p572) target = $region59
              $region56: #{transformer_layer.4} parent=51 // loop_body
                %v578 = vld [vmem:[%s576] sm:$0xff]
                %579 = vst [vmem:[%s577] sm:$0xff] %v578
                %v580 = vld [vmem:[%s576 + $0x8] sm:$0xff]
                %581 = vst [vmem:[%s577 + $0x8] sm:$0xff] %v580
                %v582 = vld [vmem:[%s576 + $0x10] sm:$0xff]
                %583 = vst [vmem:[%s577 + $0x10] sm:$0xff] %v582
                %v584 = vld [vmem:[%s576 + $0x18] sm:$0xff]
                %585 = vst [vmem:[%s577 + $0x30] sm:$0xff] %v584
                %v586 = vld [vmem:[%s576 + $0x20] sm:$0xff]
                %587 = vst [vmem:[%s577 + $0x38] sm:$0xff] %v586
                %v588 = vld [vmem:[%s576 + $0x28] sm:$0xff]
                %589 = vst [vmem:[%s577 + $0x40] sm:$0xff] %v588
                %v590 = vld [vmem:[%s576 + $0x30] sm:$0xff]
                %591 = vst [vmem:[%s577 + $0x60] sm:$0xff] %v590
                %v592 = vld [vmem:[%s576 + $0x38] sm:$0xff]
                %593 = vst [vmem:[%s577 + $0x68] sm:$0xff] %v592
                %v594 = vld [vmem:[%s576 + $0x40] sm:$0xff]
                %595 = vst [vmem:[%s577 + $0x70] sm:$0xff] %v594
                %v596 = vld [vmem:[%s576 + $0x48] sm:$0xff]
                %597 = vst [vmem:[%s577 + $0x90] sm:$0xff] %v596
                %v598 = vld [vmem:[%s576 + $0x50] sm:$0xff]
                %599 = vst [vmem:[%s577 + $0x98] sm:$0xff] %v598
                %v600 = vld [vmem:[%s576 + $0x58] sm:$0xff]
                %601 = vst [vmem:[%s577 + $0xa0] sm:$0xff] %v600
              $region57: #{transformer_layer.4} parent=51 // loop_footer
                %s575 = sadd.s32 1, %s571
              $region58: #{transformer_layer.4} parent=51 // loop_footer_branch
                %570 = sbr.rel target = $region54
              $region59: #{transformer_layer.4} parent=51 // loop_exit
                _
            $region52: #{transformer_layer.4} parent=47 // pred_fallthru
              _
            // Predicated region
            $region60: #{transformer_layer.4} parent=47 // pred_check
              _
            $region61: #{transformer_layer.4} parent=47 // pred_check_branch
              %603 = sbr.rel target = $region63
            $region62: #{transformer_layer.4} parent=47 // pred_region
              _
            $region63: #{transformer_layer.4} parent=47 // pred_fallthru
              _
          $region48: #{transformer_layer.4} parent=43 // pred_fallthru
            _
          %604 = vnop
        $region44: #{transformer_layer.4} parent=31 // pred_fallthru
          _
      $region32: #{transformer_layer.4} parent=5 // pred_fallthru
        _
      %p605 = scmp.le.s32.totalorder 2, %s13
      // Predicated region
      $region64: #{transformer_layer.4} parent=5 // pred_check
        %p606 = pneg %p605
      $region65: #{transformer_layer.4} parent=5 // pred_check_branch
        %608 = sbr.rel (%p606) target = $region67
      $region66: #{transformer_layer.4} parent=5 // pred_region
        %s609 = ssub.s32 %s13, 2
        // Predicated region
        $region68: #{transformer_layer.4} parent=66 // pred_check
          %p610 = pneg %p134
        $region69: #{transformer_layer.4} parent=66 // pred_check_branch
          %612 = sbr.rel (%p610) target = $region71
        $region70: #{transformer_layer.4} parent=66 // pred_region
          %s613 = sand.u32 %s119, 1
          %s614 = sand.u32 %s119, 1
          %s615 = smul.addr %s614, 96
          %s616 = scalar_lea.vmem [#allocation6], %s615
        $region71: #{transformer_layer.4} parent=66 // pred_fallthru
          _
      $region67: #{transformer_layer.4} parent=5 // pred_fallthru
        _
    $region6: #{transformer_layer.4} parent=1 // loop_footer
      %s17 = sadd.s32 1, %s13
    $region7: #{transformer_layer.4} parent=1 // loop_footer_branch
      %12 = sbr.rel target = $region3
    $region8: #{transformer_layer.4} parent=1 // loop_exit
      _
    %617 = vsyncpa [#allocation3], 1
    %s618 = scalar_lea.sflag [#allocation3], 1
    %619 = vsyncpa %s618, 1
    %620 = vsyncpa [#allocation5], 1
    %s621 = scalar_lea.sflag [#allocation5], 1
    %622 = vsyncpa %s621, 1

// kernel: transformer_layer.7
$region0: #{transformer_layer.7}
  #allocation0 [shape = 'u32[]', space=smem, size = 0x4, offset = 0x4, fixed_abs, tag = 'smem constant byte address 0x4 - core index']
  #allocation1 [shape = 'u32[144,128]{1,0:T(1,128)}', space=vmem, size = 0x12000, scoped, tag = 'internal scratch']
  #allocation2 [shape = 'f32[32,256]{1,0:T(8,128)}', space=vmem, size = 0x8000, scoped, tag = 'scratch operand']
  #allocation3 [shape = 'f32[32,256]{1,0:T(8,128)}', space=vmem, size = 0x8000, scoped, tag = 'scratch operand']
  %s0 = inlined_call_operand.vmem [shape: f32[32,256], index: 0, kind: input, shape index: {}]
  %s1 = inlined_call_operand.vmem [shape: f32[256,512], index: 1, kind: input, shape index: {}]
  %s2 = inlined_call_operand.vmem [shape: f32[1,512], index: 2, kind: input, shape index: {}]
  %s3 = inlined_call_operand.vmem [shape: f32[512,256], index: 3, kind: input, shape index: {}]
  %s4 = inlined_call_operand.vmem [shape: f32[1,256], index: 4, kind: input, shape index: {}]
  %s5 = inlined_call_operand.vmem [shape: f32[1,256], index: 5, kind: input, shape index: {}]
  %s6 = inlined_call_operand.vmem [shape: f32[1,256], index: 6, kind: input, shape index: {}]
  %s7 = inlined_call_operand.hbm [shape: f32[32,256], index: 7, kind: output, shape index: {}]
  %s8 = sld [smem:[#allocation0]]
  $region46: #{transformer_layer.7} parent=0
    _
  %s10 = ssub.s32 1, %s8
  %s11 = scalar_select 0, %s10, %s8
  $region1: #{transformer_layer.7} parent=0
    #allocation4 [shape = 'u8[32768]{0}', space=vmem, size = 0x8000, scoped, tag = 'output window, operand 0, single buffered']
    #allocation5 [shape = 's32[1]{0}', space=sflag, size = 0x4, scoped, tag = 'scoped memory for transformer_layer.7']
    %12 = vsyncpa [#allocation5], 0
    // Predicated region
    $region2: #{transformer_layer.7} parent=1 // pred_check
      _
    $region3: #{transformer_layer.7} parent=1 // pred_check_branch
      %14 = sbr.rel (0) target = $region5
    $region4: #{transformer_layer.7} parent=1 // pred_region
      _
    $region5: #{transformer_layer.7} parent=1 // pred_fallthru
      _
    // Predicated region
    $region6: #{transformer_layer.7} parent=1 // pred_check
      _
    $region7: #{transformer_layer.7} parent=1 // pred_check_branch
      %16 = sbr.rel (0) target = $region9
    $region8: #{transformer_layer.7} parent=1 // pred_region
      _
    $region9: #{transformer_layer.7} parent=1 // pred_fallthru
      _
    // Predicated region
    $region10: #{transformer_layer.7} parent=1 // pred_check
      _
    $region11: #{transformer_layer.7} parent=1 // pred_check_branch
      %18 = sbr.rel (0) target = $region13
    $region12: #{transformer_layer.7} parent=1 // pred_region
      _
    $region13: #{transformer_layer.7} parent=1 // pred_fallthru
      _
    // Predicated region
    $region14: #{transformer_layer.7} parent=1 // pred_check
      _
    $region15: #{transformer_layer.7} parent=1 // pred_check_branch
      %20 = sbr.rel (0) target = $region17
    $region16: #{transformer_layer.7} parent=1 // pred_region
      _
    $region17: #{transformer_layer.7} parent=1 // pred_fallthru
      _
    // Predicated region
    $region18: #{transformer_layer.7} parent=1 // pred_check
      _
    $region19: #{transformer_layer.7} parent=1 // pred_check_branch
      %22 = sbr.rel (0) target = $region21
    $region20: #{transformer_layer.7} parent=1 // pred_region
      _
    $region21: #{transformer_layer.7} parent=1 // pred_fallthru
      _
    // Predicated region
    $region22: #{transformer_layer.7} parent=1 // pred_check
      _
    $region23: #{transformer_layer.7} parent=1 // pred_check_branch
      %24 = sbr.rel (0) target = $region25
    $region24: #{transformer_layer.7} parent=1 // pred_region
      _
    $region25: #{transformer_layer.7} parent=1 // pred_fallthru
      _
    // Predicated region
    $region26: #{transformer_layer.7} parent=1 // pred_check
      _
    $region27: #{transformer_layer.7} parent=1 // pred_check_branch
      %26 = sbr.rel (0) target = $region29
    $region28: #{transformer_layer.7} parent=1 // pred_region
      _
    $region29: #{transformer_layer.7} parent=1 // pred_fallthru
      _
    %p27 = scmp.eq.s32.totalorder 0, 0
    // Predicated region
    $region30: #{transformer_layer.7} parent=1 // pred_check
      %p28 = pneg %p27
    $region31: #{transformer_layer.7} parent=1 // pred_check_branch
      %30 = sbr.rel (%p28) target = $region33
    $region32: #{transformer_layer.7} parent=1 // pred_region
      %31 = vst [vmem:[#allocation2] sm:$0xff] 0.0
      %32 = vst [vmem:[#allocation2 + $0x8] sm:$0xff] 0.0
      %33 = vst [vmem:[#allocation2 + $0x10] sm:$0xff] 0.0
      %34 = vst [vmem:[#allocation2 + $0x18] sm:$0xff] 0.0
      %35 = vst [vmem:[#allocation2 + $0x20] sm:$0xff] 0.0
      %36 = vst [vmem:[#allocation2 + $0x28] sm:$0xff] 0.0
      %37 = vst [vmem:[#allocation2 + $0x30] sm:$0xff] 0.0
      %38 = vst [vmem:[#allocation2 + $0x38] sm:$0xff] 0.0
      %v39 = vld [vmem:[%s0] sm:$0xff]
      %v40 = vld [vmem:[%s0 + $0x8] sm:$0xff]
      %v41 = vld [vmem:[%s0 + $0x10] sm:$0xff]
      %v42 = vld [vmem:[%s0 + $0x18] sm:$0xff]
      %v43 = vld [vmem:[%s0 + $0x20] sm:$0xff]
      %v44 = vld [vmem:[%s0 + $0x28] sm:$0xff]
      %v45 = vld [vmem:[%s0 + $0x30] sm:$0xff]
      %v46 = vld [vmem:[%s0 + $0x38] sm:$0xff]
      %47 = vst [vmem:[#allocation3] sm:$0xff] %v39
      %48 = vst [vmem:[#allocation3 + $0x8] sm:$0xff] %v40
      %49 = vst [vmem:[#allocation3 + $0x10] sm:$0xff] %v41
      %50 = vst [vmem:[#allocation3 + $0x18] sm:$0xff] %v42
      %51 = vst [vmem:[#allocation3 + $0x20] sm:$0xff] %v43
      %52 = vst [vmem:[#allocation3 + $0x28] sm:$0xff] %v44
      %53 = vst [vmem:[#allocation3 + $0x30] sm:$0xff] %v45
      %54 = vst [vmem:[#allocation3 + $0x38] sm:$0xff] %v46
    $region33: #{transformer_layer.7} parent=1 // pred_fallthru
      _
    %v55 = vld [vmem:[#allocation3] sm:$0xff]
    %v56 = vld [vmem:[#allocation3 + $0x8] sm:$0xff]
    %v57 = vld [vmem:[#allocation3 + $0x10] sm:$0xff]
    %v58 = vld [vmem:[#allocation3 + $0x18] sm:$0xff]
    %v59 = vld [vmem:[#allocation3 + $0x20] sm:$0xff]
    %v60 = vld [vmem:[#allocation3 + $0x28] sm:$0xff]
    %v61 = vld [vmem:[#allocation3 + $0x30] sm:$0xff]
    %v62 = vld [vmem:[#allocation3 + $0x38] sm:$0xff]
    %v63 = vld [vmem:[%s1] sm:$0xff]
    %v64 = vld [vmem:[%s1 + $0x8] sm:$0xff]
    %v65 = vld [vmem:[%s1 + $0x10] sm:$0xff]
    %v66 = vld [vmem:[%s1 + $0x18] sm:$0xff]
    %v67 = vld [vmem:[%s1 + $0x20] sm:$0xff]
    %v68 = vld [vmem:[%s1 + $0x28] sm:$0xff]
    %v69 = vld [vmem:[%s1 + $0x30] sm:$0xff]
    %v70 = vld [vmem:[%s1 + $0x38] sm:$0xff]
    %v71 = vld [vmem:[%s1 + $0x40] sm:$0xff]
    %v72 = vld [vmem:[%s1 + $0x48] sm:$0xff]
    %v73 = vld [vmem:[%s1 + $0x50] sm:$0xff]
    %v74 = vld [vmem:[%s1 + $0x58] sm:$0xff]
    %v75 = vld [vmem:[%s1 + $0x60] sm:$0xff]
    %v76 = vld [vmem:[%s1 + $0x68] sm:$0xff]
    %v77 = vld [vmem:[%s1 + $0x70] sm:$0xff]
    %v78 = vld [vmem:[%s1 + $0x78] sm:$0xff]
    %v79 = vld [vmem:[%s1 + $0x80] sm:$0xff]
    %v80 = vld [vmem:[%s1 + $0x88] sm:$0xff]
    %v81 = vld [vmem:[%s1 + $0x90] sm:$0xff]
    %v82 = vld [vmem:[%s1 + $0x98] sm:$0xff]
    %v83 = vld [vmem:[%s1 + $0xa0] sm:$0xff]
    %v84 = vld [vmem:[%s1 + $0xa8] sm:$0xff]
    %v85 = vld [vmem:[%s1 + $0xb0] sm:$0xff]
    %v86 = vld [vmem:[%s1 + $0xb8] sm:$0xff]
    %v87 = vld [vmem:[%s1 + $0xc0] sm:$0xff]
    %v88 = vld [vmem:[%s1 + $0xc8] sm:$0xff]
    %v89 = vld [vmem:[%s1 + $0xd0] sm:$0xff]
    %v90 = vld [vmem:[%s1 + $0xd8] sm:$0xff]
    %v91 = vld [vmem:[%s1 + $0xe0] sm:$0xff]
    %v92 = vld [vmem:[%s1 + $0xe8] sm:$0xff]
    %v93 = vld [vmem:[%s1 + $0xf0] sm:$0xff]
    %v94 = vld [vmem:[%s1 + $0xf8] sm:$0xff]
    %v95 = vld [vmem:[%s1 + $0x100] sm:$0xff]
    %v96 = vld [vmem:[%s1 + $0x108] sm:$0xff]
    %v97 = vld [vmem:[%s1 + $0x110] sm:$0xff]
    %v98 = vld [vmem:[%s1 + $0x118] sm:$0xff]
    %v99 = vld [vmem:[%s1 + $0x120] sm:$0xff]
    %v100 = vld [vmem:[%s1 + $0x128] sm:$0xff]
    %v101 = vld [vmem:[%s1 + $0x130] sm:$0xff]
    %v102 = vld [vmem:[%s1 + $0x138] sm:$0xff]
    %v103 = vld [vmem:[%s1 + $0x140] sm:$0xff]
    %v104 = vld [vmem:[%s1 + $0x148] sm:$0xff]
    %v105 = vld [vmem:[%s1 + $0x150] sm:$0xff]
    %v106 = vld [vmem:[%s1 + $0x158] sm:$0xff]
    %v107 = vld [vmem:[%s1 + $0x160] sm:$0xff]
    %v108 = vld [vmem:[%s1 + $0x168] sm:$0xff]
    %v109 = vld [vmem:[%s1 + $0x170] sm:$0xff]
    %v110 = vld [vmem:[%s1 + $0x178] sm:$0xff]
    %v111 = vld [vmem:[%s1 + $0x180] sm:$0xff]
    %v112 = vld [vmem:[%s1 + $0x188] sm:$0xff]
    %v113 = vld [vmem:[%s1 + $0x190] sm:$0xff]
    %v114 = vld [vmem:[%s1 + $0x198] sm:$0xff]
    %v115 = vld [vmem:[%s1 + $0x1a0] sm:$0xff]
    %v116 = vld [vmem:[%s1 + $0x1a8] sm:$0xff]
    %v117 = vld [vmem:[%s1 + $0x1b0] sm:$0xff]
    %v118 = vld [vmem:[%s1 + $0x1b8] sm:$0xff]
    %v119 = vld [vmem:[%s1 + $0x1c0] sm:$0xff]
    %v120 = vld [vmem:[%s1 + $0x1c8] sm:$0xff]
    %v121 = vld [vmem:[%s1 + $0x1d0] sm:$0xff]
    %v122 = vld [vmem:[%s1 + $0x1d8] sm:$0xff]
    %v123 = vld [vmem:[%s1 + $0x1e0] sm:$0xff]
    %v124 = vld [vmem:[%s1 + $0x1e8] sm:$0xff]
    %v125 = vld [vmem:[%s1 + $0x1f0] sm:$0xff]
    %v126 = vld [vmem:[%s1 + $0x1f8] sm:$0xff]
    %v127 = vld [vmem:[%s1 + $0x200] sm:$0xff]
    %v128 = vld [vmem:[%s1 + $0x208] sm:$0xff]
    %v129 = vld [vmem:[%s1 + $0x210] sm:$0xff]
    %v130 = vld [vmem:[%s1 + $0x218] sm:$0xff]
    %v131 = vld [vmem:[%s1 + $0x220] sm:$0xff]
    %v132 = vld [vmem:[%s1 + $0x228] sm:$0xff]
    %v133 = vld [vmem:[%s1 + $0x230] sm:$0xff]
    %v134 = vld [vmem:[%s1 + $0x238] sm:$0xff]
    %v135 = vld [vmem:[%s1 + $0x240] sm:$0xff]
    %v136 = vld [vmem:[%s1 + $0x248] sm:$0xff]
    %v137 = vld [vmem:[%s1 + $0x250] sm:$0xff]
    %v138 = vld [vmem:[%s1 + $0x258] sm:$0xff]
    %v139 = vld [vmem:[%s1 + $0x260] sm:$0xff]
    %v140 = vld [vmem:[%s1 + $0x268] sm:$0xff]
    %v141 = vld [vmem:[%s1 + $0x270] sm:$0xff]
    %v142 = vld [vmem:[%s1 + $0x278] sm:$0xff]
    %v143 = vld [vmem:[%s1 + $0x280] sm:$0xff]
    %v144 = vld [vmem:[%s1 + $0x288] sm:$0xff]
    %v145 = vld [vmem:[%s1 + $0x290] sm:$0xff]
    %v146 = vld [vmem:[%s1 + $0x298] sm:$0xff]
    %v147 = vld [vmem:[%s1 + $0x2a0] sm:$0xff]
    %v148 = vld [vmem:[%s1 + $0x2a8] sm:$0xff]
    %v149 = vld [vmem:[%s1 + $0x2b0] sm:$0xff]
    %v150 = vld [vmem:[%s1 + $0x2b8] sm:$0xff]
    %v151 = vld [vmem:[%s1 + $0x2c0] sm:$0xff]
    %v152 = vld [vmem:[%s1 + $0x2c8] sm:$0xff]
    %v153 = vld [vmem:[%s1 + $0x2d0] sm:$0xff]
    %v154 = vld [vmem:[%s1 + $0x2d8] sm:$0xff]
    %v155 = vld [vmem:[%s1 + $0x2e0] sm:$0xff]
    %v156 = vld [vmem:[%s1 + $0x2e8] sm:$0xff]
    %v157 = vld [vmem:[%s1 + $0x2f0] sm:$0xff]
    %v158 = vld [vmem:[%s1 + $0x2f8] sm:$0xff]
    %v159 = vld [vmem:[%s1 + $0x300] sm:$0xff]
    %v160 = vld [vmem:[%s1 + $0x308] sm:$0xff]
    %v161 = vld [vmem:[%s1 + $0x310] sm:$0xff]
    %v162 = vld [vmem:[%s1 + $0x318] sm:$0xff]
    %v163 = vld [vmem:[%s1 + $0x320] sm:$0xff]
    %v164 = vld [vmem:[%s1 + $0x328] sm:$0xff]
    %v165 = vld [vmem:[%s1 + $0x330] sm:$0xff]
    %v166 = vld [vmem:[%s1 + $0x338] sm:$0xff]
    %v167 = vld [vmem:[%s1 + $0x340] sm:$0xff]
    %v168 = vld [vmem:[%s1 + $0x348] sm:$0xff]
    %v169 = vld [vmem:[%s1 + $0x350] sm:$0xff]
    %v170 = vld [vmem:[%s1 + $0x358] sm:$0xff]
    %v171 = vld [vmem:[%s1 + $0x360] sm:$0xff]
    %v172 = vld [vmem:[%s1 + $0x368] sm:$0xff]
    %v173 = vld [vmem:[%s1 + $0x370] sm:$0xff]
    %v174 = vld [vmem:[%s1 + $0x378] sm:$0xff]
    %v175 = vld [vmem:[%s1 + $0x380] sm:$0xff]
    %v176 = vld [vmem:[%s1 + $0x388] sm:$0xff]
    %v177 = vld [vmem:[%s1 + $0x390] sm:$0xff]
    %v178 = vld [vmem:[%s1 + $0x398] sm:$0xff]
    %v179 = vld [vmem:[%s1 + $0x3a0] sm:$0xff]
    %v180 = vld [vmem:[%s1 + $0x3a8] sm:$0xff]
    %v181 = vld [vmem:[%s1 + $0x3b0] sm:$0xff]
    %v182 = vld [vmem:[%s1 + $0x3b8] sm:$0xff]
    %v183 = vld [vmem:[%s1 + $0x3c0] sm:$0xff]
    %v184 = vld [vmem:[%s1 + $0x3c8] sm:$0xff]
    %v185 = vld [vmem:[%s1 + $0x3d0] sm:$0xff]
    %v186 = vld [vmem:[%s1 + $0x3d8] sm:$0xff]
    %v187 = vld [vmem:[%s1 + $0x3e0] sm:$0xff]
    %v188 = vld [vmem:[%s1 + $0x3e8] sm:$0xff]
    %v189 = vld [vmem:[%s1 + $0x3f0] sm:$0xff]
    %v190 = vld [vmem:[%s1 + $0x3f8] sm:$0xff]
    %v191 = vld [vmem:[%s2] sm:$0xf]
    %v193 = vlaneseq
    %v194 = vshrl.u32 %v193, 7
    %v195 = vsub.s32 0, %v194
    %v196 = vrot.slane %v191, %v195
    %v197 = vlaneseq
    %v198 = vshrl.u32 %v197, 7
    %v199 = vsub.s32 1, %v198
    %v200 = vrot.slane %v191, %v199
    %v201 = vlaneseq
    %v202 = vshrl.u32 %v201, 7
    %v203 = vsub.s32 2, %v202
    %v204 = vrot.slane %v191, %v203
    %v205 = vlaneseq
    %v206 = vshrl.u32 %v205, 7
    %v207 = vsub.s32 3, %v206
    %v208 = vrot.slane %v191, %v207
    %213 = vmatprep.subr.mxu0 %v64
    %214 = vmatpush1.msra.mxu0 %v63
    %215 = vmatprep.subr.mxu0 %v68
    %216 = vmatpush1.msra.mxu0 %v67
    %217 = vmatprep.subr.mxu0 %v72
    %218 = vmatpush1.msra.mxu0 %v71
    %219 = vmatprep.subr.mxu0 %v76
    %220 = vmatpush1.msra.mxu0 %v75
    %221 = vmatprep.subr.mxu0 %v80
    %222 = vmatpush1.msra.mxu0 %v79
    %223 = vmatprep.subr.mxu0 %v84
    %224 = vmatpush1.msra.mxu0 %v83
    %225 = vmatprep.subr.mxu0 %v88
    %226 = vmatpush1.msra.mxu0 %v87
    %227 = vmatprep.subr.mxu0 %v92
    %228 = vmatpush1.msra.mxu0 %v91
    %229 = vmatprep.subr.mxu0 %v96
    %230 = vmatpush1.msra.mxu0 %v95
    %231 = vmatprep.subr.mxu0 %v100
    %232 = vmatpush1.msra.mxu0 %v99
    %233 = vmatprep.subr.mxu0 %v104
    %234 = vmatpush1.msra.mxu0 %v103
    %235 = vmatprep.subr.mxu0 %v108
    %236 = vmatpush1.msra.mxu0 %v107
    %237 = vmatprep.subr.mxu0 %v112
    %238 = vmatpush1.msra.mxu0 %v111
    %239 = vmatprep.subr.mxu0 %v116
    %240 = vmatpush1.msra.mxu0 %v115
    %241 = vmatprep.subr.mxu0 %v120
    %242 = vmatpush1.msra.mxu0 %v119
    %243 = vmatprep.subr.mxu0 %v124
    %244 = vmatpush1.msra.mxu0 %v123
    %245 = vmatprep.subr.mxu0 %v128
    %246 = vmatpush1.msra.mxu0 %v127
    %247 = vmatprep.subr.mxu0 %v132
    %248 = vmatpush1.msra.mxu0 %v131
    %249 = vmatprep.subr.mxu0 %v136
    %250 = vmatpush1.msra.mxu0 %v135
    %251 = vmatprep.subr.mxu0 %v140
    %252 = vmatpush1.msra.mxu0 %v139
    %253 = vmatprep.subr.mxu0 %v144
    %254 = vmatpush1.msra.mxu0 %v143
    %255 = vmatprep.subr.mxu0 %v148
    %256 = vmatpush1.msra.mxu0 %v147
    %257 = vmatprep.subr.mxu0 %v152
    %258 = vmatpush1.msra.mxu0 %v151
    %259 = vmatprep.subr.mxu0 %v156
    %260 = vmatpush1.msra.mxu0 %v155
    %261 = vmatprep.subr.mxu0 %v160
    %262 = vmatpush1.msra.mxu0 %v159
    %263 = vmatprep.subr.mxu0 %v164
    %264 = vmatpush1.msra.mxu0 %v163
    %265 = vmatprep.subr.mxu0 %v168
    %266 = vmatpush1.msra.mxu0 %v167
    %267 = vmatprep.subr.mxu0 %v172
    %268 = vmatpush1.msra.mxu0 %v171
    %269 = vmatprep.subr.mxu0 %v176
    %270 = vmatpush1.msra.mxu0 %v175
    %271 = vmatprep.subr.mxu0 %v180
    %272 = vmatpush1.msra.mxu0 %v179
    %273 = vmatprep.subr.mxu0 %v184
    %274 = vmatpush1.msra.mxu0 %v183
    %275 = vmatprep.subr.mxu0 %v188
    %276 = vmatpush1.msra.mxu0 %v187
    %277 = vmatprep.mubr.f32.mxu0 %v56
    %278 = vmatmul.mubr.f32.gmra.mrb[0].mxu0 %v55
    %v279 = vpop.f32.mrb[0].mxu0
    %v280 = vadd.f32 %v196, %v279
    %v281 = vpop.f32.mrb[0].mxu0
    %v282 = vadd.f32 %v200, %v281
    %283 = vmatprep.mubr.f32.mxu0 %v58
    %284 = vmatmul.mubr.f32.gmra.mrb[0].mxu0 %v57
    %v285 = vpop.f32.mrb[0].mxu0
    %v286 = vadd.f32 %v196, %v285
    %v287 = vpop.f32.mrb[0].mxu0
    %v288 = vadd.f32 %v200, %v287
    %289 = vmatprep.mubr.f32.mxu0 %v60
    %290 = vmatmul.mubr.f32.gmra.mrb[0].mxu0 %v59
    %v291 = vpop.f32.mrb[0].mxu0
    %v292 = vadd.f32 %v196, %v291
    %v293 = vpop.f32.mrb[0].mxu0
    %v294 = vadd.f32 %v200, %v293
    %295 = vmatprep.mubr.f32.mxu0 %v62
    %296 = vmatmul.mubr.f32.gmra.mrb[0].mxu0 %v61
    %v297 = vpop.f32.mrb[0].mxu0
    %v298 = vadd.f32 %v196, %v297
    %v299 = vpop.f32.mrb[0].mxu0
    %v300 = vadd.f32 %v200, %v299
    %301 = vdwg.mxu0
    %302 = vmatprep.subr.mxu0 %v66
    %303 = vmatpush1.msra.mxu0 %v65
    %304 = vmatprep.subr.mxu0 %v70
    %305 = vmatpush1.msra.mxu0 %v69
    %306 = vmatprep.subr.mxu0 %v74
    %307 = vmatpush1.msra.mxu0 %v73
    %308 = vmatprep.subr.mxu0 %v78
    %309 = vmatpush1.msra.mxu0 %v77
    %310 = vmatprep.subr.mxu0 %v82
    %311 = vmatpush1.msra.mxu0 %v81
    %312 = vmatprep.subr.mxu0 %v86
    %313 = vmatpush1.msra.mxu0 %v85
    %314 = vmatprep.subr.mxu0 %v90
    %315 = vmatpush1.msra.mxu0 %v89
    %316 = vmatprep.subr.mxu0 %v94
    %317 = vmatpush1.msra.mxu0 %v93
    %318 = vmatprep.subr.mxu0 %v98
    %319 = vmatpush1.msra.mxu0 %v97
    %320 = vmatprep.subr.mxu0 %v102
    %321 = vmatpush1.msra.mxu0 %v101
    %322 = vmatprep.subr.mxu0 %v106
    %323 = vmatpush1.msra.mxu0 %v105
    %324 = vmatprep.subr.mxu0 %v110
    %325 = vmatpush1.msra.mxu0 %v109
    %326 = vmatprep.subr.mxu0 %v114
    %327 = vmatpush1.msra.mxu0 %v113
    %328 = vmatprep.subr.mxu0 %v118
    %329 = vmatpush1.msra.mxu0 %v117
    %330 = vmatprep.subr.mxu0 %v122
    %331 = vmatpush1.msra.mxu0 %v121
    %332 = vmatprep.subr.mxu0 %v126
    %333 = vmatpush1.msra.mxu0 %v125
    %334 = vmatprep.subr.mxu0 %v130
    %335 = vmatpush1.msra.mxu0 %v129
    %336 = vmatprep.subr.mxu0 %v134
    %337 = vmatpush1.msra.mxu0 %v133
    %338 = vmatprep.subr.mxu0 %v138
    %339 = vmatpush1.msra.mxu0 %v137
    %340 = vmatprep.subr.mxu0 %v142
    %341 = vmatpush1.msra.mxu0 %v141
    %342 = vmatprep.subr.mxu0 %v146
    %343 = vmatpush1.msra.mxu0 %v145
    %344 = vmatprep.subr.mxu0 %v150
    %345 = vmatpush1.msra.mxu0 %v149
    %346 = vmatprep.subr.mxu0 %v154
    %347 = vmatpush1.msra.mxu0 %v153
    %348 = vmatprep.subr.mxu0 %v158
    %349 = vmatpush1.msra.mxu0 %v157
    %350 = vmatprep.subr.mxu0 %v162
    %351 = vmatpush1.msra.mxu0 %v161
    %352 = vmatprep.subr.mxu0 %v166
    %353 = vmatpush1.msra.mxu0 %v165
    %354 = vmatprep.subr.mxu0 %v170
    %355 = vmatpush1.msra.mxu0 %v169
    %356 = vmatprep.subr.mxu0 %v174
    %357 = vmatpush1.msra.mxu0 %v173
    %358 = vmatprep.subr.mxu0 %v178
    %359 = vmatpush1.msra.mxu0 %v177
    %360 = vmatprep.subr.mxu0 %v182
    %361 = vmatpush1.msra.mxu0 %v181
    %362 = vmatprep.subr.mxu0 %v186
    %363 = vmatpush1.msra.mxu0 %v185
    %364 = vmatprep.subr.mxu0 %v190
    %365 = vmatpush1.msra.mxu0 %v189
    %366 = vmatprep.mubr.f32.mxu0 %v56
    %367 = vmatmul.mubr.f32.gmra.mrb[0].mxu0 %v55
    %v368 = vpop.f32.mrb[0].mxu0
    %v369 = vadd.f32 %v204, %v368
    %v370 = vpop.f32.mrb[0].mxu0
    %v371 = vadd.f32 %v208, %v370
    %372 = vmatprep.mubr.f32.mxu0 %v58
    %373 = vmatmul.mubr.f32.gmra.mrb[0].mxu0 %v57
    %v374 = vpop.f32.mrb[0].mxu0
    %v375 = vadd.f32 %v204, %v374
    %v376 = vpop.f32.mrb[0].mxu0
    %v377 = vadd.f32 %v208, %v376
    %378 = vmatprep.mubr.f32.mxu0 %v60
    %379 = vmatmul.mubr.f32.gmra.mrb[0].mxu0 %v59
    %v380 = vpop.f32.mrb[0].mxu0
    %v381 = vadd.f32 %v204, %v380
    %v382 = vpop.f32.mrb[0].mxu0
    %v383 = vadd.f32 %v208, %v382
    %384 = vmatprep.mubr.f32.mxu0 %v62
    %385 = vmatmul.mubr.f32.gmra.mrb[0].mxu0 %v61
    %v386 = vpop.f32.mrb[0].mxu0
    %v387 = vadd.f32 %v204, %v386
    %v388 = vpop.f32.mrb[0].mxu0
    %v389 = vadd.f32 %v208, %v388
    %390 = vdwg.mxu0
    %v391 = vmax.f32 %v280, 0.0
    %v392 = vmax.f32 %v282, 0.0
    %v393 = vmax.f32 %v369, 0.0
    %v394 = vmax.f32 %v371, 0.0
    %v395 = vmax.f32 %v286, 0.0
    %v396 = vmax.f32 %v288, 0.0
    %v397 = vmax.f32 %v375, 0.0
    %v398 = vmax.f32 %v377, 0.0
    %v399 = vmax.f32 %v292, 0.0
    %v400 = vmax.f32 %v294, 0.0
    %v401 = vmax.f32 %v381, 0.0
    %v402 = vmax.f32 %v383, 0.0
    %v403 = vmax.f32 %v298, 0.0
    %v404 = vmax.f32 %v300, 0.0
    %v405 = vmax.f32 %v387, 0.0
    %v406 = vmax.f32 %v389, 0.0
    %v407 = vld [vmem:[#allocation2] sm:$0xff]
    %v408 = vld [vmem:[#allocation2 + $0x8] sm:$0xff]
    %v409 = vld [vmem:[#allocation2 + $0x10] sm:$0xff]
    %v410 = vld [vmem:[#allocation2 + $0x18] sm:$0xff]
    %v411 = vld [vmem:[#allocation2 + $0x20] sm:$0xff]
    %v412 = vld [vmem:[#allocation2 + $0x28] sm:$0xff]
    %v413 = vld [vmem:[#allocation2 + $0x30] sm:$0xff]
    %v414 = vld [vmem:[#allocation2 + $0x38] sm:$0xff]
    %v415 = vld [vmem:[%s3] sm:$0xff]
    %v416 = vld [vmem:[%s3 + $0x8] sm:$0xff]
    %v417 = vld [vmem:[%s3 + $0x10] sm:$0xff]
    %v418 = vld [vmem:[%s3 + $0x18] sm:$0xff]
    %v419 = vld [vmem:[%s3 + $0x20] sm:$0xff]
    %v420 = vld [vmem:[%s3 + $0x28] sm:$0xff]
    %v421 = vld [vmem:[%s3 + $0x30] sm:$0xff]
    %v422 = vld [vmem:[%s3 + $0x38] sm:$0xff]
    %v423 = vld [vmem:[%s3 + $0x40] sm:$0xff]
    %v424 = vld [vmem:[%s3 + $0x48] sm:$0xff]
    %v425 = vld [vmem:[%s3 + $0x50] sm:$0xff]
    %v426 = vld [vmem:[%s3 + $0x58] sm:$0xff]
    %v427 = vld [vmem:[%s3 + $0x60] sm:$0xff]
    %v428 = vld [vmem:[%s3 + $0x68] sm:$0xff]
    %v429 = vld [vmem:[%s3 + $0x70] sm:$0xff]
    %v430 = vld [vmem:[%s3 + $0x78] sm:$0xff]
    %v431 = vld [vmem:[%s3 + $0x80] sm:$0xff]
    %v432 = vld [vmem:[%s3 + $0x88] sm:$0xff]
    %v433 = vld [vmem:[%s3 + $0x90] sm:$0xff]
    %v434 = vld [vmem:[%s3 + $0x98] sm:$0xff]
    %v435 = vld [vmem:[%s3 + $0xa0] sm:$0xff]
    %v436 = vld [vmem:[%s3 + $0xa8] sm:$0xff]
    %v437 = vld [vmem:[%s3 + $0xb0] sm:$0xff]
    %v438 = vld [vmem:[%s3 + $0xb8] sm:$0xff]
    %v439 = vld [vmem:[%s3 + $0xc0] sm:$0xff]
    %v440 = vld [vmem:[%s3 + $0xc8] sm:$0xff]
    %v441 = vld [vmem:[%s3 + $0xd0] sm:$0xff]
    %v442 = vld [vmem:[%s3 + $0xd8] sm:$0xff]
    %v443 = vld [vmem:[%s3 + $0xe0] sm:$0xff]
    %v444 = vld [vmem:[%s3 + $0xe8] sm:$0xff]
    %v445 = vld [vmem:[%s3 + $0xf0] sm:$0xff]
    %v446 = vld [vmem:[%s3 + $0xf8] sm:$0xff]
    %v447 = vld [vmem:[%s3 + $0x100] sm:$0xff]
    %v448 = vld [vmem:[%s3 + $0x108] sm:$0xff]
    %v449 = vld [vmem:[%s3 + $0x110] sm:$0xff]
    %v450 = vld [vmem:[%s3 + $0x118] sm:$0xff]
    %v451 = vld [vmem:[%s3 + $0x120] sm:$0xff]
    %v452 = vld [vmem:[%s3 + $0x128] sm:$0xff]
    %v453 = vld [vmem:[%s3 + $0x130] sm:$0xff]
    %v454 = vld [vmem:[%s3 + $0x138] sm:$0xff]
    %v455 = vld [vmem:[%s3 + $0x140] sm:$0xff]
    %v456 = vld [vmem:[%s3 + $0x148] sm:$0xff]
    %v457 = vld [vmem:[%s3 + $0x150] sm:$0xff]
    %v458 = vld [vmem:[%s3 + $0x158] sm:$0xff]
    %v459 = vld [vmem:[%s3 + $0x160] sm:$0xff]
    %v460 = vld [vmem:[%s3 + $0x168] sm:$0xff]
    %v461 = vld [vmem:[%s3 + $0x170] sm:$0xff]
    %v462 = vld [vmem:[%s3 + $0x178] sm:$0xff]
    %v463 = vld [vmem:[%s3 + $0x180] sm:$0xff]
    %v464 = vld [vmem:[%s3 + $0x188] sm:$0xff]
    %v465 = vld [vmem:[%s3 + $0x190] sm:$0xff]
    %v466 = vld [vmem:[%s3 + $0x198] sm:$0xff]
    %v467 = vld [vmem:[%s3 + $0x1a0] sm:$0xff]
    %v468 = vld [vmem:[%s3 + $0x1a8] sm:$0xff]
    %v469 = vld [vmem:[%s3 + $0x1b0] sm:$0xff]
    %v470 = vld [vmem:[%s3 + $0x1b8] sm:$0xff]
    %v471 = vld [vmem:[%s3 + $0x1c0] sm:$0xff]
    %v472 = vld [vmem:[%s3 + $0x1c8] sm:$0xff]
    %v473 = vld [vmem:[%s3 + $0x1d0] sm:$0xff]
    %v474 = vld [vmem:[%s3 + $0x1d8] sm:$0xff]
    %v475 = vld [vmem:[%s3 + $0x1e0] sm:$0xff]
    %v476 = vld [vmem:[%s3 + $0x1e8] sm:$0xff]
    %v477 = vld [vmem:[%s3 + $0x1f0] sm:$0xff]
    %v478 = vld [vmem:[%s3 + $0x1f8] sm:$0xff]
    %v479 = vld [vmem:[%s3 + $0x200] sm:$0xff]
    %v480 = vld [vmem:[%s3 + $0x208] sm:$0xff]
    %v481 = vld [vmem:[%s3 + $0x210] sm:$0xff]
    %v482 = vld [vmem:[%s3 + $0x218] sm:$0xff]
    %v483 = vld [vmem:[%s3 + $0x220] sm:$0xff]
    %v484 = vld [vmem:[%s3 + $0x228] sm:$0xff]
    %v485 = vld [vmem:[%s3 + $0x230] sm:$0xff]
    %v486 = vld [vmem:[%s3 + $0x238] sm:$0xff]
    %v487 = vld [vmem:[%s3 + $0x240] sm:$0xff]
    %v488 = vld [vmem:[%s3 + $0x248] sm:$0xff]
    %v489 = vld [vmem:[%s3 + $0x250] sm:$0xff]
    %v490 = vld [vmem:[%s3 + $0x258] sm:$0xff]
    %v491 = vld [vmem:[%s3 + $0x260] sm:$0xff]
    %v492 = vld [vmem:[%s3 + $0x268] sm:$0xff]
    %v493 = vld [vmem:[%s3 + $0x270] sm:$0xff]
    %v494 = vld [vmem:[%s3 + $0x278] sm:$0xff]
    %v495 = vld [vmem:[%s3 + $0x280] sm:$0xff]
    %v496 = vld [vmem:[%s3 + $0x288] sm:$0xff]
    %v497 = vld [vmem:[%s3 + $0x290] sm:$0xff]
    %v498 = vld [vmem:[%s3 + $0x298] sm:$0xff]
    %v499 = vld [vmem:[%s3 + $0x2a0] sm:$0xff]
    %v500 = vld [vmem:[%s3 + $0x2a8] sm:$0xff]
    %v501 = vld [vmem:[%s3 + $0x2b0] sm:$0xff]
    %v502 = vld [vmem:[%s3 + $0x2b8] sm:$0xff]
    %v503 = vld [vmem:[%s3 + $0x2c0] sm:$0xff]
    %v504 = vld [vmem:[%s3 + $0x2c8] sm:$0xff]
    %v505 = vld [vmem:[%s3 + $0x2d0] sm:$0xff]
    %v506 = vld [vmem:[%s3 + $0x2d8] sm:$0xff]
    %v507 = vld [vmem:[%s3 + $0x2e0] sm:$0xff]
    %v508 = vld [vmem:[%s3 + $0x2e8] sm:$0xff]
    %v509 = vld [vmem:[%s3 + $0x2f0] sm:$0xff]
    %v510 = vld [vmem:[%s3 + $0x2f8] sm:$0xff]
    %v511 = vld [vmem:[%s3 + $0x300] sm:$0xff]
    %v512 = vld [vmem:[%s3 + $0x308] sm:$0xff]
    %v513 = vld [vmem:[%s3 + $0x310] sm:$0xff]
    %v514 = vld [vmem:[%s3 + $0x318] sm:$0xff]
    %v515 = vld [vmem:[%s3 + $0x320] sm:$0xff]
    %v516 = vld [vmem:[%s3 + $0x328] sm:$0xff]
    %v517 = vld [vmem:[%s3 + $0x330] sm:$0xff]
    %v518 = vld [vmem:[%s3 + $0x338] sm:$0xff]
    %v519 = vld [vmem:[%s3 + $0x340] sm:$0xff]
    %v520 = vld [vmem:[%s3 + $0x348] sm:$0xff]
    %v521 = vld [vmem:[%s3 + $0x350] sm:$0xff]
    %v522 = vld [vmem:[%s3 + $0x358] sm:$0xff]
    %v523 = vld [vmem:[%s3 + $0x360] sm:$0xff]
    %v524 = vld [vmem:[%s3 + $0x368] sm:$0xff]
    %v525 = vld [vmem:[%s3 + $0x370] sm:$0xff]
    %v526 = vld [vmem:[%s3 + $0x378] sm:$0xff]
    %v527 = vld [vmem:[%s3 + $0x380] sm:$0xff]
    %v528 = vld [vmem:[%s3 + $0x388] sm:$0xff]
    %v529 = vld [vmem:[%s3 + $0x390] sm:$0xff]
    %v530 = vld [vmem:[%s3 + $0x398] sm:$0xff]
    %v531 = vld [vmem:[%s3 + $0x3a0] sm:$0xff]
    %v532 = vld [vmem:[%s3 + $0x3a8] sm:$0xff]
    %v533 = vld [vmem:[%s3 + $0x3b0] sm:$0xff]
    %v534 = vld [vmem:[%s3 + $0x3b8] sm:$0xff]
    %v535 = vld [vmem:[%s3 + $0x3c0] sm:$0xff]
    %v536 = vld [vmem:[%s3 + $0x3c8] sm:$0xff]
    %v537 = vld [vmem:[%s3 + $0x3d0] sm:$0xff]
    %v538 = vld [vmem:[%s3 + $0x3d8] sm:$0xff]
    %v539 = vld [vmem:[%s3 + $0x3e0] sm:$0xff]
    %v540 = vld [vmem:[%s3 + $0x3e8] sm:$0xff]
    %v541 = vld [vmem:[%s3 + $0x3f0] sm:$0xff]
    %v542 = vld [vmem:[%s3 + $0x3f8] sm:$0xff]
    %543 = vmatprep.subr.mxu0 %v416
    %544 = vmatpush1.msra.mxu0 %v415
    %545 = vmatprep.subr.mxu0 %v418
    %546 = vmatpush1.msra.mxu0 %v417
    %547 = vmatprep.subr.mxu0 %v420
    %548 = vmatpush1.msra.mxu0 %v419
    %549 = vmatprep.subr.mxu0 %v422
    %550 = vmatpush1.msra.mxu0 %v421
    %551 = vmatprep.subr.mxu0 %v424
    %552 = vmatpush1.msra.mxu0 %v423
    %553 = vmatprep.subr.mxu0 %v426
    %554 = vmatpush1.msra.mxu0 %v425
    %555 = vmatprep.subr.mxu0 %v428
    %556 = vmatpush1.msra.mxu0 %v427
    %557 = vmatprep.subr.mxu0 %v430
    %558 = vmatpush1.msra.mxu0 %v429
    %559 = vmatprep.subr.mxu0 %v432
    %560 = vmatpush1.msra.mxu0 %v431
    %561 = vmatprep.subr.mxu0 %v434
    %562 = vmatpush1.msra.mxu0 %v433
    %563 = vmatprep.subr.mxu0 %v436
    %564 = vmatpush1.msra.mxu0 %v435
    %565 = vmatprep.subr.mxu0 %v438
    %566 = vmatpush1.msra.mxu0 %v437
    %567 = vmatprep.subr.mxu0 %v440
    %568 = vmatpush1.msra.mxu0 %v439
    %569 = vmatprep.subr.mxu0 %v442
    %570 = vmatpush1.msra.mxu0 %v441
    %571 = vmatprep.subr.mxu0 %v444
    %572 = vmatpush1.msra.mxu0 %v443
    %573 = vmatprep.subr.mxu0 %v446
    %574 = vmatpush1.msra.mxu0 %v445
    %575 = vmatprep.subr.mxu0 %v448
    %576 = vmatpush1.msra.mxu0 %v447
    %577 = vmatprep.subr.mxu0 %v450
    %578 = vmatpush1.msra.mxu0 %v449
    %579 = vmatprep.subr.mxu0 %v452
    %580 = vmatpush1.msra.mxu0 %v451
    %581 = vmatprep.subr.mxu0 %v454
    %582 = vmatpush1.msra.mxu0 %v453
    %583 = vmatprep.subr.mxu0 %v456
    %584 = vmatpush1.msra.mxu0 %v455
    %585 = vmatprep.subr.mxu0 %v458
    %586 = vmatpush1.msra.mxu0 %v457
    %587 = vmatprep.subr.mxu0 %v460
    %588 = vmatpush1.msra.mxu0 %v459
    %589 = vmatprep.subr.mxu0 %v462
    %590 = vmatpush1.msra.mxu0 %v461
    %591 = vmatprep.subr.mxu0 %v464
    %592 = vmatpush1.msra.mxu0 %v463
    %593 = vmatprep.subr.mxu0 %v466
    %594 = vmatpush1.msra.mxu0 %v465
    %595 = vmatprep.subr.mxu0 %v468
    %596 = vmatpush1.msra.mxu0 %v467
    %597 = vmatprep.subr.mxu0 %v470
    %598 = vmatpush1.msra.mxu0 %v469
    %599 = vmatprep.subr.mxu0 %v472
    %600 = vmatpush1.msra.mxu0 %v471
    %601 = vmatprep.subr.mxu0 %v474
    %602 = vmatpush1.msra.mxu0 %v473
    %603 = vmatprep.subr.mxu0 %v476
    %604 = vmatpush1.msra.mxu0 %v475
    %605 = vmatprep.subr.mxu0 %v478
    %606 = vmatpush1.msra.mxu0 %v477
    %607 = vmatprep.mubr.f32.mxu0 %v392
    %608 = vmatmul.mubr.f32.gmra.mrb[0].mxu0 %v391
    %v609 = vpop.f32.mrb[0].mxu0
    %v610 = vadd.f32 0.0, %v609
    %v611 = vpop.f32.mrb[0].mxu0
    %v612 = vadd.f32 0.0, %v611
    %613 = vmatprep.mubr.f32.mxu0 %v396
    %614 = vmatmul.mubr.f32.gmra.mrb[0].mxu0 %v395
    %v615 = vpop.f32.mrb[0].mxu0
    %v616 = vadd.f32 0.0, %v615
    %v617 = vpop.f32.mrb[0].mxu0
    %v618 = vadd.f32 0.0, %v617
    %619 = vmatprep.mubr.f32.mxu0 %v400
    %620 = vmatmul.mubr.f32.gmra.mrb[0].mxu0 %v399
    %v621 = vpop.f32.mrb[0].mxu0
    %v622 = vadd.f32 0.0, %v621
    %v623 = vpop.f32.mrb[0].mxu0
    %v624 = vadd.f32 0.0, %v623
    %625 = vmatprep.mubr.f32.mxu0 %v404
    %626 = vmatmul.mubr.f32.gmra.mrb[0].mxu0 %v403
    %v627 = vpop.f32.mrb[0].mxu0
    %v628 = vadd.f32 0.0, %v627
    %v629 = vpop.f32.mrb[0].mxu0
    %v630 = vadd.f32 0.0, %v629
    %631 = vdwg.mxu0
    %632 = vmatprep.subr.mxu0 %v480
    %633 = vmatpush1.msra.mxu0 %v479
    %634 = vmatprep.subr.mxu0 %v482
    %635 = vmatpush1.msra.mxu0 %v481
    %636 = vmatprep.subr.mxu0 %v484
    %637 = vmatpush1.msra.mxu0 %v483
    %638 = vmatprep.subr.mxu0 %v486
    %639 = vmatpush1.msra.mxu0 %v485
    %640 = vmatprep.subr.mxu0 %v488
    %641 = vmatpush1.msra.mxu0 %v487
    %642 = vmatprep.subr.mxu0 %v490
    %643 = vmatpush1.msra.mxu0 %v489
    %644 = vmatprep.subr.mxu0 %v492
    %645 = vmatpush1.msra.mxu0 %v491
    %646 = vmatprep.subr.mxu0 %v494
    %647 = vmatpush1.msra.mxu0 %v493
    %648 = vmatprep.subr.mxu0 %v496
    %649 = vmatpush1.msra.mxu0 %v495
    %650 = vmatprep.subr.mxu0 %v498
    %651 = vmatpush1.msra.mxu0 %v497
    %652 = vmatprep.subr.mxu0 %v500
    %653 = vmatpush1.msra.mxu0 %v499
    %654 = vmatprep.subr.mxu0 %v502
    %655 = vmatpush1.msra.mxu0 %v501
    %656 = vmatprep.subr.mxu0 %v504
    %657 = vmatpush1.msra.mxu0 %v503
    %658 = vmatprep.subr.mxu0 %v506
    %659 = vmatpush1.msra.mxu0 %v505
    %660 = vmatprep.subr.mxu0 %v508
    %661 = vmatpush1.msra.mxu0 %v507
    %662 = vmatprep.subr.mxu0 %v510
    %663 = vmatpush1.msra.mxu0 %v509
    %664 = vmatprep.subr.mxu0 %v512
    %665 = vmatpush1.msra.mxu0 %v511
    %666 = vmatprep.subr.mxu0 %v514
    %667 = vmatpush1.msra.mxu0 %v513
    %668 = vmatprep.subr.mxu0 %v516
    %669 = vmatpush1.msra.mxu0 %v515
    %670 = vmatprep.subr.mxu0 %v518
    %671 = vmatpush1.msra.mxu0 %v517
    %672 = vmatprep.subr.mxu0 %v520
    %673 = vmatpush1.msra.mxu0 %v519
    %674 = vmatprep.subr.mxu0 %v522
    %675 = vmatpush1.msra.mxu0 %v521
    %676 = vmatprep.subr.mxu0 %v524
    %677 = vmatpush1.msra.mxu0 %v523
    %678 = vmatprep.subr.mxu0 %v526
    %679 = vmatpush1.msra.mxu0 %v525
    %680 = vmatprep.subr.mxu0 %v528
    %681 = vmatpush1.msra.mxu0 %v527
    %682 = vmatprep.subr.mxu0 %v530
    %683 = vmatpush1.msra.mxu0 %v529
    %684 = vmatprep.subr.mxu0 %v532
    %685 = vmatpush1.msra.mxu0 %v531
    %686 = vmatprep.subr.mxu0 %v534
    %687 = vmatpush1.msra.mxu0 %v533
    %688 = vmatprep.subr.mxu0 %v536
    %689 = vmatpush1.msra.mxu0 %v535
    %690 = vmatprep.subr.mxu0 %v538
    %691 = vmatpush1.msra.mxu0 %v537
    %692 = vmatprep.subr.mxu0 %v540
    %693 = vmatpush1.msra.mxu0 %v539
    %694 = vmatprep.subr.mxu0 %v542
    %695 = vmatpush1.msra.mxu0 %v541
    %696 = vmatprep.mubr.f32.mxu0 %v394
    %697 = vmatmul.mubr.f32.gmra.mrb[0].mxu0 %v393
    %v698 = vpop.f32.mrb[0].mxu0
    %v699 = vadd.f32 %v610, %v698
    %v700 = vpop.f32.mrb[0].mxu0
    %v701 = vadd.f32 %v612, %v700
    %702 = vmatprep.mubr.f32.mxu0 %v398
    %703 = vmatmul.mubr.f32.gmra.mrb[0].mxu0 %v397
    %v704 = vpop.f32.mrb[0].mxu0
    %v705 = vadd.f32 %v616, %v704
    %v706 = vpop.f32.mrb[0].mxu0
    %v707 = vadd.f32 %v618, %v706
    %708 = vmatprep.mubr.f32.mxu0 %v402
    %709 = vmatmul.mubr.f32.gmra.mrb[0].mxu0 %v401
    %v710 = vpop.f32.mrb[0].mxu0
    %v711 = vadd.f32 %v622, %v710
    %v712 = vpop.f32.mrb[0].mxu0
    %v713 = vadd.f32 %v624, %v712
    %714 = vmatprep.mubr.f32.mxu0 %v406
    %715 = vmatmul.mubr.f32.gmra.mrb[0].mxu0 %v405
    %v716 = vpop.f32.mrb[0].mxu0
    %v717 = vadd.f32 %v628, %v716
    %v718 = vpop.f32.mrb[0].mxu0
    %v719 = vadd.f32 %v630, %v718
    %720 = vdwg.mxu0
    %v721 = vadd.f32 %v407, %v699
    %v722 = vadd.f32 %v408, %v701
    %v723 = vadd.f32 %v409, %v705
    %v724 = vadd.f32 %v410, %v707
    %v725 = vadd.f32 %v411, %v711
    %v726 = vadd.f32 %v412, %v713
    %v727 = vadd.f32 %v413, %v717
    %v728 = vadd.f32 %v414, %v719
    %729 = vst [vmem:[#allocation2] sm:$0xff] %v721
    %730 = vst [vmem:[#allocation2 + $0x8] sm:$0xff] %v722
    %731 = vst [vmem:[#allocation2 + $0x10] sm:$0xff] %v723
    %732 = vst [vmem:[#allocation2 + $0x18] sm:$0xff] %v724
    %733 = vst [vmem:[#allocation2 + $0x20] sm:$0xff] %v725
    %734 = vst [vmem:[#allocation2 + $0x28] sm:$0xff] %v726
    %735 = vst [vmem:[#allocation2 + $0x30] sm:$0xff] %v727
    %736 = vst [vmem:[#allocation2 + $0x38] sm:$0xff] %v728
    // Predicated region
    $region34: #{transformer_layer.7} parent=1 // pred_check
      %p737 = pneg %p27
    $region35: #{transformer_layer.7} parent=1 // pred_check_branch
      %739 = sbr.rel (%p737) target = $region37
    $region36: #{transformer_layer.7} parent=1 // pred_region
      %v740 = vld [vmem:[#allocation2] sm:$0xff]
      %v741 = vld [vmem:[#allocation2 + $0x8] sm:$0xff]
      %v742 = vld [vmem:[#allocation2 + $0x10] sm:$0xff]
      %v743 = vld [vmem:[#allocation2 + $0x18] sm:$0xff]
      %v744 = vld [vmem:[#allocation2 + $0x20] sm:$0xff]
      %v745 = vld [vmem:[#allocation2 + $0x28] sm:$0xff]
      %v746 = vld [vmem:[#allocation2 + $0x30] sm:$0xff]
      %v747 = vld [vmem:[#allocation2 + $0x38] sm:$0xff]
      %v748 = vld [vmem:[%s4] sm:$0x3]
      %v750 = vlaneseq
      %v751 = vshrl.u32 %v750, 7
      %v752 = vsub.s32 0, %v751
      %v753 = vrot.slane %v748, %v752
      %v754 = vlaneseq
      %v755 = vshrl.u32 %v754, 7
      %v756 = vsub.s32 1, %v755
      %v757 = vrot.slane %v748, %v756
      %v760 = vadd.f32 %v740, %v753
      %v761 = vadd.f32 %v741, %v757
      %v762 = vadd.f32 %v742, %v753
      %v763 = vadd.f32 %v743, %v757
      %v764 = vadd.f32 %v744, %v753
      %v765 = vadd.f32 %v745, %v757
      %v766 = vadd.f32 %v746, %v753
      %v767 = vadd.f32 %v747, %v757
      %v768 = vld [vmem:[%s0] sm:$0xff]
      %v769 = vld [vmem:[%s0 + $0x8] sm:$0xff]
      %v770 = vld [vmem:[%s0 + $0x10] sm:$0xff]
      %v771 = vld [vmem:[%s0 + $0x18] sm:$0xff]
      %v772 = vld [vmem:[%s0 + $0x20] sm:$0xff]
      %v773 = vld [vmem:[%s0 + $0x28] sm:$0xff]
      %v774 = vld [vmem:[%s0 + $0x30] sm:$0xff]
      %v775 = vld [vmem:[%s0 + $0x38] sm:$0xff]
      %v776 = vadd.f32 %v760, %v768
      %v777 = vadd.f32 %v761, %v769
      %v778 = vadd.f32 %v762, %v770
      %v779 = vadd.f32 %v763, %v771
      %v780 = vadd.f32 %v764, %v772
      %v781 = vadd.f32 %v765, %v773
      %v782 = vadd.f32 %v766, %v774
      %v783 = vadd.f32 %v767, %v775
      %v784 = vadd.f32 %v776, %v777
      %785 = vadd.xlane.f32.xlu0 %v784
      %v786 = vpop.xlane.xlu0 %785
      %v787 = vadd.f32 %v778, %v779
      %788 = vadd.xlane.f32.xlu0 %v787
      %v789 = vpop.xlane.xlu0 %788
      %v790 = vadd.f32 %v780, %v781
      %791 = vadd.xlane.f32.xlu0 %v790
      %v792 = vpop.xlane.xlu0 %791
      %v793 = vadd.f32 %v782, %v783
      %794 = vadd.xlane.f32.xlu0 %v793
      %v795 = vpop.xlane.xlu0 %794
      %v796 = vrcp.pop 256.0
      %v797 = vmul.f32 %v786, %v796
      %v798 = vmul.f32 %v789, %v796
      %v799 = vmul.f32 %v792, %v796
      %v800 = vmul.f32 %v795, %v796
      %v801 = vsub.f32 %v776, %v797
      %v802 = vsub.f32 %v777, %v797
      %v803 = vsub.f32 %v778, %v798
      %v804 = vsub.f32 %v779, %v798
      %v805 = vsub.f32 %v780, %v799
      %v806 = vsub.f32 %v781, %v799
      %v807 = vsub.f32 %v782, %v800
      %v808 = vsub.f32 %v783, %v800
      %v809 = vmul.f32 %v801, %v801
      %v810 = vmul.f32 %v802, %v802
      %v811 = vmul.f32 %v803, %v803
      %v812 = vmul.f32 %v804, %v804
      %v813 = vmul.f32 %v805, %v805
      %v814 = vmul.f32 %v806, %v806
      %v815 = vmul.f32 %v807, %v807
      %v816 = vmul.f32 %v808, %v808
      %v817 = vadd.f32 %v809, %v810
      %818 = vadd.xlane.f32.xlu0 %v817
      %v819 = vpop.xlane.xlu0 %818
      %v820 = vadd.f32 %v811, %v812
      %821 = vadd.xlane.f32.xlu0 %v820
      %v822 = vpop.xlane.xlu0 %821
      %v823 = vadd.f32 %v813, %v814
      %824 = vadd.xlane.f32.xlu0 %v823
      %v825 = vpop.xlane.xlu0 %824
      %v826 = vadd.f32 %v815, %v816
      %827 = vadd.xlane.f32.xlu0 %v826
      %v828 = vpop.xlane.xlu0 %827
      %v829 = vrcp.pop 255.0
      %v830 = vmul.f32 %v819, %v829
      %v831 = vmul.f32 %v822, %v829
      %v832 = vmul.f32 %v825, %v829
      %v833 = vmul.f32 %v828, %v829
      %v834 = vrsqrt.pop %v830
      %v835 = vmul.f32 %v830, %v834
      %vm836 = vcmp.eq.f32.partialorder %v830, inf
      %v837 = vsel %vm836, %v830, %v835
      %vm838 = vcmp.eq.f32.partialorder %v830, 0.0
      %v839 = vand.u32 %v830, 2147483648
      %v840 = vsel %vm838, %v839, %v837
      %v841 = vrsqrt.pop %v831
      %v842 = vmul.f32 %v831, %v841
      %vm843 = vcmp.eq.f32.partialorder %v831, inf
      %v844 = vsel %vm843, %v831, %v842
      %vm845 = vcmp.eq.f32.partialorder %v831, 0.0
      %v846 = vand.u32 %v831, 2147483648
      %v847 = vsel %vm845, %v846, %v844
      %v848 = vrsqrt.pop %v832
      %v849 = vmul.f32 %v832, %v848
      %vm850 = vcmp.eq.f32.partialorder %v832, inf
      %v851 = vsel %vm850, %v832, %v849
      %vm852 = vcmp.eq.f32.partialorder %v832, 0.0
      %v853 = vand.u32 %v832, 2147483648
      %v854 = vsel %vm852, %v853, %v851
      %v855 = vrsqrt.pop %v833
      %v856 = vmul.f32 %v833, %v855
      %vm857 = vcmp.eq.f32.partialorder %v833, inf
      %v858 = vsel %vm857, %v833, %v856
      %vm859 = vcmp.eq.f32.partialorder %v833, 0.0
      %v860 = vand.u32 %v833, 2147483648
      %v861 = vsel %vm859, %v860, %v858
      %v862 = vld [vmem:[%s5] sm:$0x3]
      %v863 = vadd.f32 %v840, 1e-12
      %v864 = vadd.f32 %v847, 1e-12
      %v865 = vadd.f32 %v854, 1e-12
      %v866 = vadd.f32 %v861, 1e-12
      %v867 = vrcp.pop %v863
      %v868 = vmul.f32 %v801, %v867
      %v869 = vmul.f32 %v802, %v867
      %v870 = vrcp.pop %v864
      %v871 = vmul.f32 %v803, %v870
      %v872 = vmul.f32 %v804, %v870
      %v873 = vrcp.pop %v865
      %v874 = vmul.f32 %v805, %v873
      %v875 = vmul.f32 %v806, %v873
      %v876 = vrcp.pop %v866
      %v877 = vmul.f32 %v807, %v876
      %v878 = vmul.f32 %v808, %v876
      %v880 = vlaneseq
      %v881 = vshrl.u32 %v880, 7
      %v882 = vsub.s32 0, %v881
      %v883 = vrot.slane %v862, %v882
      %v884 = vlaneseq
      %v885 = vshrl.u32 %v884, 7
      %v886 = vsub.s32 1, %v885
      %v887 = vrot.slane %v862, %v886
      %v890 = vmul.f32 %v883, %v868
      %v891 = vmul.f32 %v887, %v869
      %v892 = vmul.f32 %v883, %v871
      %v893 = vmul.f32 %v887, %v872
      %v894 = vmul.f32 %v883, %v874
      %v895 = vmul.f32 %v887, %v875
      %v896 = vmul.f32 %v883, %v877
      %v897 = vmul.f32 %v887, %v878
      %v898 = vld [vmem:[%s6] sm:$0x3]
      %v900 = vlaneseq
      %v901 = vshrl.u32 %v900, 7
      %v902 = vsub.s32 0, %v901
      %v903 = vrot.slane %v898, %v902
      %v904 = vlaneseq
      %v905 = vshrl.u32 %v904, 7
      %v906 = vsub.s32 1, %v905
      %v907 = vrot.slane %v898, %v906
      %v910 = vadd.f32 %v890, %v903
      %v911 = vadd.f32 %v891, %v907
      %v912 = vadd.f32 %v892, %v903
      %v913 = vadd.f32 %v893, %v907
      %v914 = vadd.f32 %v894, %v903
      %v915 = vadd.f32 %v895, %v907
      %v916 = vadd.f32 %v896, %v903
      %v917 = vadd.f32 %v897, %v907
      %918 = vst [vmem:[#allocation4] sm:$0xff] %v910
      %919 = vst [vmem:[#allocation4 + $0x8] sm:$0xff] %v911
      %920 = vst [vmem:[#allocation4 + $0x10] sm:$0xff] %v912
      %921 = vst [vmem:[#allocation4 + $0x18] sm:$0xff] %v913
      %922 = vst [vmem:[#allocation4 + $0x20] sm:$0xff] %v914
      %923 = vst [vmem:[#allocation4 + $0x28] sm:$0xff] %v915
      %924 = vst [vmem:[#allocation4 + $0x30] sm:$0xff] %v916
      %925 = vst [vmem:[#allocation4 + $0x38] sm:$0xff] %v917
    $region37: #{transformer_layer.7} parent=1 // pred_fallthru
      _
    // Predicated region
    $region38: #{transformer_layer.7} parent=1 // pred_check
      _
    $region39: #{transformer_layer.7} parent=1 // pred_check_branch
      %927 = sbr.rel (0) target = $region41
    $region40: #{transformer_layer.7} parent=1 // pred_region
      %s929 = ssub.s32 1024, 1024
      %930 = vsyncadd [#allocation5], %s929
      %s931 = sshll.u32 [#allocation4], 4
      %s932 = int_to_ptr.vmem [resolvable:$true] %s931
      %937 = dma.vmem_to_hbm [thread:$0]  %s932, 1024, %s7, [#allocation5], 256, 256, 16
    $region41: #{transformer_layer.7} parent=1 // pred_fallthru
      _
    // Predicated region
    $region42: #{transformer_layer.7} parent=1 // pred_check
      _
    $region43: #{transformer_layer.7} parent=1 // pred_check_branch
      %939 = sbr.rel (0) target = $region45
    $region44: #{transformer_layer.7} parent=1 // pred_region
      %940 = dma.done [#allocation5], 1024
    $region45: #{transformer_layer.7} parent=1 // pred_fallthru
      _
    %941 = vsyncpa [#allocation5], 1

</llo_original>
